<compile_context>
chip_gen: v7x
topology: tpu7x:2x2x1
jax: 0.10.0
libtpu: 0.0.40
codegen_flags: <defaults>
</compile_context>

<pallas_src>
import jax
import jax.numpy as jnp
from jax import lax
from jax.experimental import pallas as pl
from jax.experimental.pallas import tpu as pltpu

_LN_EPS = 1e-5


# ------------------------------ chip-aware budgets ------------------------------

def _chip_budgets():
    """(vmem_limit_bytes, kernel-2 channel-block byte budget, row-tile cap)."""
    kind = ""
    try:
        kind = jax.devices()[0].device_kind.lower()
    except Exception:
        pass
    if any(v in kind for v in ("v4", "v5", "v6")):
        # 128 MiB physical VMEM: bigger blocks amortize the ~0.35us/step overhead.
        return 96 * 1024 * 1024, 12 * 1024 * 1024, 2048
    # v7x (64 MiB VMEM) or unknown: stay conservative.
    return 32 * 1024 * 1024, 4 * 1024 * 1024, 1024


def _cparams(n_axes, vmem_limit):
    return pltpu.CompilerParams(dimension_semantics=("parallel",) * n_axes,
                                vmem_limit_bytes=vmem_limit)


def _pick_row_block(IJ, D, H, cap):
    """Row tile R for kernels 1/3: multiple of 128 (lane-dense channel-major outputs),
    divides I*J, bounded by a per-step working-set budget."""
    budget = 8 * 1024 * 1024
    per_row = 4 * (D + 5 * H) + 2 * 2 * H + 4 * H   # x + p + bf16 l/r + f32 og
    cap = min(cap, max(128, (budget // per_row) // 128 * 128))
    if IJ % 128 != 0:
        return IJ                                    # small maps: one full block
    r = max(128, (min(cap, IJ) // 128) * 128)
    while IJ % r != 0:
        r -= 128
    return r


def _pick_channel_block(H, n_i, n_j, budget_bytes):
    per_ch = n_i * n_j * 4
    cap = max(1, H // 2)              # keep >=2 channel blocks so megacore has work
    for cb in (32, 16, 8, 4, 2, 1):
        if cb <= cap and H % cb == 0 and cb * per_ch <= budget_bytes:
            return cb
    return 1


def _sigmoid(x):
    # exp -> EUP, approx reciprocal -> EUP; relieves VALU pressure (review suggestion).
    return pl.reciprocal(1.0 + jnp.exp(-x), approx=True)


# ----------------------------------- kernels -----------------------------------

def _make_proj_kernel(hidden, has_mask):
    """Fused LayerNorm (affine pre-folded into W/b) + transposed stacked 5-way projection
    + optional mask + sigmoid gating.  Emits channel-major (H, R) tiles."""
    H = hidden

    def kernel(x_ref, w_ref, b_ref, *rest):
        if has_mask:
            mask_ref, l_ref, r_ref, g_ref = rest
        else:
            l_ref, r_ref, g_ref = rest
        x = x_ref[0]                                           # (R, D) f32
        mu = jnp.mean(x, axis=-1, keepdims=True)
        xc = x - mu
        var = jnp.mean(xc * xc, axis=-1, keepdims=True)
        xn = (xc * lax.rsqrt(var + _LN_EPS)).astype(jnp.bfloat16)
        # p[m, r] = sum_d W^T[m, d] * xn[r, d]  -> (5H, R), f32 accumulation.
        # Contracting the lane dims of both operands is the MXU-friendly "q @ k.T" form
        # and the result is already channel-major: no transpose anywhere.
        p = lax.dot_general(w_ref[...], xn, (((1,), (1,)), ((), ())),
                            preferred_element_type=jnp.float32) + b_ref[...]
        left = p[0 * H:1 * H]          # sublane slices at multiples of H (8-aligned)
        right = p[1 * H:2 * H]
        lgate = _sigmoid(p[2 * H:3 * H])
        rgate = _sigmoid(p[3 * H:4 * H])
        ogate = _sigmoid(p[4 * H:5 * H])
        if has_mask:
            m = mask_ref[0]                                    # (1, R)
            left = left * m
            right = right * m
        l_ref[0] = (left * lgate).astype(jnp.bfloat16)         # lane-dense (H, R) stores
        r_ref[0] = (right * rgate).astype(jnp.bfloat16)
        g_ref[0] = ogate
    return kernel


def _tri_mix_outgoing_kernel(l_ref, r_ref, o_ref):
    # out_t[c, i, j] = sum_k Lt[c, i, k] * Rt[c, j, k]   (bf16 operands, f32 accum)
    o_ref[0] = lax.dot_general(l_ref[0], r_ref[0],
                               (((2,), (2,)), ((0,), (0,))),
                               preferred_element_type=jnp.float32)


def _tri_mix_ingoing_kernel(l_ref, r_ref, o_ref):
    # out_t[c, i, j] = sum_k Rt[c, k, i] * Lt[c, k, j]
    o_ref[0] = lax.dot_general(r_ref[0], l_ref[0],
                               (((1,), (1,)), ((0,), (0,))),
                               preferred_element_type=jnp.float32)


def _out_kernel(mix_ref, og_ref, gam_ref, bet_ref, w_ref, bo_ref, o_ref):
    # Fused to_out_norm (over channels, axis 0 of the channel-major tile) + out_gate
    # multiply + to_out projection (transposed-LHS dot -> row-major (R, D) output).
    z = mix_ref[0]                                             # (H, R) f32
    mu = jnp.mean(z, axis=0, keepdims=True)
    zc = z - mu
    var = jnp.mean(zc * zc, axis=0, keepdims=True)
    zn = zc * lax.rsqrt(var + _LN_EPS)
    t = ((zn * gam_ref[...] + bet_ref[...]) * og_ref[0]).astype(jnp.bfloat16)
    o_ref[0] = lax.dot_general(t, w_ref[...], (((0,), (0,)), ((), ())),
                               preferred_element_type=jnp.float32) + bo_ref[...]


# ----------------------------------- wrappers -----------------------------------

def _proj_pallas(params, x3, mask3, R, vmem_limit):
    """x3: (B, I*J, D); mask3: (B, 1, I*J) or None.
    Returns channel-major (B, H, I*J): gated left (bf16), gated right (bf16), out_gate (f32)."""
    B, IJ, D = x3.shape
    H = params["wl"].shape[1]
    has_mask = mask3 is not None

    # Stack the five projection weights, fold the LayerNorm affine in, pre-transpose,
    # and cast to bf16 once (resident across the grid).
    w_cat = jnp.concatenate([params["wl"], params["wr"], params["wlg"],
                             params["wrg"], params["wog"]], axis=1)          # (D, 5H)
    b_cat = jnp.concatenate([params["bl"], params["br"], params["blg"],
                             params["brg"], params["bog"]], axis=0)          # (5H,)
    w_fold_t = (params["norm_g"][:, None] * w_cat).T.astype(jnp.bfloat16)    # (5H, D)
    b_fold = (params["norm_b"] @ w_cat + b_cat).reshape(5 * H, 1)            # (5H, 1) f32

    inputs = [x3, w_fold_t, b_fold]
    in_specs = [
        pl.BlockSpec((1, R, D), lambda b, r: (b, r, 0)),
        pl.BlockSpec((5 * H, D), lambda b, r: (0, 0)),
        pl.BlockSpec((5 * H, 1), lambda b, r: (0, 0)),
    ]
    if has_mask:
        inputs.append(mask3)
        in_specs.append(pl.BlockSpec((1, 1, R), lambda b, r: (b, 0, r)))

    out_spec = pl.BlockSpec((1, H, R), lambda b, r: (b, 0, r))
    cost = pl.CostEstimate(
        flops=int(2 * B * IJ * D * 5 * H),
        transcendentals=int(4 * B * IJ * H),
        bytes_accessed=int(4 * B * IJ * D + 2 * 5 * H * D + 4 * 5 * H
                           + (4 * B * IJ if has_mask else 0) + 8 * B * IJ * H))

    return pl.pallas_call(
        _make_proj_kernel(H, has_mask),
        out_shape=(jax.ShapeDtypeStruct((B, H, IJ), jnp.bfloat16),
                   jax.ShapeDtypeStruct((B, H, IJ), jnp.bfloat16),
                   jax.ShapeDtypeStruct((B, H, IJ), jnp.float32)),
        grid=(B, IJ // R),
        in_specs=in_specs,
        out_specs=(out_spec, out_spec, out_spec),
        compiler_params=_cparams(2, vmem_limit),
        cost_estimate=cost,
    )(*inputs)


def _triangle_mix_pallas(lt, rt, mix, cb_budget, vmem_limit):
    """lt, rt: (B, H, I, J) bf16 channel-major -> mixed (B, H, I, J) f32."""
    B, H, I, J = lt.shape
    CB = _pick_channel_block(H, I, J, cb_budget)
    kern = _tri_mix_outgoing_kernel if mix == "outgoing" else _tri_mix_ingoing_kernel
    blk = pl.BlockSpec((1, CB, I, J), lambda b, c: (b, c, 0, 0))
    cost = pl.CostEstimate(
        flops=int(2 * B * H * I * J * J),
        transcendentals=0,
        bytes_accessed=int(2 * 2 * B * H * I * J + 4 * B * H * I * J))
    return pl.pallas_call(
        kern,
        out_shape=jax.ShapeDtypeStruct((B, H, I, J), jnp.float32),
        grid=(B, H // CB),
        in_specs=[blk, blk],
        out_specs=blk,
        compiler_params=_cparams(2, vmem_limit),
        cost_estimate=cost,
    )(lt, rt)


def _out_proj_pallas(params, mixed3, og3, R, vmem_limit):
    """mixed3, og3: (B, H, I*J) channel-major -> (B, I*J, D) row-major."""
    B, H, IJ = mixed3.shape
    D = params["wo"].shape[1]
    wo = params["wo"].astype(jnp.bfloat16)                 # (H, D)
    on_g = params["on_g"].reshape(H, 1)
    on_b = params["on_b"].reshape(H, 1)
    bo = params["bo"].reshape(1, D)
    cost = pl.CostEstimate(
        flops=int(2 * B * IJ * H * D),
        transcendentals=int(B * IJ),
        bytes_accessed=int(8 * B * IJ * H + 4 * B * IJ * D + 2 * H * D + 12 * H + 4 * D))
    return pl.pallas_call(
        _out_kernel,
        out_shape=jax.ShapeDtypeStruct((B, IJ, D), jnp.float32),
        grid=(B, IJ // R),
        in_specs=[pl.BlockSpec((1, H, R), lambda b, r: (b, 0, r)),   # mixed
                  pl.BlockSpec((1, H, R), lambda b, r: (b, 0, r)),   # out_gate
                  pl.BlockSpec((H, 1), lambda b, r: (0, 0)),          # to_out_norm gamma
                  pl.BlockSpec((H, 1), lambda b, r: (0, 0)),          # to_out_norm beta
                  pl.BlockSpec((H, D), lambda b, r: (0, 0)),          # to_out weight
                  pl.BlockSpec((1, D), lambda b, r: (0, 0))],         # to_out bias
        out_specs=pl.BlockSpec((1, R, D), lambda b, r: (b, r, 0)),
        compiler_params=_cparams(2, vmem_limit),
        cost_estimate=cost,
    )(mixed3, og3, on_g, on_b, wo, bo)


def triangle_multiply_pallas(params, x, mask=None, mix="ingoing"):
    """Forward of TriangleMultiplicativeModule. x: (B, N, N, D); mask: (B, N, N)."""
    assert mix in ("ingoing", "outgoing")
    B, I, J, D = x.shape
    assert I == J, "feature map must be symmetrical"
    H = params["wl"].shape[1]
    IJ = I * J
    vmem_limit, cb_budget, row_cap = _chip_budgets()
    R = _pick_row_block(IJ, D, H, row_cap)

    # All reshapes below are contiguity-preserving (free) -- no XLA transposes anywhere.
    x3 = x.reshape(B, IJ, D).astype(jnp.float32)
    mask3 = None
    if mask is not None:
        mask3 = mask.astype(jnp.float32).reshape(B, 1, IJ)

    # 1) fused LayerNorm + stacked 5-way projection + mask + gating (channel-major out)
    lt, rt, og = _proj_pallas(params, x3, mask3, R, vmem_limit)          # (B, H, IJ)

    # 2) triangle mix: channel-batched MXU matmuls on (B, H, N, N) blocks
    mixed = _triangle_mix_pallas(lt.reshape(B, H, I, J), rt.reshape(B, H, I, J),
                                 mix, cb_budget, vmem_limit)             # (B, H, I, J)

    # 3) fused to_out_norm + out_gate + output projection (row-major out)
    out3 = _out_proj_pallas(params, mixed.reshape(B, H, IJ), og, R, vmem_limit)
    return out3.reshape(B, I, J, D)


# ------------------------------ pure-JAX reference ------------------------------

def triangle_multiply_ref(params, x, mask=None, mix="ingoing"):
    hp = jax.lax.Precision.HIGHEST
    mu = x.mean(-1, keepdims=True)
    var = ((x - mu) ** 2).mean(-1, keepdims=True)
    xn = (x - mu) / jnp.sqrt(var + _LN_EPS) * params["norm_g"] + params["norm_b"]
    left = jnp.dot(xn, params["wl"], precision=hp) + params["bl"]
    right = jnp.dot(xn, params["wr"], precision=hp) + params["br"]
    if mask is not None:
        mf = mask.astype(jnp.float32)[..., None]
        left = left * mf
        right = right * mf
    lg = jax.nn.sigmoid(jnp.dot(xn, params["wlg"], precision=hp) + params["blg"])
    rg = jax.nn.sigmoid(jnp.dot(xn, params["wrg"], precision=hp) + params["brg"])
    og = jax.nn.sigmoid(jnp.dot(xn, params["wog"], precision=hp) + params["bog"])
    left = left * lg
    right = right * rg
    if mix == "outgoing":
        out = jnp.einsum("bikd,bjkd->bijd", left, right, precision=hp)
    else:
        out = jnp.einsum("bkjd,bkid->bijd", left, right, precision=hp)
    mu2 = out.mean(-1, keepdims=True)
    var2 = ((out - mu2) ** 2).mean(-1, keepdims=True)
    on = (out - mu2) / jnp.sqrt(var2 + _LN_EPS) * params["on_g"] + params["on_b"]
    on = on * og
    return jnp.dot(on, params["wo"], precision=hp) + params["bo"]


# ------------------------------ parameter init ----------------------------------

class _ParamGen:
    def __init__(self, key):
        self._key = key

    def __call__(self, *shape, scale=0.1):
        self._key, sub = jax.random.split(self._key)
        return scale * jax.random.normal(sub, shape, dtype=jnp.float32)


def init_params(key, dim, hidden_dim=None):
    # Random params (the PyTorch module zero-inits the gate weights / bias=1; we use
    # random values so the gating path is numerically non-trivial).
    hidden_dim = dim if hidden_dim is None else hidden_dim
    pg = _ParamGen(key)
    return dict(
        norm_g=1.0 + pg(dim), norm_b=pg(dim),
        wl=pg(dim, hidden_dim), bl=pg(hidden_dim),
        wr=pg(dim, hidden_dim), br=pg(hidden_dim),
        wlg=pg(dim, hidden_dim), blg=pg(hidden_dim),
        wrg=pg(dim, hidden_dim), brg=pg(hidden_dim),
        wog=pg(dim, hidden_dim), bog=pg(hidden_dim),
        on_g=1.0 + pg(hidden_dim), on_b=pg(hidden_dim),
        wo=pg(hidden_dim, dim), bo=pg(dim),
    )


# ----------------------------------- main ----------------------------------------

if __name__ == "__main__":
    B, N, DIM = 2, 16, 32

    key = jax.random.PRNGKey(0)
    kx, kmask, kp = jax.random.split(key, 3)
    x = jax.random.normal(kx, (B, N, N, DIM), jnp.float32)
    mask = jax.random.uniform(kmask, (B, N, N)) > 0.1
    params = init_params(kp, DIM)

    fwd = jax.jit(lambda x_, m_, mix: triangle_multiply_pallas(params, x_, m_, mix=mix),
                  static_argnums=2)
    fwd_nomask = jax.jit(lambda x_: triangle_multiply_pallas(params, x_, None,
                                                             mix="ingoing"))

    # bf16 MXU operands (f32 accumulation) vs a float32 HIGHEST-precision reference:
    # loosened tolerance per the performance review.
    ATOL = RTOL = 5e-2
    for mix in ("ingoing", "outgoing"):
        out_p = jax.block_until_ready(fwd(x, mask, mix))
        out_r = triangle_multiply_ref(params, x, mask, mix=mix)
        assert out_p.shape == (B, N, N, DIM)
        assert bool(jnp.all(jnp.isfinite(out_p)))
        err = float(jnp.max(jnp.abs(out_p - out_r)))
        assert bool(jnp.allclose(out_p, out_r, atol=ATOL, rtol=RTOL)), (mix, err)

    out_nm = jax.block_until_ready(fwd_nomask(x))
    out_nm_r = triangle_multiply_ref(params, x, None, mix="ingoing")
    err = float(jnp.max(jnp.abs(out_nm - out_nm_r)))
    assert bool(jnp.allclose(out_nm, out_nm_r, atol=ATOL, rtol=RTOL)), ("nomask", err)

    print("KERNEL_OK")
</pallas_src>

<mosaic_0001>
module attributes {stable_mosaic.version = 11 : i64} {
  func.func @kernel(%arg0: i32, %arg1: i32, %arg2: memref<1x256x32xf32, #tpu.memory_space<vmem>>, %arg3: memref<160x32xbf16, #tpu.memory_space<vmem>>, %arg4: memref<160x1xf32, #tpu.memory_space<vmem>>, %arg5: memref<1x1x256xf32, #tpu.memory_space<vmem>>, %arg6: memref<1x32x256xbf16, #tpu.memory_space<vmem>>, %arg7: memref<1x32x256xbf16, #tpu.memory_space<vmem>>, %arg8: memref<1x32x256xf32, #tpu.memory_space<vmem>>) attributes {dimension_semantics = [#tpu.dimension_semantics<parallel>, #tpu.dimension_semantics<parallel>], iteration_bounds = array<i64: 2, 1>, scalar_prefetch = 0 : i64, scratch_operands = 0 : i64, tpu.core_type = #tpu.core_type<tc>, window_params = [{transform_indices = @transform_0, window_bounds = array<i64: 1, 256, 32>}, {pipeline_mode = #tpu.pipeline_mode<synchronous>, transform_indices = @transform_1, window_bounds = array<i64: 160, 32>}, {pipeline_mode = #tpu.pipeline_mode<synchronous>, transform_indices = @transform_2, window_bounds = array<i64: 160, 1>}, {transform_indices = @transform_3, window_bounds = array<i64: 1, 1, 256>}, {transform_indices = @transform_4, window_bounds = array<i64: 1, 32, 256>}, {transform_indices = @transform_5, window_bounds = array<i64: 1, 32, 256>}, {transform_indices = @transform_6, window_bounds = array<i64: 1, 32, 256>}]} {
    %c0 = arith.constant 0 : index
    %c0_0 = arith.constant 0 : index
    %c0_1 = arith.constant 0 : index
    %0 = vector.load %arg2[%c0, %c0_0, %c0_1] : memref<1x256x32xf32, #tpu.memory_space<vmem>>, vector<1x256x32xf32>
    %1 = vector.shape_cast %0 : vector<1x256x32xf32> to vector<256x32xf32>
    %cst = arith.constant dense<0.000000e+00> : vector<256xf32>
    %2 = vector.multi_reduction <add>, %1, %cst [1] : vector<256x32xf32> to vector<256xf32>
    %3 = vector.shape_cast %2 : vector<256xf32> to vector<256x1xf32>
    %cst_2 = arith.constant 3.200000e+01 : f32
    %4 = vector.broadcast %cst_2 : f32 to vector<256x1xf32>
    %5 = arith.divf %3, %4 : vector<256x1xf32>
    %6 = vector.broadcast %5 : vector<256x1xf32> to vector<256x32xf32>
    %7 = arith.subf %1, %6 : vector<256x32xf32>
    %8 = arith.mulf %7, %7 : vector<256x32xf32>
    %cst_3 = arith.constant dense<0.000000e+00> : vector<256xf32>
    %9 = vector.multi_reduction <add>, %8, %cst_3 [1] : vector<256x32xf32> to vector<256xf32>
    %10 = vector.shape_cast %9 : vector<256xf32> to vector<256x1xf32>
    %cst_4 = arith.constant 3.200000e+01 : f32
    %11 = vector.broadcast %cst_4 : f32 to vector<256x1xf32>
    %12 = arith.divf %10, %11 : vector<256x1xf32>
    %cst_5 = arith.constant 9.99999974E-6 : f32
    %13 = vector.broadcast %cst_5 : f32 to vector<256x1xf32>
    %14 = arith.addf %12, %13 : vector<256x1xf32>
    %15 = math.rsqrt %14 : vector<256x1xf32>
    %16 = vector.broadcast %15 : vector<256x1xf32> to vector<256x32xf32>
    %17 = arith.mulf %7, %16 : vector<256x32xf32>
    %18 = arith.truncf %17 : vector<256x32xf32> to vector<256x32xbf16>
    %c0_6 = arith.constant 0 : index
    %c0_7 = arith.constant 0 : index
    %19 = vector.load %arg3[%c0_6, %c0_7] : memref<160x32xbf16, #tpu.memory_space<vmem>>, vector<160x32xbf16>
    %cst_8 = arith.constant dense<0.000000e+00> : vector<160x256xf32>
    %20 = tpu.matmul %19, %18, %cst_8 {dimension_numbers = #tpu.dot_dimension_numbers<[1], [1], [0], [0], [0, 0, 1, 0], [], []>} : vector<160x32xbf16>, vector<256x32xbf16>, vector<160x256xf32> -> vector<160x256xf32>
    %c0_9 = arith.constant 0 : index
    %c0_10 = arith.constant 0 : index
    %21 = vector.load %arg4[%c0_9, %c0_10] : memref<160x1xf32, #tpu.memory_space<vmem>>, vector<160x1xf32>
    %22 = vector.broadcast %21 : vector<160x1xf32> to vector<160x256xf32>
    %23 = arith.addf %20, %22 : vector<160x256xf32>
    %24 = vector.extract_strided_slice %23 {offsets = [0, 0], sizes = [32, 256], strides = [1, 1]} : vector<160x256xf32> to vector<32x256xf32>
    %25 = vector.extract_strided_slice %23 {offsets = [32, 0], sizes = [32, 256], strides = [1, 1]} : vector<160x256xf32> to vector<32x256xf32>
    %26 = vector.extract_strided_slice %23 {offsets = [64, 0], sizes = [32, 256], strides = [1, 1]} : vector<160x256xf32> to vector<32x256xf32>
    %cst_11 = arith.constant 0.000000e+00 : f32
    %27 = vector.broadcast %cst_11 : f32 to vector<32x256xf32>
    %28 = arith.subf %27, %26 : vector<32x256xf32>
    %29 = math.exp %28 : vector<32x256xf32>
    %cst_12 = arith.constant 1.000000e+00 : f32
    %30 = vector.broadcast %cst_12 : f32 to vector<32x256xf32>
    %31 = arith.addf %30, %29 : vector<32x256xf32>
    %32 = tpu.reciprocal %31 {approx = true} : vector<32x256xf32> -> vector<32x256xf32>
    %33 = vector.extract_strided_slice %23 {offsets = [96, 0], sizes = [32, 256], strides = [1, 1]} : vector<160x256xf32> to vector<32x256xf32>
    %cst_13 = arith.constant 0.000000e+00 : f32
    %34 = vector.broadcast %cst_13 : f32 to vector<32x256xf32>
    %35 = arith.subf %34, %33 : vector<32x256xf32>
    %36 = math.exp %35 : vector<32x256xf32>
    %cst_14 = arith.constant 1.000000e+00 : f32
    %37 = vector.broadcast %cst_14 : f32 to vector<32x256xf32>
    %38 = arith.addf %37, %36 : vector<32x256xf32>
    %39 = tpu.reciprocal %38 {approx = true} : vector<32x256xf32> -> vector<32x256xf32>
    %40 = vector.extract_strided_slice %23 {offsets = [128, 0], sizes = [32, 256], strides = [1, 1]} : vector<160x256xf32> to vector<32x256xf32>
    %cst_15 = arith.constant 0.000000e+00 : f32
    %41 = vector.broadcast %cst_15 : f32 to vector<32x256xf32>
    %42 = arith.subf %41, %40 : vector<32x256xf32>
    %43 = math.exp %42 : vector<32x256xf32>
    %cst_16 = arith.constant 1.000000e+00 : f32
    %44 = vector.broadcast %cst_16 : f32 to vector<32x256xf32>
    %45 = arith.addf %44, %43 : vector<32x256xf32>
    %46 = tpu.reciprocal %45 {approx = true} : vector<32x256xf32> -> vector<32x256xf32>
    %c0_17 = arith.constant 0 : index
    %c0_18 = arith.constant 0 : index
    %c0_19 = arith.constant 0 : index
    %47 = vector.load %arg5[%c0_17, %c0_18, %c0_19] : memref<1x1x256xf32, #tpu.memory_space<vmem>>, vector<1x1x256xf32>
    %48 = vector.shape_cast %47 : vector<1x1x256xf32> to vector<1x256xf32>
    %49 = vector.broadcast %48 : vector<1x256xf32> to vector<32x256xf32>
    %50 = arith.mulf %24, %49 : vector<32x256xf32>
    %51 = vector.broadcast %48 : vector<1x256xf32> to vector<32x256xf32>
    %52 = arith.mulf %25, %51 : vector<32x256xf32>
    %53 = arith.mulf %50, %32 : vector<32x256xf32>
    %54 = arith.truncf %53 : vector<32x256xf32> to vector<32x256xbf16>
    %c0_20 = arith.constant 0 : index
    %c0_21 = arith.constant 0 : index
    %c0_22 = arith.constant 0 : index
    %55 = vector.load %arg6[%c0_20, %c0_21, %c0_22] : memref<1x32x256xbf16, #tpu.memory_space<vmem>>, vector<1x32x256xbf16>
    %56 = vector.shape_cast %55 : vector<1x32x256xbf16> to vector<32x256xbf16>
    %57 = vector.shape_cast %54 : vector<32x256xbf16> to vector<1x32x256xbf16>
    tpu.vector_store %arg6[%c0_20, %c0_21, %c0_22], %57 {strides = array<i32>} : memref<1x32x256xbf16, #tpu.memory_space<vmem>>, vector<1x32x256xbf16>,
    %58 = arith.mulf %52, %39 : vector<32x256xf32>
    %59 = arith.truncf %58 : vector<32x256xf32> to vector<32x256xbf16>
    %c0_23 = arith.constant 0 : index
    %c0_24 = arith.constant 0 : index
    %c0_25 = arith.constant 0 : index
    %60 = vector.load %arg7[%c0_23, %c0_24, %c0_25] : memref<1x32x256xbf16, #tpu.memory_space<vmem>>, vector<1x32x256xbf16>
    %61 = vector.shape_cast %60 : vector<1x32x256xbf16> to vector<32x256xbf16>
    %62 = vector.shape_cast %59 : vector<32x256xbf16> to vector<1x32x256xbf16>
    tpu.vector_store %arg7[%c0_23, %c0_24, %c0_25], %62 {strides = array<i32>} : memref<1x32x256xbf16, #tpu.memory_space<vmem>>, vector<1x32x256xbf16>,
    %c0_26 = arith.constant 0 : index
    %c0_27 = arith.constant 0 : index
    %c0_28 = arith.constant 0 : index
    %63 = vector.load %arg8[%c0_26, %c0_27, %c0_28] : memref<1x32x256xf32, #tpu.memory_space<vmem>>, vector<1x32x256xf32>
    %64 = vector.shape_cast %63 : vector<1x32x256xf32> to vector<32x256xf32>
    %65 = vector.shape_cast %46 : vector<32x256xf32> to vector<1x32x256xf32>
    tpu.vector_store %arg8[%c0_26, %c0_27, %c0_28], %65 {strides = array<i32>} : memref<1x32x256xf32, #tpu.memory_space<vmem>>, vector<1x32x256xf32>,
    return
  }
  func.func @transform_0(%arg0: i32, %arg1: i32) -> (i32, i32, i32) {
    %c0_i32 = arith.constant 0 : i32
    %c0_i32_0 = arith.constant 0 : i32
    return %arg0, %arg1, %c0_i32 : i32, i32, i32
  }
  func.func @transform_1(%arg0: i32, %arg1: i32) -> (i32, i32) {
    %c0_i32 = arith.constant 0 : i32
    %c0_i32_0 = arith.constant 0 : i32
    %c0_i32_1 = arith.constant 0 : i32
    return %c0_i32, %c0_i32_0 : i32, i32
  }
  func.func @transform_2(%arg0: i32, %arg1: i32) -> (i32, i32) {
    %c0_i32 = arith.constant 0 : i32
    %c0_i32_0 = arith.constant 0 : i32
    %c0_i32_1 = arith.constant 0 : i32
    return %c0_i32, %c0_i32_0 : i32, i32
  }
  func.func @transform_3(%arg0: i32, %arg1: i32) -> (i32, i32, i32) {
    %c0_i32 = arith.constant 0 : i32
    %c0_i32_0 = arith.constant 0 : i32
    return %arg0, %c0_i32, %arg1 : i32, i32, i32
  }
  func.func @transform_4(%arg0: i32, %arg1: i32) -> (i32, i32, i32) {
    %c0_i32 = arith.constant 0 : i32
    %c0_i32_0 = arith.constant 0 : i32
    return %arg0, %c0_i32, %arg1 : i32, i32, i32
  }
  func.func @transform_5(%arg0: i32, %arg1: i32) -> (i32, i32, i32) {
    %c0_i32 = arith.constant 0 : i32
    %c0_i32_0 = arith.constant 0 : i32
    return %arg0, %c0_i32, %arg1 : i32, i32, i32
  }
  func.func @transform_6(%arg0: i32, %arg1: i32) -> (i32, i32, i32) {
    %c0_i32 = arith.constant 0 : i32
    %c0_i32_0 = arith.constant 0 : i32
    return %arg0, %c0_i32, %arg1 : i32, i32, i32
  }
}

module attributes {stable_mosaic.version = 11 : i64} {
  func.func @_tri_mix_ingoing_kernel(%arg0: i32, %arg1: i32, %arg2: memref<1x16x16x16xbf16, #tpu.memory_space<vmem>>, %arg3: memref<1x16x16x16xbf16, #tpu.memory_space<vmem>>, %arg4: memref<1x16x16x16xf32, #tpu.memory_space<vmem>>) attributes {dimension_semantics = [#tpu.dimension_semantics<parallel>, #tpu.dimension_semantics<parallel>], iteration_bounds = array<i64: 2, 2>, scalar_prefetch = 0 : i64, scratch_operands = 0 : i64, tpu.core_type = #tpu.core_type<tc>, window_params = [{transform_indices = @transform_0, window_bounds = array<i64: 1, 16, 16, 16>}, {transform_indices = @transform_1, window_bounds = array<i64: 1, 16, 16, 16>}, {transform_indices = @transform_2, window_bounds = array<i64: 1, 16, 16, 16>}]} {
    %c0 = arith.constant 0 : index
    %c0_0 = arith.constant 0 : index
    %c0_1 = arith.constant 0 : index
    %c0_2 = arith.constant 0 : index
    %0 = vector.load %arg3[%c0, %c0_0, %c0_1, %c0_2] : memref<1x16x16x16xbf16, #tpu.memory_space<vmem>>, vector<1x16x16x16xbf16>
    %1 = vector.shape_cast %0 : vector<1x16x16x16xbf16> to vector<16x16x16xbf16>
    %c0_3 = arith.constant 0 : index
    %c0_4 = arith.constant 0 : index
    %c0_5 = arith.constant 0 : index
    %c0_6 = arith.constant 0 : index
    %2 = vector.load %arg2[%c0_3, %c0_4, %c0_5, %c0_6] : memref<1x16x16x16xbf16, #tpu.memory_space<vmem>>, vector<1x16x16x16xbf16>
    %3 = vector.shape_cast %2 : vector<1x16x16x16xbf16> to vector<16x16x16xbf16>
    %cst = arith.constant dense<0.000000e+00> : vector<16x16x16xf32>
    %4 = tpu.matmul %1, %3, %cst {dimension_numbers = #tpu.dot_dimension_numbers<[1], [1], [2], [2], [0, 0, 0, 2, 1, 2], [0], [0]>} : vector<16x16x16xbf16>, vector<16x16x16xbf16>, vector<16x16x16xf32> -> vector<16x16x16xf32>
    %c0_7 = arith.constant 0 : index
    %c0_8 = arith.constant 0 : index
    %c0_9 = arith.constant 0 : index
    %c0_10 = arith.constant 0 : index
    %5 = vector.load %arg4[%c0_7, %c0_8, %c0_9, %c0_10] : memref<1x16x16x16xf32, #tpu.memory_space<vmem>>, vector<1x16x16x16xf32>
    %6 = vector.shape_cast %5 : vector<1x16x16x16xf32> to vector<16x16x16xf32>
    %7 = vector.shape_cast %4 : vector<16x16x16xf32> to vector<1x16x16x16xf32>
    tpu.vector_store %arg4[%c0_7, %c0_8, %c0_9, %c0_10], %7 {strides = array<i32>} : memref<1x16x16x16xf32, #tpu.memory_space<vmem>>, vector<1x16x16x16xf32>,
    return
  }
  func.func @transform_0(%arg0: i32, %arg1: i32) -> (i32, i32, i32, i32) {
    %c0_i32 = arith.constant 0 : i32
    %c0_i32_0 = arith.constant 0 : i32
    %c0_i32_1 = arith.constant 0 : i32
    return %arg0, %arg1, %c0_i32, %c0_i32_0 : i32, i32, i32, i32
  }
  func.func @transform_1(%arg0: i32, %arg1: i32) -> (i32, i32, i32, i32) {
    %c0_i32 = arith.constant 0 : i32
    %c0_i32_0 = arith.constant 0 : i32
    %c0_i32_1 = arith.constant 0 : i32
    return %arg0, %arg1, %c0_i32, %c0_i32_0 : i32, i32, i32, i32
  }
  func.func @transform_2(%arg0: i32, %arg1: i32) -> (i32, i32, i32, i32) {
    %c0_i32 = arith.constant 0 : i32
    %c0_i32_0 = arith.constant 0 : i32
    %c0_i32_1 = arith.constant 0 : i32
    return %arg0, %arg1, %c0_i32, %c0_i32_0 : i32, i32, i32, i32
  }
}

module attributes {stable_mosaic.version = 11 : i64} {
  func.func @_out_kernel(%arg0: i32, %arg1: i32, %arg2: memref<1x32x256xf32, #tpu.memory_space<vmem>>, %arg3: memref<1x32x256xf32, #tpu.memory_space<vmem>>, %arg4: memref<32x1xf32, #tpu.memory_space<vmem>>, %arg5: memref<32x1xf32, #tpu.memory_space<vmem>>, %arg6: memref<32x32xbf16, #tpu.memory_space<vmem>>, %arg7: memref<1x32xf32, #tpu.memory_space<vmem>>, %arg8: memref<1x256x32xf32, #tpu.memory_space<vmem>>) attributes {dimension_semantics = [#tpu.dimension_semantics<parallel>, #tpu.dimension_semantics<parallel>], iteration_bounds = array<i64: 2, 1>, scalar_prefetch = 0 : i64, scratch_operands = 0 : i64, tpu.core_type = #tpu.core_type<tc>, window_params = [{transform_indices = @transform_0, window_bounds = array<i64: 1, 32, 256>}, {transform_indices = @transform_1, window_bounds = array<i64: 1, 32, 256>}, {pipeline_mode = #tpu.pipeline_mode<synchronous>, transform_indices = @transform_2, window_bounds = array<i64: 32, 1>}, {pipeline_mode = #tpu.pipeline_mode<synchronous>, transform_indices = @transform_3, window_bounds = array<i64: 32, 1>}, {pipeline_mode = #tpu.pipeline_mode<synchronous>, transform_indices = @transform_4, window_bounds = array<i64: 32, 32>}, {pipeline_mode = #tpu.pipeline_mode<synchronous>, transform_indices = @transform_5, window_bounds = array<i64: 1, 32>}, {transform_indices = @transform_6, window_bounds = array<i64: 1, 256, 32>}]} {
    %c0 = arith.constant 0 : index
    %c0_0 = arith.constant 0 : index
    %c0_1 = arith.constant 0 : index
    %0 = vector.load %arg2[%c0, %c0_0, %c0_1] : memref<1x32x256xf32, #tpu.memory_space<vmem>>, vector<1x32x256xf32>
    %1 = vector.shape_cast %0 : vector<1x32x256xf32> to vector<32x256xf32>
    %cst = arith.constant dense<0.000000e+00> : vector<256xf32>
    %2 = vector.multi_reduction <add>, %1, %cst [0] : vector<32x256xf32> to vector<256xf32>
    %3 = vector.shape_cast %2 : vector<256xf32> to vector<1x256xf32>
    %cst_2 = arith.constant 3.200000e+01 : f32
    %4 = vector.broadcast %cst_2 : f32 to vector<1x256xf32>
    %5 = arith.divf %3, %4 : vector<1x256xf32>
    %6 = vector.broadcast %5 : vector<1x256xf32> to vector<32x256xf32>
    %7 = arith.subf %1, %6 : vector<32x256xf32>
    %8 = arith.mulf %7, %7 : vector<32x256xf32>
    %cst_3 = arith.constant dense<0.000000e+00> : vector<256xf32>
    %9 = vector.multi_reduction <add>, %8, %cst_3 [0] : vector<32x256xf32> to vector<256xf32>
    %10 = vector.shape_cast %9 : vector<256xf32> to vector<1x256xf32>
    %cst_4 = arith.constant 3.200000e+01 : f32
    %11 = vector.broadcast %cst_4 : f32 to vector<1x256xf32>
    %12 = arith.divf %10, %11 : vector<1x256xf32>
    %cst_5 = arith.constant 9.99999974E-6 : f32
    %13 = vector.broadcast %cst_5 : f32 to vector<1x256xf32>
    %14 = arith.addf %12, %13 : vector<1x256xf32>
    %15 = math.rsqrt %14 : vector<1x256xf32>
    %16 = vector.broadcast %15 : vector<1x256xf32> to vector<32x256xf32>
    %17 = arith.mulf %7, %16 : vector<32x256xf32>
    %c0_6 = arith.constant 0 : index
    %c0_7 = arith.constant 0 : index
    %18 = vector.load %arg4[%c0_6, %c0_7] : memref<32x1xf32, #tpu.memory_space<vmem>>, vector<32x1xf32>
    %19 = vector.broadcast %18 : vector<32x1xf32> to vector<32x256xf32>
    %20 = arith.mulf %17, %19 : vector<32x256xf32>
    %c0_8 = arith.constant 0 : index
    %c0_9 = arith.constant 0 : index
    %21 = vector.load %arg5[%c0_8, %c0_9] : memref<32x1xf32, #tpu.memory_space<vmem>>, vector<32x1xf32>
    %22 = vector.broadcast %21 : vector<32x1xf32> to vector<32x256xf32>
    %23 = arith.addf %20, %22 : vector<32x256xf32>
    %c0_10 = arith.constant 0 : index
    %c0_11 = arith.constant 0 : index
    %c0_12 = arith.constant 0 : index
    %24 = vector.load %arg3[%c0_10, %c0_11, %c0_12] : memref<1x32x256xf32, #tpu.memory_space<vmem>>, vector<1x32x256xf32>
    %25 = vector.shape_cast %24 : vector<1x32x256xf32> to vector<32x256xf32>
    %26 = arith.mulf %23, %25 : vector<32x256xf32>
    %27 = arith.truncf %26 : vector<32x256xf32> to vector<32x256xbf16>
    %c0_13 = arith.constant 0 : index
    %c0_14 = arith.constant 0 : index
    %28 = vector.load %arg6[%c0_13, %c0_14] : memref<32x32xbf16, #tpu.memory_space<vmem>>, vector<32x32xbf16>
    %cst_15 = arith.constant dense<0.000000e+00> : vector<256x32xf32>
    %29 = tpu.matmul %27, %28, %cst_15 {dimension_numbers = #tpu.dot_dimension_numbers<[0], [0], [1], [1], [0, 1, 1, 1], [], []>} : vector<32x256xbf16>, vector<32x32xbf16>, vector<256x32xf32> -> vector<256x32xf32>
    %c0_16 = arith.constant 0 : index
    %c0_17 = arith.constant 0 : index
    %30 = vector.load %arg7[%c0_16, %c0_17] : memref<1x32xf32, #tpu.memory_space<vmem>>, vector<1x32xf32>
    %31 = vector.broadcast %30 : vector<1x32xf32> to vector<256x32xf32>
    %32 = arith.addf %29, %31 : vector<256x32xf32>
    %c0_18 = arith.constant 0 : index
    %c0_19 = arith.constant 0 : index
    %c0_20 = arith.constant 0 : index
    %33 = vector.load %arg8[%c0_18, %c0_19, %c0_20] : memref<1x256x32xf32, #tpu.memory_space<vmem>>, vector<1x256x32xf32>
    %34 = vector.shape_cast %33 : vector<1x256x32xf32> to vector<256x32xf32>
    %35 = vector.shape_cast %32 : vector<256x32xf32> to vector<1x256x32xf32>
    tpu.vector_store %arg8[%c0_18, %c0_19, %c0_20], %35 {strides = array<i32>} : memref<1x256x32xf32, #tpu.memory_space<vmem>>, vector<1x256x32xf32>,
    return
  }
  func.func @transform_0(%arg0: i32, %arg1: i32) -> (i32, i32, i32) {
    %c0_i32 = arith.constant 0 : i32
    %c0_i32_0 = arith.constant 0 : i32
    return %arg0, %c0_i32, %arg1 : i32, i32, i32
  }
  func.func @transform_1(%arg0: i32, %arg1: i32) -> (i32, i32, i32) {
    %c0_i32 = arith.constant 0 : i32
    %c0_i32_0 = arith.constant 0 : i32
    return %arg0, %c0_i32, %arg1 : i32, i32, i32
  }
  func.func @transform_2(%arg0: i32, %arg1: i32) -> (i32, i32) {
    %c0_i32 = arith.constant 0 : i32
    %c0_i32_0 = arith.constant 0 : i32
    %c0_i32_1 = arith.constant 0 : i32
    return %c0_i32, %c0_i32_0 : i32, i32
  }
  func.func @transform_3(%arg0: i32, %arg1: i32) -> (i32, i32) {
    %c0_i32 = arith.constant 0 : i32
    %c0_i32_0 = arith.constant 0 : i32
    %c0_i32_1 = arith.constant 0 : i32
    return %c0_i32, %c0_i32_0 : i32, i32
  }
  func.func @transform_4(%arg0: i32, %arg1: i32) -> (i32, i32) {
    %c0_i32 = arith.constant 0 : i32
    %c0_i32_0 = arith.constant 0 : i32
    %c0_i32_1 = arith.constant 0 : i32
    return %c0_i32, %c0_i32_0 : i32, i32
  }
  func.func @transform_5(%arg0: i32, %arg1: i32) -> (i32, i32) {
    %c0_i32 = arith.constant 0 : i32
    %c0_i32_0 = arith.constant 0 : i32
    %c0_i32_1 = arith.constant 0 : i32
    return %c0_i32, %c0_i32_0 : i32, i32
  }
  func.func @transform_6(%arg0: i32, %arg1: i32) -> (i32, i32, i32) {
    %c0_i32 = arith.constant 0 : i32
    %c0_i32_0 = arith.constant 0 : i32
    return %arg0, %arg1, %c0_i32 : i32, i32, i32
  }
}

</mosaic_0001>

<llo_original>
// kernel: _lambda_.3
$region0: #{_lambda_.3}
  #allocation0 [shape = 'u32[]', space=smem, size = 0x4, offset = 0x4, fixed_abs, tag = 'smem constant byte address 0x4 - core index']
  #allocation1 [shape = 'u32[144,128]{1,0:T(1,128)}', space=vmem, size = 0x12000, scoped, tag = 'internal scratch']
  %s0 = inlined_call_operand.hbm [shape: f32[2,256,32], index: 0, kind: input, shape index: {}]
  %s1 = inlined_call_operand.vmem [shape: bf16[160,32], index: 1, kind: input, shape index: {}]
  %s2 = inlined_call_operand.hbm [shape: f32[160,1], index: 2, kind: input, shape index: {}]
  %s3 = inlined_call_operand.vmem [shape: f32[2,1,256], index: 3, kind: input, shape index: {}]
  %s4 = inlined_call_operand.vmem [shape: bf16[2,32,256], index: 4, kind: output, shape index: {0}]
  %s5 = inlined_call_operand.vmem [shape: bf16[2,32,256], index: 5, kind: output, shape index: {1}]
  %s6 = inlined_call_operand.vmem [shape: f32[2,32,256], index: 6, kind: output, shape index: {2}]
  %7 = xla_tuple %s4, %s5, %s6
  %s8 = sld [smem:[#allocation0]]
  $region73: #{_lambda_.3} parent=0
    _
  %s10 = ssub.s32 1, %s8
  %s11 = scalar_select 0, %s10, %s8
  $region1: #{_lambda_.3} parent=0
    #allocation2 [shape = 'u8[262144]{0}', space=vmem, size = 0x40000, scoped, tag = 'input window, operand 0']
    #allocation3 [shape = 's32[2]{0}', space=sflag, size = 0x8, scoped, tag = 'scoped memory for _lambda_.3']
    #allocation4 [shape = 'u8[81920]{0}', space=vmem, size = 0x14000, scoped, tag = 'input window, operand 2, single buffered']
    #allocation5 [shape = 's32[1]{0}', space=sflag, size = 0x4, scoped, tag = 'scoped memory for _lambda_.3']
    %12 = vsyncpa [#allocation3], 0
    %s13 = scalar_lea.sflag [#allocation3], 1
    %14 = vsyncpa %s13, 0
    %15 = vsyncpa [#allocation5], 0
    loop: start=0, step=1, limit=4
    $region2: #{_lambda_.3} parent=1 // loop_pre_header
      _
    $region3: #{_lambda_.3} parent=1 // loop_header
      %s17 = sphi 0, %s21
      %p18 = scmp.ge.s32.totalorder %s17, 4
      %s24 = sphi 0, %s36
      %s25 = sphi 0, %s32
      %s26 = sphi 0, %s24
      %s27 = sphi 0, %s25
      %s28 = sphi 0, %s26
      %s29 = sphi 0, %s27
      %s41 = sphi 0, %s43
      %s44 = sphi 0, %s41
      %s45 = sphi 0, %s44
      %s61 = sphi 0, %s45
      %s65 = sphi 0, %s65
      %s67 = sphi 0, %s65
      %s68 = sphi 0, %s67
      %s82 = sphi 0, %s68
      %s86 = sphi 0, %s86
      %s88 = sphi 0, %s86
      %s89 = sphi 0, %s88
      %s103 = sphi 0, %s89
      %s111 = sphi 0, %s113
      %s114 = sphi 0, %s111
      %s115 = sphi 0, %s114
      %s131 = sphi 0, %s115
      %s139 = sphi 0, %s141
      %s142 = sphi 0, %s139
      %s143 = sphi 0, %s142
      %s159 = sphi 0, %s143
      %s167 = sphi 0, %s169
      %s170 = sphi 0, %s167
      %s171 = sphi 0, %s170
      %s187 = sphi 0, %s171
      %s195 = sphi 0, %s197
      %s198 = sphi 0, %s195
      %s199 = sphi 0, %s198
      %s215 = sphi 0, %s199
    $region4: #{_lambda_.3} parent=1 // loop_header_branch
      %20 = sbr.rel (%p18) target = $region8
    $region5: #{_lambda_.3} parent=1 // loop_body
      %s22 = ssub.s32 %s17, 1
      %s23 = ssub.s32 %s17, 2
      %s30 = sadd.s32 1, %s25
      %p31 = scmp.ge.s32.totalorder %s30, 1
      %s32 = scalar_select %p31, 0, %s30
      %s33 = sadd.s32 1, %s24
      %s34 = scalar_select %p31, %s33, %s24
      %p35 = scmp.ge.s32.totalorder %s34, 2
      %s36 = scalar_select %p35, 0, %s34
      %s37 = ssub.s32 %s24, %s36
      %s38 = ssub.s32 %s25, %s32
      %s39 = sor.u32 %s37, %s38
      %p40 = scmp.eq.s32.totalorder %s39, 0
      %s42 = sadd.s32 %s41, 1
      %s43 = scalar_select %p40, %s41, %s42
      %p46 = pneg %p40
      %p47 = scmp.eq.s32.totalorder %s17, 1
      %p48 = por %p46, %p47
      %p49 = scmp.ne.s32.totalorder %s41, %s44
      %p50 = scmp.eq.s32.totalorder %s17, 0
      %p51 = por %p49, %p50
      %p52 = scmp.ne.s32.totalorder %s41, %s44
      %p53 = scmp.eq.s32.totalorder %s22, 1
      %p54 = por %p52, %p53
      %p55 = scmp.ne.s32.totalorder %s44, %s45
      %p56 = scmp.eq.s32.totalorder %s22, 0
      %p57 = por %p55, %p56
      %p58 = scmp.ne.s32.totalorder %s44, %s45
      %p59 = scmp.eq.s32.totalorder %s23, 1
      %p60 = por %p58, %p59
      %p62 = scmp.ne.s32.totalorder %s45, %s61
      %p63 = scmp.eq.s32.totalorder %s23, 0
      %p64 = por %p62, %p63
      %s66 = sadd.s32 %s65, 1
      %p69 = scmp.eq.s32.totalorder %s17, 1
      %p70 = scmp.ne.s32.totalorder %s65, %s67
      %p71 = scmp.eq.s32.totalorder %s17, 0
      %p72 = por %p70, %p71
      %p73 = scmp.ne.s32.totalorder %s65, %s67
      %p74 = scmp.eq.s32.totalorder %s22, 1
      %p75 = por %p73, %p74
      %p76 = scmp.ne.s32.totalorder %s67, %s68
      %p77 = scmp.eq.s32.totalorder %s22, 0
      %p78 = por %p76, %p77
      %p79 = scmp.ne.s32.totalorder %s67, %s68
      %p80 = scmp.eq.s32.totalorder %s23, 1
      %p81 = por %p79, %p80
      %p83 = scmp.ne.s32.totalorder %s68, %s82
      %p84 = scmp.eq.s32.totalorder %s23, 0
      %p85 = por %p83, %p84
      %s87 = sadd.s32 %s86, 1
      %p90 = scmp.eq.s32.totalorder %s17, 1
      %p91 = scmp.ne.s32.totalorder %s86, %s88
      %p92 = scmp.eq.s32.totalorder %s17, 0
      %p93 = por %p91, %p92
      %p94 = scmp.ne.s32.totalorder %s86, %s88
      %p95 = scmp.eq.s32.totalorder %s22, 1
      %p96 = por %p94, %p95
      %p97 = scmp.ne.s32.totalorder %s88, %s89
      %p98 = scmp.eq.s32.totalorder %s22, 0
      %p99 = por %p97, %p98
      %p100 = scmp.ne.s32.totalorder %s88, %s89
      %p101 = scmp.eq.s32.totalorder %s23, 1
      %p102 = por %p100, %p101
      %p104 = scmp.ne.s32.totalorder %s89, %s103
      %p105 = scmp.eq.s32.totalorder %s23, 0
      %p106 = por %p104, %p105
      %s107 = ssub.s32 %s24, %s36
      %s108 = ssub.s32 %s25, %s32
      %s109 = sor.u32 %s107, %s108
      %p110 = scmp.eq.s32.totalorder %s109, 0
      %s112 = sadd.s32 %s111, 1
      %s113 = scalar_select %p110, %s111, %s112
      %p116 = pneg %p110
      %p117 = scmp.eq.s32.totalorder %s17, 1
      %p118 = por %p116, %p117
      %p119 = scmp.ne.s32.totalorder %s111, %s114
      %p120 = scmp.eq.s32.totalorder %s17, 0
      %p121 = por %p119, %p120
      %p122 = scmp.ne.s32.totalorder %s111, %s114
      %p123 = scmp.eq.s32.totalorder %s22, 1
      %p124 = por %p122, %p123
      %p125 = scmp.ne.s32.totalorder %s114, %s115
      %p126 = scmp.eq.s32.totalorder %s22, 0
      %p127 = por %p125, %p126
      %p128 = scmp.ne.s32.totalorder %s114, %s115
      %p129 = scmp.eq.s32.totalorder %s23, 1
      %p130 = por %p128, %p129
      %p132 = scmp.ne.s32.totalorder %s115, %s131
      %p133 = scmp.eq.s32.totalorder %s23, 0
      %p134 = por %p132, %p133
      %s135 = ssub.s32 %s24, %s36
      %s136 = ssub.s32 %s25, %s32
      %s137 = sor.u32 %s135, %s136
      %p138 = scmp.eq.s32.totalorder %s137, 0
      %s140 = sadd.s32 %s139, 1
      %s141 = scalar_select %p138, %s139, %s140
      %p144 = pneg %p138
      %p145 = scmp.eq.s32.totalorder %s17, 1
      %p146 = por %p144, %p145
      %p147 = scmp.ne.s32.totalorder %s139, %s142
      %p148 = scmp.eq.s32.totalorder %s17, 0
      %p149 = por %p147, %p148
      %p150 = scmp.ne.s32.totalorder %s139, %s142
      %p151 = scmp.eq.s32.totalorder %s22, 1
      %p152 = por %p150, %p151
      %p153 = scmp.ne.s32.totalorder %s142, %s143
      %p154 = scmp.eq.s32.totalorder %s22, 0
      %p155 = por %p153, %p154
      %p156 = scmp.ne.s32.totalorder %s142, %s143
      %p157 = scmp.eq.s32.totalorder %s23, 1
      %p158 = por %p156, %p157
      %p160 = scmp.ne.s32.totalorder %s143, %s159
      %p161 = scmp.eq.s32.totalorder %s23, 0
      %p162 = por %p160, %p161
      %s163 = ssub.s32 %s24, %s36
      %s164 = ssub.s32 %s25, %s32
      %s165 = sor.u32 %s163, %s164
      %p166 = scmp.eq.s32.totalorder %s165, 0
      %s168 = sadd.s32 %s167, 1
      %s169 = scalar_select %p166, %s167, %s168
      %p172 = pneg %p166
      %p173 = scmp.eq.s32.totalorder %s17, 1
      %p174 = por %p172, %p173
      %p175 = scmp.ne.s32.totalorder %s167, %s170
      %p176 = scmp.eq.s32.totalorder %s17, 0
      %p177 = por %p175, %p176
      %p178 = scmp.ne.s32.totalorder %s167, %s170
      %p179 = scmp.eq.s32.totalorder %s22, 1
      %p180 = por %p178, %p179
      %p181 = scmp.ne.s32.totalorder %s170, %s171
      %p182 = scmp.eq.s32.totalorder %s22, 0
      %p183 = por %p181, %p182
      %p184 = scmp.ne.s32.totalorder %s170, %s171
      %p185 = scmp.eq.s32.totalorder %s23, 1
      %p186 = por %p184, %p185
      %p188 = scmp.ne.s32.totalorder %s171, %s187
      %p189 = scmp.eq.s32.totalorder %s23, 0
      %p190 = por %p188, %p189
      %s191 = ssub.s32 %s24, %s36
      %s192 = ssub.s32 %s25, %s32
      %s193 = sor.u32 %s191, %s192
      %p194 = scmp.eq.s32.totalorder %s193, 0
      %s196 = sadd.s32 %s195, 1
      %s197 = scalar_select %p194, %s195, %s196
      %p200 = pneg %p194
      %p201 = scmp.eq.s32.totalorder %s17, 1
      %p202 = por %p200, %p201
      %p203 = scmp.ne.s32.totalorder %s195, %s198
      %p204 = scmp.eq.s32.totalorder %s17, 0
      %p205 = por %p203, %p204
      %p206 = scmp.ne.s32.totalorder %s195, %s198
      %p207 = scmp.eq.s32.totalorder %s22, 1
      %p208 = por %p206, %p207
      %p209 = scmp.ne.s32.totalorder %s198, %s199
      %p210 = scmp.eq.s32.totalorder %s22, 0
      %p211 = por %p209, %p210
      %p212 = scmp.ne.s32.totalorder %s198, %s199
      %p213 = scmp.eq.s32.totalorder %s23, 1
      %p214 = por %p212, %p213
      %p216 = scmp.ne.s32.totalorder %s199, %s215
      %p217 = scmp.eq.s32.totalorder %s23, 0
      %p218 = por %p216, %p217
      %p219 = scmp.le.s32.totalorder 1, %s17
      %p220 = scmp.lt.s32.totalorder %s17, 3
      %p221 = pnand %p219, %p220
      %p222 = pneg %p221
      // Predicated region
      $region9: #{_lambda_.3} parent=5 // pred_check
        _
      $region10: #{_lambda_.3} parent=5 // pred_check_branch
        %224 = sbr.rel (%p221) target = $region12
      $region11: #{_lambda_.3} parent=5 // pred_region
        %s225 = ssub.s32 %s17, 1
        // Predicated region
        $region13: #{_lambda_.3} parent=11 // pred_check
          %p226 = pneg %p78
        $region14: #{_lambda_.3} parent=11 // pred_check_branch
          %228 = sbr.rel (%p226) target = $region16
        $region15: #{_lambda_.3} parent=11 // pred_region
          _
        $region16: #{_lambda_.3} parent=11 // pred_fallthru
          _
        // Predicated region
        $region17: #{_lambda_.3} parent=11 // pred_check
          %p229 = pneg %p99
        $region18: #{_lambda_.3} parent=11 // pred_check_branch
          %231 = sbr.rel (%p229) target = $region20
        $region19: #{_lambda_.3} parent=11 // pred_region
          %s233 = ssub.s32 2560, 2560
          %234 = vsyncadd [#allocation5], %s233
          %s235 = sshll.u32 [#allocation4], 4
          %s236 = int_to_ptr.vmem [resolvable:$true] %s235
          %241 = dma.hbm_to_vmem [thread:$0]  %s2, 2560, %s236, [#allocation5], 128, 128, 8
        $region20: #{_lambda_.3} parent=11 // pred_fallthru
          _
      $region12: #{_lambda_.3} parent=5 // pred_fallthru
        _
      %p242 = scmp.lt.s32.totalorder %s17, 2
      // Predicated region
      $region21: #{_lambda_.3} parent=5 // pred_check
        %p243 = pneg %p242
      $region22: #{_lambda_.3} parent=5 // pred_check_branch
        %245 = sbr.rel (%p243) target = $region24
      $region23: #{_lambda_.3} parent=5 // pred_region
        // Predicated region
        $region25: #{_lambda_.3} parent=23 // pred_check
          %p246 = pneg %p51
        $region26: #{_lambda_.3} parent=23 // pred_check_branch
          %248 = sbr.rel (%p246) target = $region28
        $region27: #{_lambda_.3} parent=23 // pred_region
          %s249 = sand.u32 %s41, 1
          %s250 = scalar_lea.sflag [#allocation3], %s249
          %s251 = sand.u32 %s41, 1
          %s252 = smul.addr %s251, 256
          %s253 = scalar_lea.vmem [#allocation2], %s252
          %s254 = smul.u32 32, %s25
          %s256 = ssub.s32 4096, 4096
          %257 = vsyncadd %s250, %s256
          %s258 = smul.addr %s24, 32
          %s259 = sadd.s32 %s254, %s258
          %s260 = smul.addr %s259, 128
          %s261 = scalar_lea.hbm %s0, %s260
          %s262 = sshll.u32 %s253, 4
          %s263 = int_to_ptr.vmem [resolvable:$true] %s262
          %268 = dma.hbm_to_vmem [thread:$0]  %s261, 4096, %s263, %s250, 128, 128, 8
        $region28: #{_lambda_.3} parent=23 // pred_fallthru
          _
        // Predicated region
        $region29: #{_lambda_.3} parent=23 // pred_check
          %p269 = pneg %p121
        $region30: #{_lambda_.3} parent=23 // pred_check_branch
          %271 = sbr.rel (%p269) target = $region32
        $region31: #{_lambda_.3} parent=23 // pred_region
          %s272 = smul.u32 2, %s25
          %p273 = scmp.lt.s32.totalorder %s24, 1
          %s274 = scalar_select %p273, %s24, 1
          %p275 = scmp.lt.s32.totalorder %s272, 1
          %s276 = scalar_select %p275, %s272, 1
          %s277 = smul.addr %s274, 2
          %s278 = sadd.s32 %s276, %s277
          %s279 = scalar_lea.vmem %s3, %s278
          %s280 = smul.u32 2, %s25
        $region32: #{_lambda_.3} parent=23 // pred_fallthru
          _
      $region24: #{_lambda_.3} parent=5 // pred_fallthru
        _
      %p281 = scmp.le.s32.totalorder 1, %s17
      %p282 = scmp.lt.s32.totalorder %s17, 3
      %p283 = pnand %p281, %p282
      %p284 = pneg %p283
      // Predicated region
      $region33: #{_lambda_.3} parent=5 // pred_check
        _
      $region34: #{_lambda_.3} parent=5 // pred_check_branch
        %286 = sbr.rel (%p283) target = $region36
      $region35: #{_lambda_.3} parent=5 // pred_region
        %s287 = ssub.s32 %s17, 1
        %s288 = sand.u32 %s44, 1
        %s289 = scalar_lea.sflag [#allocation3], %s288
        %s290 = sand.u32 %s44, 1
        %s291 = smul.addr %s290, 256
        %s292 = scalar_lea.vmem [#allocation2], %s291
        // Predicated region
        $region37: #{_lambda_.3} parent=35 // pred_check
          %p293 = pneg %p57
        $region38: #{_lambda_.3} parent=35 // pred_check_branch
          %295 = sbr.rel (%p293) target = $region40
        $region39: #{_lambda_.3} parent=35 // pred_region
          %296 = dma.done %s289, 4096
        $region40: #{_lambda_.3} parent=35 // pred_fallthru
          _
        // Predicated region
        $region41: #{_lambda_.3} parent=35 // pred_check
          %p297 = pneg %p99
        $region42: #{_lambda_.3} parent=35 // pred_check_branch
          %299 = sbr.rel (%p297) target = $region44
        $region43: #{_lambda_.3} parent=35 // pred_region
          %300 = dma.done [#allocation5], 2560
        $region44: #{_lambda_.3} parent=35 // pred_fallthru
          _
        %s301 = sand.u32 %s44, 1
        %s302 = scalar_lea.sflag [#allocation3], %s301
        %s303 = sand.u32 %s44, 1
        %s304 = smul.addr %s303, 256
        %s305 = scalar_lea.vmem [#allocation2], %s304
        %p306 = pneg %p57
        %p307 = pneg %p54
        %p308 = pneg %p78
        %p309 = pneg %p75
        %p310 = pneg %p99
        %p311 = pneg %p96
        %s312 = smul.u32 2, %s27
        %p313 = scmp.lt.s32.totalorder %s26, 1
        %s314 = scalar_select %p313, %s26, 1
        %p315 = scmp.lt.s32.totalorder %s312, 1
        %s316 = scalar_select %p315, %s312, 1
        %s317 = smul.addr %s314, 2
        %s318 = sadd.s32 %s316, %s317
        %s319 = scalar_lea.vmem %s3, %s318
        %p320 = pneg %p127
        %p321 = pneg %p124
        %p322 = pneg %p155
        %p323 = pneg %p152
        %s324 = smul.u32 2, %s27
        %p325 = scmp.lt.s32.totalorder %s26, 1
        %s326 = scalar_select %p325, %s26, 1
        %p327 = scmp.lt.s32.totalorder %s324, 1
        %s328 = scalar_select %p327, %s324, 1
        %s329 = smul.addr %s326, 8
        %s330 = sadd.s32 %s328, %s329
        %s331 = smul.addr %s330, 4
        %s332 = scalar_lea.vmem %s4, %s331
        %p333 = pneg %p183
        %p334 = pneg %p180
        %s335 = smul.u32 2, %s27
        %p336 = scmp.lt.s32.totalorder %s26, 1
        %s337 = scalar_select %p336, %s26, 1
        %p338 = scmp.lt.s32.totalorder %s335, 1
        %s339 = scalar_select %p338, %s335, 1
        %s340 = smul.addr %s337, 8
        %s341 = sadd.s32 %s339, %s340
        %s342 = smul.addr %s341, 4
        %s343 = scalar_lea.vmem %s5, %s342
        %p344 = pneg %p211
        %p345 = pneg %p208
        %s346 = smul.u32 2, %s27
        %p347 = scmp.lt.s32.totalorder %s26, 1
        %s348 = scalar_select %p347, %s26, 1
        %p349 = scmp.lt.s32.totalorder %s346, 1
        %s350 = scalar_select %p349, %s346, 1
        %s351 = smul.addr %s348, 8
        %s352 = sadd.s32 %s350, %s351
        %s353 = smul.addr %s352, 8
        %s354 = scalar_lea.vmem %s6, %s353
        %s355 = smul.u32 32, %s27
        %s356 = smul.u32 2, %s27
        %p357 = scmp.lt.s32.totalorder %s26, 1
        %s358 = scalar_select %p357, %s26, 1
        %p359 = scmp.lt.s32.totalorder %s356, 1
        %s360 = scalar_select %p359, %s356, 1
        %s361 = smul.addr %s358, 2
        %s362 = sadd.s32 %s360, %s361
        %s363 = scalar_lea.vmem %s3, %s362
        %s364 = smul.u32 2, %s27
        %s365 = smul.u32 2, %s27
        %p366 = scmp.lt.s32.totalorder %s26, 1
        %s367 = scalar_select %p366, %s26, 1
        %p368 = scmp.lt.s32.totalorder %s365, 1
        %s369 = scalar_select %p368, %s365, 1
        %s370 = smul.addr %s367, 8
        %s371 = sadd.s32 %s369, %s370
        %s372 = smul.addr %s371, 4
        %s373 = scalar_lea.vmem %s4, %s372
        %s374 = smul.u32 2, %s27
        %s375 = smul.u32 2, %s27
        %p376 = scmp.lt.s32.totalorder %s26, 1
        %s377 = scalar_select %p376, %s26, 1
        %p378 = scmp.lt.s32.totalorder %s375, 1
        %s379 = scalar_select %p378, %s375, 1
        %s380 = smul.addr %s377, 8
        %s381 = sadd.s32 %s379, %s380
        %s382 = smul.addr %s381, 4
        %s383 = scalar_lea.vmem %s5, %s382
        %s384 = smul.u32 2, %s27
        %s385 = smul.u32 2, %s27
        %p386 = scmp.lt.s32.totalorder %s26, 1
        %s387 = scalar_select %p386, %s26, 1
        %p388 = scmp.lt.s32.totalorder %s385, 1
        %s389 = scalar_select %p388, %s385, 1
        %s390 = smul.addr %s387, 8
        %s391 = sadd.s32 %s389, %s390
        %s392 = smul.addr %s391, 8
        %s393 = scalar_lea.vmem %s6, %s392
        %s394 = smul.u32 2, %s27
        %v396 = vld [vmem:[%s292] sm:$0xff]
        %v397 = vld [vmem:[%s292 + $0x8] sm:$0xff]
        %v398 = vld [vmem:[%s292 + $0x10] sm:$0xff]
        %v399 = vld [vmem:[%s292 + $0x18] sm:$0xff]
        %v400 = vld [vmem:[%s292 + $0x20] sm:$0xff]
        %v401 = vld [vmem:[%s292 + $0x28] sm:$0xff]
        %v402 = vld [vmem:[%s292 + $0x30] sm:$0xff]
        %v403 = vld [vmem:[%s292 + $0x38] sm:$0xff]
        %v404 = vld [vmem:[%s292 + $0x40] sm:$0xff]
        %v405 = vld [vmem:[%s292 + $0x48] sm:$0xff]
        %v406 = vld [vmem:[%s292 + $0x50] sm:$0xff]
        %v407 = vld [vmem:[%s292 + $0x58] sm:$0xff]
        %v408 = vld [vmem:[%s292 + $0x60] sm:$0xff]
        %v409 = vld [vmem:[%s292 + $0x68] sm:$0xff]
        %v410 = vld [vmem:[%s292 + $0x70] sm:$0xff]
        %v411 = vld [vmem:[%s292 + $0x78] sm:$0xff]
        %v412 = vld [vmem:[%s292 + $0x80] sm:$0xff]
        %v413 = vld [vmem:[%s292 + $0x88] sm:$0xff]
        %v414 = vld [vmem:[%s292 + $0x90] sm:$0xff]
        %v415 = vld [vmem:[%s292 + $0x98] sm:$0xff]
        %v416 = vld [vmem:[%s292 + $0xa0] sm:$0xff]
        %v417 = vld [vmem:[%s292 + $0xa8] sm:$0xff]
        %v418 = vld [vmem:[%s292 + $0xb0] sm:$0xff]
        %v419 = vld [vmem:[%s292 + $0xb8] sm:$0xff]
        %v420 = vld [vmem:[%s292 + $0xc0] sm:$0xff]
        %v421 = vld [vmem:[%s292 + $0xc8] sm:$0xff]
        %v422 = vld [vmem:[%s292 + $0xd0] sm:$0xff]
        %v423 = vld [vmem:[%s292 + $0xd8] sm:$0xff]
        %v424 = vld [vmem:[%s292 + $0xe0] sm:$0xff]
        %v425 = vld [vmem:[%s292 + $0xe8] sm:$0xff]
        %v426 = vld [vmem:[%s292 + $0xf0] sm:$0xff]
        %v427 = vld [vmem:[%s292 + $0xf8] sm:$0xff]
        %vm428 = vcmask 261120
        %v429 = vsel %vm428, %v396, 0.0
        %430 = vadd.xlane.f32.xlu0 %v429
        %v431 = vpop.xlane.xlu0 %430
        %v432 = vsel %vm428, %v397, 0.0
        %433 = vadd.xlane.f32.xlu0 %v432
        %v434 = vpop.xlane.xlu0 %433
        %v435 = vsel %vm428, %v398, 0.0
        %436 = vadd.xlane.f32.xlu0 %v435
        %v437 = vpop.xlane.xlu0 %436
        %v438 = vsel %vm428, %v399, 0.0
        %439 = vadd.xlane.f32.xlu0 %v438
        %v440 = vpop.xlane.xlu0 %439
        %v441 = vsel %vm428, %v400, 0.0
        %442 = vadd.xlane.f32.xlu0 %v441
        %v443 = vpop.xlane.xlu0 %442
        %v444 = vsel %vm428, %v401, 0.0
        %445 = vadd.xlane.f32.xlu0 %v444
        %v446 = vpop.xlane.xlu0 %445
        %v447 = vsel %vm428, %v402, 0.0
        %448 = vadd.xlane.f32.xlu0 %v447
        %v449 = vpop.xlane.xlu0 %448
        %v450 = vsel %vm428, %v403, 0.0
        %451 = vadd.xlane.f32.xlu0 %v450
        %v452 = vpop.xlane.xlu0 %451
        %v453 = vsel %vm428, %v404, 0.0
        %454 = vadd.xlane.f32.xlu0 %v453
        %v455 = vpop.xlane.xlu0 %454
        %v456 = vsel %vm428, %v405, 0.0
        %457 = vadd.xlane.f32.xlu0 %v456
        %v458 = vpop.xlane.xlu0 %457
        %v459 = vsel %vm428, %v406, 0.0
        %460 = vadd.xlane.f32.xlu0 %v459
        %v461 = vpop.xlane.xlu0 %460
        %v462 = vsel %vm428, %v407, 0.0
        %463 = vadd.xlane.f32.xlu0 %v462
        %v464 = vpop.xlane.xlu0 %463
        %v465 = vsel %vm428, %v408, 0.0
        %466 = vadd.xlane.f32.xlu0 %v465
        %v467 = vpop.xlane.xlu0 %466
        %v468 = vsel %vm428, %v409, 0.0
        %469 = vadd.xlane.f32.xlu0 %v468
        %v470 = vpop.xlane.xlu0 %469
        %v471 = vsel %vm428, %v410, 0.0
        %472 = vadd.xlane.f32.xlu0 %v471
        %v473 = vpop.xlane.xlu0 %472
        %v474 = vsel %vm428, %v411, 0.0
        %475 = vadd.xlane.f32.xlu0 %v474
        %v476 = vpop.xlane.xlu0 %475
        %v477 = vsel %vm428, %v412, 0.0
        %478 = vadd.xlane.f32.xlu0 %v477
        %v479 = vpop.xlane.xlu0 %478
        %v480 = vsel %vm428, %v413, 0.0
        %481 = vadd.xlane.f32.xlu0 %v480
        %v482 = vpop.xlane.xlu0 %481
        %v483 = vsel %vm428, %v414, 0.0
        %484 = vadd.xlane.f32.xlu0 %v483
        %v485 = vpop.xlane.xlu0 %484
        %v486 = vsel %vm428, %v415, 0.0
        %487 = vadd.xlane.f32.xlu0 %v486
        %v488 = vpop.xlane.xlu0 %487
        %v489 = vsel %vm428, %v416, 0.0
        %490 = vadd.xlane.f32.xlu0 %v489
        %v491 = vpop.xlane.xlu0 %490
        %v492 = vsel %vm428, %v417, 0.0
        %493 = vadd.xlane.f32.xlu0 %v492
        %v494 = vpop.xlane.xlu0 %493
        %v495 = vsel %vm428, %v418, 0.0
        %496 = vadd.xlane.f32.xlu0 %v495
        %v497 = vpop.xlane.xlu0 %496
        %v498 = vsel %vm428, %v419, 0.0
        %499 = vadd.xlane.f32.xlu0 %v498
        %v500 = vpop.xlane.xlu0 %499
        %v501 = vsel %vm428, %v420, 0.0
        %502 = vadd.xlane.f32.xlu0 %v501
        %v503 = vpop.xlane.xlu0 %502
        %v504 = vsel %vm428, %v421, 0.0
        %505 = vadd.xlane.f32.xlu0 %v504
        %v506 = vpop.xlane.xlu0 %505
        %v507 = vsel %vm428, %v422, 0.0
        %508 = vadd.xlane.f32.xlu0 %v507
        %v509 = vpop.xlane.xlu0 %508
        %v510 = vsel %vm428, %v423, 0.0
        %511 = vadd.xlane.f32.xlu0 %v510
        %v512 = vpop.xlane.xlu0 %511
        %v513 = vsel %vm428, %v424, 0.0
        %514 = vadd.xlane.f32.xlu0 %v513
        %v515 = vpop.xlane.xlu0 %514
        %v516 = vsel %vm428, %v425, 0.0
        %517 = vadd.xlane.f32.xlu0 %v516
        %v518 = vpop.xlane.xlu0 %517
        %v519 = vsel %vm428, %v426, 0.0
        %520 = vadd.xlane.f32.xlu0 %v519
        %v521 = vpop.xlane.xlu0 %520
        %v522 = vsel %vm428, %v427, 0.0
        %523 = vadd.xlane.f32.xlu0 %v522
        %v524 = vpop.xlane.xlu0 %523
        %v525 = vrcp.pop 32.0
        %v526 = vmul.f32 %v431, %v525
        %v527 = vmul.f32 %v434, %v525
        %v528 = vmul.f32 %v437, %v525
        %v529 = vmul.f32 %v440, %v525
        %v530 = vmul.f32 %v443, %v525
        %v531 = vmul.f32 %v446, %v525
        %v532 = vmul.f32 %v449, %v525
        %v533 = vmul.f32 %v452, %v525
        %v534 = vmul.f32 %v455, %v525
        %v535 = vmul.f32 %v458, %v525
        %v536 = vmul.f32 %v461, %v525
        %v537 = vmul.f32 %v464, %v525
        %v538 = vmul.f32 %v467, %v525
        %v539 = vmul.f32 %v470, %v525
        %v540 = vmul.f32 %v473, %v525
        %v541 = vmul.f32 %v476, %v525
        %v542 = vmul.f32 %v479, %v525
        %v543 = vmul.f32 %v482, %v525
        %v544 = vmul.f32 %v485, %v525
        %v545 = vmul.f32 %v488, %v525
        %v546 = vmul.f32 %v491, %v525
        %v547 = vmul.f32 %v494, %v525
        %v548 = vmul.f32 %v497, %v525
        %v549 = vmul.f32 %v500, %v525
        %v550 = vmul.f32 %v503, %v525
        %v551 = vmul.f32 %v506, %v525
        %v552 = vmul.f32 %v509, %v525
        %v553 = vmul.f32 %v512, %v525
        %v554 = vmul.f32 %v515, %v525
        %v555 = vmul.f32 %v518, %v525
        %v556 = vmul.f32 %v521, %v525
        %v557 = vmul.f32 %v524, %v525
        %v558 = vsub.f32 %v396, %v526
        %v559 = vsub.f32 %v397, %v527
        %v560 = vsub.f32 %v398, %v528
        %v561 = vsub.f32 %v399, %v529
        %v562 = vsub.f32 %v400, %v530
        %v563 = vsub.f32 %v401, %v531
        %v564 = vsub.f32 %v402, %v532
        %v565 = vsub.f32 %v403, %v533
        %v566 = vsub.f32 %v404, %v534
        %v567 = vsub.f32 %v405, %v535
        %v568 = vsub.f32 %v406, %v536
        %v569 = vsub.f32 %v407, %v537
        %v570 = vsub.f32 %v408, %v538
        %v571 = vsub.f32 %v409, %v539
        %v572 = vsub.f32 %v410, %v540
        %v573 = vsub.f32 %v411, %v541
        %v574 = vsub.f32 %v412, %v542
        %v575 = vsub.f32 %v413, %v543
        %v576 = vsub.f32 %v414, %v544
        %v577 = vsub.f32 %v415, %v545
        %v578 = vsub.f32 %v416, %v546
        %v579 = vsub.f32 %v417, %v547
        %v580 = vsub.f32 %v418, %v548
        %v581 = vsub.f32 %v419, %v549
        %v582 = vsub.f32 %v420, %v550
        %v583 = vsub.f32 %v421, %v551
        %v584 = vsub.f32 %v422, %v552
        %v585 = vsub.f32 %v423, %v553
        %v586 = vsub.f32 %v424, %v554
        %v587 = vsub.f32 %v425, %v555
        %v588 = vsub.f32 %v426, %v556
        %v589 = vsub.f32 %v427, %v557
        %v590 = vmul.f32 %v558, %v558
        %v591 = vmul.f32 %v559, %v559
        %v592 = vmul.f32 %v560, %v560
        %v593 = vmul.f32 %v561, %v561
        %v594 = vmul.f32 %v562, %v562
        %v595 = vmul.f32 %v563, %v563
        %v596 = vmul.f32 %v564, %v564
        %v597 = vmul.f32 %v565, %v565
        %v598 = vmul.f32 %v566, %v566
        %v599 = vmul.f32 %v567, %v567
        %v600 = vmul.f32 %v568, %v568
        %v601 = vmul.f32 %v569, %v569
        %v602 = vmul.f32 %v570, %v570
        %v603 = vmul.f32 %v571, %v571
        %v604 = vmul.f32 %v572, %v572
        %v605 = vmul.f32 %v573, %v573
        %v606 = vmul.f32 %v574, %v574
        %v607 = vmul.f32 %v575, %v575
        %v608 = vmul.f32 %v576, %v576
        %v609 = vmul.f32 %v577, %v577
        %v610 = vmul.f32 %v578, %v578
        %v611 = vmul.f32 %v579, %v579
        %v612 = vmul.f32 %v580, %v580
        %v613 = vmul.f32 %v581, %v581
        %v614 = vmul.f32 %v582, %v582
        %v615 = vmul.f32 %v583, %v583
        %v616 = vmul.f32 %v584, %v584
        %v617 = vmul.f32 %v585, %v585
        %v618 = vmul.f32 %v586, %v586
        %v619 = vmul.f32 %v587, %v587
        %v620 = vmul.f32 %v588, %v588
        %v621 = vmul.f32 %v589, %v589
        %v622 = vsel %vm428, %v590, 0.0
        %623 = vadd.xlane.f32.xlu0 %v622
        %v624 = vpop.xlane.xlu0 %623
        %v625 = vsel %vm428, %v591, 0.0
        %626 = vadd.xlane.f32.xlu0 %v625
        %v627 = vpop.xlane.xlu0 %626
        %v628 = vsel %vm428, %v592, 0.0
        %629 = vadd.xlane.f32.xlu0 %v628
        %v630 = vpop.xlane.xlu0 %629
        %v631 = vsel %vm428, %v593, 0.0
        %632 = vadd.xlane.f32.xlu0 %v631
        %v633 = vpop.xlane.xlu0 %632
        %v634 = vsel %vm428, %v594, 0.0
        %635 = vadd.xlane.f32.xlu0 %v634
        %v636 = vpop.xlane.xlu0 %635
        %v637 = vsel %vm428, %v595, 0.0
        %638 = vadd.xlane.f32.xlu0 %v637
        %v639 = vpop.xlane.xlu0 %638
        %v640 = vsel %vm428, %v596, 0.0
        %641 = vadd.xlane.f32.xlu0 %v640
        %v642 = vpop.xlane.xlu0 %641
        %v643 = vsel %vm428, %v597, 0.0
        %644 = vadd.xlane.f32.xlu0 %v643
        %v645 = vpop.xlane.xlu0 %644
        %v646 = vsel %vm428, %v598, 0.0
        %647 = vadd.xlane.f32.xlu0 %v646
        %v648 = vpop.xlane.xlu0 %647
        %v649 = vsel %vm428, %v599, 0.0
        %650 = vadd.xlane.f32.xlu0 %v649
        %v651 = vpop.xlane.xlu0 %650
        %v652 = vsel %vm428, %v600, 0.0
        %653 = vadd.xlane.f32.xlu0 %v652
        %v654 = vpop.xlane.xlu0 %653
        %v655 = vsel %vm428, %v601, 0.0
        %656 = vadd.xlane.f32.xlu0 %v655
        %v657 = vpop.xlane.xlu0 %656
        %v658 = vsel %vm428, %v602, 0.0
        %659 = vadd.xlane.f32.xlu0 %v658
        %v660 = vpop.xlane.xlu0 %659
        %v661 = vsel %vm428, %v603, 0.0
        %662 = vadd.xlane.f32.xlu0 %v661
        %v663 = vpop.xlane.xlu0 %662
        %v664 = vsel %vm428, %v604, 0.0
        %665 = vadd.xlane.f32.xlu0 %v664
        %v666 = vpop.xlane.xlu0 %665
        %v667 = vsel %vm428, %v605, 0.0
        %668 = vadd.xlane.f32.xlu0 %v667
        %v669 = vpop.xlane.xlu0 %668
        %v670 = vsel %vm428, %v606, 0.0
        %671 = vadd.xlane.f32.xlu0 %v670
        %v672 = vpop.xlane.xlu0 %671
        %v673 = vsel %vm428, %v607, 0.0
        %674 = vadd.xlane.f32.xlu0 %v673
        %v675 = vpop.xlane.xlu0 %674
        %v676 = vsel %vm428, %v608, 0.0
        %677 = vadd.xlane.f32.xlu0 %v676
        %v678 = vpop.xlane.xlu0 %677
        %v679 = vsel %vm428, %v609, 0.0
        %680 = vadd.xlane.f32.xlu0 %v679
        %v681 = vpop.xlane.xlu0 %680
        %v682 = vsel %vm428, %v610, 0.0
        %683 = vadd.xlane.f32.xlu0 %v682
        %v684 = vpop.xlane.xlu0 %683
        %v685 = vsel %vm428, %v611, 0.0
        %686 = vadd.xlane.f32.xlu0 %v685
        %v687 = vpop.xlane.xlu0 %686
        %v688 = vsel %vm428, %v612, 0.0
        %689 = vadd.xlane.f32.xlu0 %v688
        %v690 = vpop.xlane.xlu0 %689
        %v691 = vsel %vm428, %v613, 0.0
        %692 = vadd.xlane.f32.xlu0 %v691
        %v693 = vpop.xlane.xlu0 %692
        %v694 = vsel %vm428, %v614, 0.0
        %695 = vadd.xlane.f32.xlu0 %v694
        %v696 = vpop.xlane.xlu0 %695
        %v697 = vsel %vm428, %v615, 0.0
        %698 = vadd.xlane.f32.xlu0 %v697
        %v699 = vpop.xlane.xlu0 %698
        %v700 = vsel %vm428, %v616, 0.0
        %701 = vadd.xlane.f32.xlu0 %v700
        %v702 = vpop.xlane.xlu0 %701
        %v703 = vsel %vm428, %v617, 0.0
        %704 = vadd.xlane.f32.xlu0 %v703
        %v705 = vpop.xlane.xlu0 %704
        %v706 = vsel %vm428, %v618, 0.0
        %707 = vadd.xlane.f32.xlu0 %v706
        %v708 = vpop.xlane.xlu0 %707
        %v709 = vsel %vm428, %v619, 0.0
        %710 = vadd.xlane.f32.xlu0 %v709
        %v711 = vpop.xlane.xlu0 %710
        %v712 = vsel %vm428, %v620, 0.0
        %713 = vadd.xlane.f32.xlu0 %v712
        %v714 = vpop.xlane.xlu0 %713
        %v715 = vsel %vm428, %v621, 0.0
        %716 = vadd.xlane.f32.xlu0 %v715
        %v717 = vpop.xlane.xlu0 %716
        %v718 = vmul.f32 %v624, %v525
        %v719 = vmul.f32 %v627, %v525
        %v720 = vmul.f32 %v630, %v525
        %v721 = vmul.f32 %v633, %v525
        %v722 = vmul.f32 %v636, %v525
        %v723 = vmul.f32 %v639, %v525
        %v724 = vmul.f32 %v642, %v525
        %v725 = vmul.f32 %v645, %v525
        %v726 = vmul.f32 %v648, %v525
        %v727 = vmul.f32 %v651, %v525
        %v728 = vmul.f32 %v654, %v525
        %v729 = vmul.f32 %v657, %v525
        %v730 = vmul.f32 %v660, %v525
        %v731 = vmul.f32 %v663, %v525
        %v732 = vmul.f32 %v666, %v525
        %v733 = vmul.f32 %v669, %v525
        %v734 = vmul.f32 %v672, %v525
        %v735 = vmul.f32 %v675, %v525
        %v736 = vmul.f32 %v678, %v525
        %v737 = vmul.f32 %v681, %v525
        %v738 = vmul.f32 %v684, %v525
        %v739 = vmul.f32 %v687, %v525
        %v740 = vmul.f32 %v690, %v525
        %v741 = vmul.f32 %v693, %v525
        %v742 = vmul.f32 %v696, %v525
        %v743 = vmul.f32 %v699, %v525
        %v744 = vmul.f32 %v702, %v525
        %v745 = vmul.f32 %v705, %v525
        %v746 = vmul.f32 %v708, %v525
        %v747 = vmul.f32 %v711, %v525
        %v748 = vmul.f32 %v714, %v525
        %v749 = vmul.f32 %v717, %v525
        %v750 = vadd.f32 %v718, 1e-05
        %v751 = vadd.f32 %v719, 1e-05
        %v752 = vadd.f32 %v720, 1e-05
        %v753 = vadd.f32 %v721, 1e-05
        %v754 = vadd.f32 %v722, 1e-05
        %v755 = vadd.f32 %v723, 1e-05
        %v756 = vadd.f32 %v724, 1e-05
        %v757 = vadd.f32 %v725, 1e-05
        %v758 = vadd.f32 %v726, 1e-05
        %v759 = vadd.f32 %v727, 1e-05
        %v760 = vadd.f32 %v728, 1e-05
        %v761 = vadd.f32 %v729, 1e-05
        %v762 = vadd.f32 %v730, 1e-05
        %v763 = vadd.f32 %v731, 1e-05
        %v764 = vadd.f32 %v732, 1e-05
        %v765 = vadd.f32 %v733, 1e-05
        %v766 = vadd.f32 %v734, 1e-05
        %v767 = vadd.f32 %v735, 1e-05
        %v768 = vadd.f32 %v736, 1e-05
        %v769 = vadd.f32 %v737, 1e-05
        %v770 = vadd.f32 %v738, 1e-05
        %v771 = vadd.f32 %v739, 1e-05
        %v772 = vadd.f32 %v740, 1e-05
        %v773 = vadd.f32 %v741, 1e-05
        %v774 = vadd.f32 %v742, 1e-05
        %v775 = vadd.f32 %v743, 1e-05
        %v776 = vadd.f32 %v744, 1e-05
        %v777 = vadd.f32 %v745, 1e-05
        %v778 = vadd.f32 %v746, 1e-05
        %v779 = vadd.f32 %v747, 1e-05
        %v780 = vadd.f32 %v748, 1e-05
        %v781 = vadd.f32 %v749, 1e-05
        %v782 = vrsqrt.pop %v750
        %v783 = vrsqrt.pop %v751
        %v784 = vrsqrt.pop %v752
        %v785 = vrsqrt.pop %v753
        %v786 = vrsqrt.pop %v754
        %v787 = vrsqrt.pop %v755
        %v788 = vrsqrt.pop %v756
        %v789 = vrsqrt.pop %v757
        %v790 = vrsqrt.pop %v758
        %v791 = vrsqrt.pop %v759
        %v792 = vrsqrt.pop %v760
        %v793 = vrsqrt.pop %v761
        %v794 = vrsqrt.pop %v762
        %v795 = vrsqrt.pop %v763
        %v796 = vrsqrt.pop %v764
        %v797 = vrsqrt.pop %v765
        %v798 = vrsqrt.pop %v766
        %v799 = vrsqrt.pop %v767
        %v800 = vrsqrt.pop %v768
        %v801 = vrsqrt.pop %v769
        %v802 = vrsqrt.pop %v770
        %v803 = vrsqrt.pop %v771
        %v804 = vrsqrt.pop %v772
        %v805 = vrsqrt.pop %v773
        %v806 = vrsqrt.pop %v774
        %v807 = vrsqrt.pop %v775
        %v808 = vrsqrt.pop %v776
        %v809 = vrsqrt.pop %v777
        %v810 = vrsqrt.pop %v778
        %v811 = vrsqrt.pop %v779
        %v812 = vrsqrt.pop %v780
        %v813 = vrsqrt.pop %v781
        %v814 = vmul.f32 %v558, %v782
        %v815 = vmul.f32 %v559, %v783
        %v816 = vmul.f32 %v560, %v784
        %v817 = vmul.f32 %v561, %v785
        %v818 = vmul.f32 %v562, %v786
        %v819 = vmul.f32 %v563, %v787
        %v820 = vmul.f32 %v564, %v788
        %v821 = vmul.f32 %v565, %v789
        %v822 = vmul.f32 %v566, %v790
        %v823 = vmul.f32 %v567, %v791
        %v824 = vmul.f32 %v568, %v792
        %v825 = vmul.f32 %v569, %v793
        %v826 = vmul.f32 %v570, %v794
        %v827 = vmul.f32 %v571, %v795
        %v828 = vmul.f32 %v572, %v796
        %v829 = vmul.f32 %v573, %v797
        %v830 = vmul.f32 %v574, %v798
        %v831 = vmul.f32 %v575, %v799
        %v832 = vmul.f32 %v576, %v800
        %v833 = vmul.f32 %v577, %v801
        %v834 = vmul.f32 %v578, %v802
        %v835 = vmul.f32 %v579, %v803
        %v836 = vmul.f32 %v580, %v804
        %v837 = vmul.f32 %v581, %v805
        %v838 = vmul.f32 %v582, %v806
        %v839 = vmul.f32 %v583, %v807
        %v840 = vmul.f32 %v584, %v808
        %v841 = vmul.f32 %v585, %v809
        %v842 = vmul.f32 %v586, %v810
        %v843 = vmul.f32 %v587, %v811
        %v844 = vmul.f32 %v588, %v812
        %v845 = vmul.f32 %v589, %v813
        %v846 = vpack.c.bf16 %v815, %v814
        %v847 = vpack.c.bf16 %v817, %v816
        %v848 = vpack.c.bf16 %v819, %v818
        %v849 = vpack.c.bf16 %v821, %v820
        %v850 = vpack.c.bf16 %v823, %v822
        %v851 = vpack.c.bf16 %v825, %v824
        %v852 = vpack.c.bf16 %v827, %v826
        %v853 = vpack.c.bf16 %v829, %v828
        %v854 = vpack.c.bf16 %v831, %v830
        %v855 = vpack.c.bf16 %v833, %v832
        %v856 = vpack.c.bf16 %v835, %v834
        %v857 = vpack.c.bf16 %v837, %v836
        %v858 = vpack.c.bf16 %v839, %v838
        %v859 = vpack.c.bf16 %v841, %v840
        %v860 = vpack.c.bf16 %v843, %v842
        %v861 = vpack.c.bf16 %v845, %v844
        %v862 = vld [vmem:[%s1] sm:$0xf]
        %v863 = vld [vmem:[%s1 + $0x4] sm:$0xf]
        %v864 = vld [vmem:[%s1 + $0x8] sm:$0xf]
        %v865 = vld [vmem:[%s1 + $0xc] sm:$0xf]
        %v866 = vld [vmem:[%s1 + $0x10] sm:$0xf]
        %v867 = vld [vmem:[%s1 + $0x14] sm:$0xf]
        %v868 = vld [vmem:[%s1 + $0x18] sm:$0xf]
        %v869 = vld [vmem:[%s1 + $0x1c] sm:$0xf]
        %v870 = vld [vmem:[%s1 + $0x20] sm:$0xf]
        %v871 = vld [vmem:[%s1 + $0x24] sm:$0xf]
        %v872 = vld [vmem:[%s1 + $0x28] sm:$0xf]
        %v873 = vld [vmem:[%s1 + $0x2c] sm:$0xf]
        %v874 = vld [vmem:[%s1 + $0x30] sm:$0xf]
        %v875 = vld [vmem:[%s1 + $0x34] sm:$0xf]
        %v876 = vld [vmem:[%s1 + $0x38] sm:$0xf]
        %v877 = vld [vmem:[%s1 + $0x3c] sm:$0xf]
        %v878 = vld [vmem:[%s1 + $0x40] sm:$0xf]
        %v879 = vld [vmem:[%s1 + $0x44] sm:$0xf]
        %v880 = vld [vmem:[%s1 + $0x48] sm:$0xf]
        %v881 = vld [vmem:[%s1 + $0x4c] sm:$0xf]
        %v882 = vld [vmem:[#allocation4] sm:$0xff]
        %v883 = vld [vmem:[#allocation4 + $0x8] sm:$0xff]
        %v884 = vld [vmem:[#allocation4 + $0x10] sm:$0xff]
        %v885 = vld [vmem:[#allocation4 + $0x18] sm:$0xff]
        %v886 = vld [vmem:[#allocation4 + $0x20] sm:$0xff]
        %v887 = vld [vmem:[#allocation4 + $0x28] sm:$0xff]
        %v888 = vld [vmem:[#allocation4 + $0x30] sm:$0xff]
        %v889 = vld [vmem:[#allocation4 + $0x38] sm:$0xff]
        %v890 = vld [vmem:[#allocation4 + $0x40] sm:$0xff]
        %v891 = vld [vmem:[#allocation4 + $0x48] sm:$0xff]
        %v892 = vld [vmem:[#allocation4 + $0x50] sm:$0xff]
        %v893 = vld [vmem:[#allocation4 + $0x58] sm:$0xff]
        %v894 = vld [vmem:[#allocation4 + $0x60] sm:$0xff]
        %v895 = vld [vmem:[#allocation4 + $0x68] sm:$0xff]
        %v896 = vld [vmem:[#allocation4 + $0x70] sm:$0xff]
        %v897 = vld [vmem:[#allocation4 + $0x78] sm:$0xff]
        %v898 = vld [vmem:[#allocation4 + $0x80] sm:$0xff]
        %v899 = vld [vmem:[#allocation4 + $0x88] sm:$0xff]
        %v900 = vld [vmem:[#allocation4 + $0x90] sm:$0xff]
        %v901 = vld [vmem:[#allocation4 + $0x98] sm:$0xff]
        %903 = vset.pattern.permute.xlu0 0
        %904 = vperm.xlu0 %903, %v882
        %v905 = vpop.permute.xlu0 %904
        %908 = vset.pattern.permute.xlu0 0
        %909 = vperm.xlu0 %908, %v883
        %v910 = vpop.permute.xlu0 %909
        %913 = vset.pattern.permute.xlu0 0
        %914 = vperm.xlu0 %913, %v884
        %v915 = vpop.permute.xlu0 %914
        %918 = vset.pattern.permute.xlu0 0
        %919 = vperm.xlu0 %918, %v885
        %v920 = vpop.permute.xlu0 %919
        %923 = vset.pattern.permute.xlu0 0
        %924 = vperm.xlu0 %923, %v886
        %v925 = vpop.permute.xlu0 %924
        %928 = vset.pattern.permute.xlu0 0
        %929 = vperm.xlu0 %928, %v887
        %v930 = vpop.permute.xlu0 %929
        %933 = vset.pattern.permute.xlu0 0
        %934 = vperm.xlu0 %933, %v888
        %v935 = vpop.permute.xlu0 %934
        %938 = vset.pattern.permute.xlu0 0
        %939 = vperm.xlu0 %938, %v889
        %v940 = vpop.permute.xlu0 %939
        %943 = vset.pattern.permute.xlu0 0
        %944 = vperm.xlu0 %943, %v890
        %v945 = vpop.permute.xlu0 %944
        %948 = vset.pattern.permute.xlu0 0
        %949 = vperm.xlu0 %948, %v891
        %v950 = vpop.permute.xlu0 %949
        %953 = vset.pattern.permute.xlu0 0
        %954 = vperm.xlu0 %953, %v892
        %v955 = vpop.permute.xlu0 %954
        %958 = vset.pattern.permute.xlu0 0
        %959 = vperm.xlu0 %958, %v893
        %v960 = vpop.permute.xlu0 %959
        %963 = vset.pattern.permute.xlu0 0
        %964 = vperm.xlu0 %963, %v894
        %v965 = vpop.permute.xlu0 %964
        %968 = vset.pattern.permute.xlu0 0
        %969 = vperm.xlu0 %968, %v895
        %v970 = vpop.permute.xlu0 %969
        %973 = vset.pattern.permute.xlu0 0
        %974 = vperm.xlu0 %973, %v896
        %v975 = vpop.permute.xlu0 %974
        %978 = vset.pattern.permute.xlu0 0
        %979 = vperm.xlu0 %978, %v897
        %v980 = vpop.permute.xlu0 %979
        %983 = vset.pattern.permute.xlu0 0
        %984 = vperm.xlu0 %983, %v898
        %v985 = vpop.permute.xlu0 %984
        %988 = vset.pattern.permute.xlu0 0
        %989 = vperm.xlu0 %988, %v899
        %v990 = vpop.permute.xlu0 %989
        %993 = vset.pattern.permute.xlu0 0
        %994 = vperm.xlu0 %993, %v900
        %v995 = vpop.permute.xlu0 %994
        %998 = vset.pattern.permute.xlu0 0
        %999 = vperm.xlu0 %998, %v901
        %v1000 = vpop.permute.xlu0 %999
        %v1022 = vunpack.c.l.b16 %v862
        %v1023 = vunpack.c.l.b16 %v863
        %v1024 = vunpack.c.l.b16 %v864
        %v1025 = vunpack.c.l.b16 %v865
        %v1026 = vunpack.c.l.b16 %v866
        %v1027 = vunpack.c.l.b16 %v867
        %v1028 = vunpack.c.l.b16 %v868
        %v1029 = vunpack.c.l.b16 %v869
        %v1030 = vunpack.c.l.b16 %v870
        %v1031 = vunpack.c.l.b16 %v871
        %v1032 = vunpack.c.l.b16 %v872
        %v1033 = vunpack.c.l.b16 %v873
        %v1034 = vunpack.c.l.b16 %v874
        %v1035 = vunpack.c.l.b16 %v875
        %v1036 = vunpack.c.l.b16 %v876
        %v1037 = vunpack.c.l.b16 %v877
        %v1038 = vunpack.c.l.b16 %v878
        %v1039 = vunpack.c.l.b16 %v879
        %v1040 = vunpack.c.l.b16 %v880
        %v1041 = vunpack.c.l.b16 %v881
        %v1042 = vpack.c.b16 %v1023, %v1022
        %v1043 = vpack.c.b16 %v1025, %v1024
        %v1044 = vpack.c.b16 %v1027, %v1026
        %v1045 = vpack.c.b16 %v1029, %v1028
        %v1046 = vpack.c.b16 %v1031, %v1030
        %v1047 = vpack.c.b16 %v1033, %v1032
        %v1048 = vpack.c.b16 %v1035, %v1034
        %v1049 = vpack.c.b16 %v1037, %v1036
        %v1050 = vpack.c.b16 %v1039, %v1038
        %v1051 = vpack.c.b16 %v1041, %v1040
        %v1053 = vsel %vm428, %v1042, 0
        %v1056 = vsel %vm428, %v1043, 0
        %v1059 = vsel %vm428, %v1044, 0
        %v1062 = vsel %vm428, %v1045, 0
        %v1065 = vsel %vm428, %v1046, 0
        %v1068 = vsel %vm428, %v1047, 0
        %v1071 = vsel %vm428, %v1048, 0
        %v1074 = vsel %vm428, %v1049, 0
        %v1077 = vsel %vm428, %v1050, 0
        %v1080 = vsel %vm428, %v1051, 0
        %v1083 = vsel %vm428, %v846, 0
        %v1086 = vsel %vm428, %v847, 0
        %v1089 = vsel %vm428, %v848, 0
        %v1092 = vsel %vm428, %v849, 0
        %v1095 = vsel %vm428, %v850, 0
        %v1098 = vsel %vm428, %v851, 0
        %v1101 = vsel %vm428, %v852, 0
        %v1104 = vsel %vm428, %v853, 0
        %v1107 = vsel %vm428, %v854, 0
        %v1110 = vsel %vm428, %v855, 0
        %v1113 = vsel %vm428, %v856, 0
        %v1116 = vsel %vm428, %v857, 0
        %v1119 = vsel %vm428, %v858, 0
        %v1122 = vsel %vm428, %v859, 0
        %v1125 = vsel %vm428, %v860, 0
        %v1128 = vsel %vm428, %v861, 0
        %1130 = vmatprep.subr.bf16.mxu0 0
        %1131 = vmatpush1.bf16.xpose.msra.mxu0 %v1083
        %1132 = vmatprep.subr.bf16.mxu0 0
        %1133 = vmatpush1.bf16.xpose.msra.mxu0 %v1086
        %1134 = vmatprep.subr.bf16.mxu0 0
        %1135 = vmatpush1.bf16.xpose.msra.mxu0 %v1089
        %1136 = vmatprep.subr.bf16.mxu0 0
        %1137 = vmatpush1.bf16.xpose.msra.mxu0 %v1092
        %1138 = vmatprep.subr.bf16.mxu0 0
        %1139 = vmatpush1.bf16.xpose.msra.mxu0 %v1095
        %1140 = vmatprep.subr.bf16.mxu0 0
        %1141 = vmatpush1.bf16.xpose.msra.mxu0 %v1098
        %1142 = vmatprep.subr.bf16.mxu0 0
        %1143 = vmatpush1.bf16.xpose.msra.mxu0 %v1101
        %1144 = vmatprep.subr.bf16.mxu0 0
        %1145 = vmatpush1.bf16.xpose.msra.mxu0 %v1104
        %1146 = vmatprep.subr.bf16.mxu0 0
        %1147 = vmatpush1.bf16.xpose.msra.mxu0 %v1107
        %1148 = vmatprep.subr.bf16.mxu0 0
        %1149 = vmatpush1.bf16.xpose.msra.mxu0 %v1110
        %1150 = vmatprep.subr.bf16.mxu0 0
        %1151 = vmatpush1.bf16.xpose.msra.mxu0 %v1113
        %1152 = vmatprep.subr.bf16.mxu0 0
        %1153 = vmatpush1.bf16.xpose.msra.mxu0 %v1116
        %1154 = vmatprep.subr.bf16.mxu0 0
        %1155 = vmatpush1.bf16.xpose.msra.mxu0 %v1119
        %1156 = vmatprep.subr.bf16.mxu0 0
        %1157 = vmatpush1.bf16.xpose.msra.mxu0 %v1122
        %1158 = vmatprep.subr.bf16.mxu0 0
        %1159 = vmatpush1.bf16.xpose.msra.mxu0 %v1125
        %1160 = vmatprep.subr.bf16.mxu0 0
        %1161 = vmatpush1.bf16.xpose.msra.mxu0 %v1128
        %1162 = vmatprep.mubr.bf16.mxu0 0
        %1163 = vmatmul.mubr.bf16.gmra.mrb[0].mxu0 %v1053
        %v1164 = vpop.f32.mrb[0].mxu0
        %v1165 = vadd.f32 %v905, %v1164
        %v1166 = vpop.f32.mrb[0].mxu0
        %v1167 = vadd.f32 %v905, %v1166
        %v1168 = vpop.f32.mrb[0].mxu0
        %v1169 = vadd.f32 %v910, %v1168
        %v1170 = vpop.f32.mrb[0].mxu0
        %v1171 = vadd.f32 %v910, %v1170
        %1172 = vmatprep.mubr.bf16.mxu0 0
        %1173 = vmatmul.mubr.bf16.gmra.mrb[0].mxu0 %v1056
        %v1174 = vpop.f32.mrb[0].mxu0
        %v1175 = vadd.f32 %v915, %v1174
        %v1176 = vpop.f32.mrb[0].mxu0
        %v1177 = vadd.f32 %v915, %v1176
        %v1178 = vpop.f32.mrb[0].mxu0
        %v1179 = vadd.f32 %v920, %v1178
        %v1180 = vpop.f32.mrb[0].mxu0
        %v1181 = vadd.f32 %v920, %v1180
        %1182 = vmatprep.mubr.bf16.mxu0 0
        %1183 = vmatmul.mubr.bf16.gmra.mrb[0].mxu0 %v1059
        %v1184 = vpop.f32.mrb[0].mxu0
        %v1185 = vadd.f32 %v925, %v1184
        %v1186 = vpop.f32.mrb[0].mxu0
        %v1187 = vadd.f32 %v925, %v1186
        %v1188 = vpop.f32.mrb[0].mxu0
        %v1189 = vadd.f32 %v930, %v1188
        %v1190 = vpop.f32.mrb[0].mxu0
        %v1191 = vadd.f32 %v930, %v1190
        %1192 = vmatprep.mubr.bf16.mxu0 0
        %1193 = vmatmul.mubr.bf16.gmra.mrb[0].mxu0 %v1062
        %v1194 = vpop.f32.mrb[0].mxu0
        %v1195 = vadd.f32 %v935, %v1194
        %v1196 = vpop.f32.mrb[0].mxu0
        %v1197 = vadd.f32 %v935, %v1196
        %v1198 = vpop.f32.mrb[0].mxu0
        %v1199 = vadd.f32 %v940, %v1198
        %v1200 = vpop.f32.mrb[0].mxu0
        %v1201 = vadd.f32 %v940, %v1200
        %1202 = vmatprep.mubr.bf16.mxu0 0
        %1203 = vmatmul.mubr.bf16.gmra.mrb[0].mxu0 %v1065
        %v1204 = vpop.f32.mrb[0].mxu0
        %v1205 = vadd.f32 %v945, %v1204
        %v1206 = vpop.f32.mrb[0].mxu0
        %v1207 = vadd.f32 %v945, %v1206
        %v1208 = vpop.f32.mrb[0].mxu0
        %v1209 = vadd.f32 %v950, %v1208
        %v1210 = vpop.f32.mrb[0].mxu0
        %v1211 = vadd.f32 %v950, %v1210
        %1212 = vmatprep.mubr.bf16.mxu0 0
        %1213 = vmatmul.mubr.bf16.gmra.mrb[0].mxu0 %v1068
        %v1214 = vpop.f32.mrb[0].mxu0
        %v1215 = vadd.f32 %v955, %v1214
        %v1216 = vpop.f32.mrb[0].mxu0
        %v1217 = vadd.f32 %v955, %v1216
        %v1218 = vpop.f32.mrb[0].mxu0
        %v1219 = vadd.f32 %v960, %v1218
        %v1220 = vpop.f32.mrb[0].mxu0
        %v1221 = vadd.f32 %v960, %v1220
        %1222 = vmatprep.mubr.bf16.mxu0 0
        %1223 = vmatmul.mubr.bf16.gmra.mrb[0].mxu0 %v1071
        %v1224 = vpop.f32.mrb[0].mxu0
        %v1225 = vadd.f32 %v965, %v1224
        %v1226 = vpop.f32.mrb[0].mxu0
        %v1227 = vadd.f32 %v965, %v1226
        %v1228 = vpop.f32.mrb[0].mxu0
        %v1229 = vadd.f32 %v970, %v1228
        %v1230 = vpop.f32.mrb[0].mxu0
        %v1231 = vadd.f32 %v970, %v1230
        %1232 = vmatprep.mubr.bf16.mxu0 0
        %1233 = vmatmul.mubr.bf16.gmra.mrb[0].mxu0 %v1074
        %v1234 = vpop.f32.mrb[0].mxu0
        %v1235 = vadd.f32 %v975, %v1234
        %v1236 = vpop.f32.mrb[0].mxu0
        %v1237 = vadd.f32 %v975, %v1236
        %v1238 = vpop.f32.mrb[0].mxu0
        %v1239 = vadd.f32 %v980, %v1238
        %v1240 = vpop.f32.mrb[0].mxu0
        %v1241 = vadd.f32 %v980, %v1240
        %1242 = vmatprep.mubr.bf16.mxu0 0
        %1243 = vmatmul.mubr.bf16.gmra.mrb[0].mxu0 %v1077
        %v1244 = vpop.f32.mrb[0].mxu0
        %v1245 = vadd.f32 %v985, %v1244
        %v1246 = vpop.f32.mrb[0].mxu0
        %v1247 = vadd.f32 %v985, %v1246
        %v1248 = vpop.f32.mrb[0].mxu0
        %v1249 = vadd.f32 %v990, %v1248
        %v1250 = vpop.f32.mrb[0].mxu0
        %v1251 = vadd.f32 %v990, %v1250
        %1252 = vmatprep.mubr.bf16.mxu0 0
        %1253 = vmatmul.mubr.bf16.gmra.mrb[0].mxu0 %v1080
        %v1254 = vpop.f32.mrb[0].mxu0
        %v1255 = vadd.f32 %v995, %v1254
        %v1256 = vpop.f32.mrb[0].mxu0
        %v1257 = vadd.f32 %v995, %v1256
        %v1258 = vpop.f32.mrb[0].mxu0
        %v1259 = vadd.f32 %v1000, %v1258
        %v1260 = vpop.f32.mrb[0].mxu0
        %v1261 = vadd.f32 %v1000, %v1260
        %1262 = vdwg.mxu0
        %v1263 = vsub.f32 0.0, %v1205
        %v1264 = vsub.f32 0.0, %v1207
        %v1265 = vsub.f32 0.0, %v1209
        %v1266 = vsub.f32 0.0, %v1211
        %v1267 = vsub.f32 0.0, %v1215
        %v1268 = vsub.f32 0.0, %v1217
        %v1269 = vsub.f32 0.0, %v1219
        %v1270 = vsub.f32 0.0, %v1221
        %v1271 = vmul.f32 %v1263, 1.442695
        %v1272 = vpow.pop %v1271
        %v1273 = vmul.f32 %v1264, 1.442695
        %v1274 = vpow.pop %v1273
        %v1275 = vmul.f32 %v1265, 1.442695
        %v1276 = vpow.pop %v1275
        %v1277 = vmul.f32 %v1266, 1.442695
        %v1278 = vpow.pop %v1277
        %v1279 = vmul.f32 %v1267, 1.442695
        %v1280 = vpow.pop %v1279
        %v1281 = vmul.f32 %v1268, 1.442695
        %v1282 = vpow.pop %v1281
        %v1283 = vmul.f32 %v1269, 1.442695
        %v1284 = vpow.pop %v1283
        %v1285 = vmul.f32 %v1270, 1.442695
        %v1286 = vpow.pop %v1285
        %v1287 = vadd.f32 %v1272, 1.0
        %v1288 = vadd.f32 %v1274, 1.0
        %v1289 = vadd.f32 %v1276, 1.0
        %v1290 = vadd.f32 %v1278, 1.0
        %v1291 = vadd.f32 %v1280, 1.0
        %v1292 = vadd.f32 %v1282, 1.0
        %v1293 = vadd.f32 %v1284, 1.0
        %v1294 = vadd.f32 %v1286, 1.0
        %v1295 = vrcp.pop %v1287
        %v1296 = vrcp.pop %v1288
        %v1297 = vrcp.pop %v1289
        %v1298 = vrcp.pop %v1290
        %v1299 = vrcp.pop %v1291
        %v1300 = vrcp.pop %v1292
        %v1301 = vrcp.pop %v1293
        %v1302 = vrcp.pop %v1294
        %v1303 = vsub.f32 0.0, %v1225
        %v1304 = vsub.f32 0.0, %v1227
        %v1305 = vsub.f32 0.0, %v1229
        %v1306 = vsub.f32 0.0, %v1231
        %v1307 = vsub.f32 0.0, %v1235
        %v1308 = vsub.f32 0.0, %v1237
        %v1309 = vsub.f32 0.0, %v1239
        %v1310 = vsub.f32 0.0, %v1241
        %v1311 = vmul.f32 %v1303, 1.442695
        %v1312 = vpow.pop %v1311
        %v1313 = vmul.f32 %v1304, 1.442695
        %v1314 = vpow.pop %v1313
        %v1315 = vmul.f32 %v1305, 1.442695
        %v1316 = vpow.pop %v1315
        %v1317 = vmul.f32 %v1306, 1.442695
        %v1318 = vpow.pop %v1317
        %v1319 = vmul.f32 %v1307, 1.442695
        %v1320 = vpow.pop %v1319
        %v1321 = vmul.f32 %v1308, 1.442695
        %v1322 = vpow.pop %v1321
        %v1323 = vmul.f32 %v1309, 1.442695
        %v1324 = vpow.pop %v1323
        %v1325 = vmul.f32 %v1310, 1.442695
        %v1326 = vpow.pop %v1325
        %v1327 = vadd.f32 %v1312, 1.0
        %v1328 = vadd.f32 %v1314, 1.0
        %v1329 = vadd.f32 %v1316, 1.0
        %v1330 = vadd.f32 %v1318, 1.0
        %v1331 = vadd.f32 %v1320, 1.0
        %v1332 = vadd.f32 %v1322, 1.0
        %v1333 = vadd.f32 %v1324, 1.0
        %v1334 = vadd.f32 %v1326, 1.0
        %v1335 = vrcp.pop %v1327
        %v1336 = vrcp.pop %v1328
        %v1337 = vrcp.pop %v1329
        %v1338 = vrcp.pop %v1330
        %v1339 = vrcp.pop %v1331
        %v1340 = vrcp.pop %v1332
        %v1341 = vrcp.pop %v1333
        %v1342 = vrcp.pop %v1334
        %v1343 = vsub.f32 0.0, %v1245
        %v1344 = vsub.f32 0.0, %v1247
        %v1345 = vsub.f32 0.0, %v1249
        %v1346 = vsub.f32 0.0, %v1251
        %v1347 = vsub.f32 0.0, %v1255
        %v1348 = vsub.f32 0.0, %v1257
        %v1349 = vsub.f32 0.0, %v1259
        %v1350 = vsub.f32 0.0, %v1261
        %v1351 = vmul.f32 %v1343, 1.442695
        %v1352 = vpow.pop %v1351
        %v1353 = vmul.f32 %v1344, 1.442695
        %v1354 = vpow.pop %v1353
        %v1355 = vmul.f32 %v1345, 1.442695
        %v1356 = vpow.pop %v1355
        %v1357 = vmul.f32 %v1346, 1.442695
        %v1358 = vpow.pop %v1357
        %v1359 = vmul.f32 %v1347, 1.442695
        %v1360 = vpow.pop %v1359
        %v1361 = vmul.f32 %v1348, 1.442695
        %v1362 = vpow.pop %v1361
        %v1363 = vmul.f32 %v1349, 1.442695
        %v1364 = vpow.pop %v1363
        %v1365 = vmul.f32 %v1350, 1.442695
        %v1366 = vpow.pop %v1365
        %v1367 = vadd.f32 %v1352, 1.0
        %v1368 = vadd.f32 %v1354, 1.0
        %v1369 = vadd.f32 %v1356, 1.0
        %v1370 = vadd.f32 %v1358, 1.0
        %v1371 = vadd.f32 %v1360, 1.0
        %v1372 = vadd.f32 %v1362, 1.0
        %v1373 = vadd.f32 %v1364, 1.0
        %v1374 = vadd.f32 %v1366, 1.0
        %v1375 = vrcp.pop %v1367
        %v1376 = vrcp.pop %v1368
        %v1377 = vrcp.pop %v1369
        %v1378 = vrcp.pop %v1370
        %v1379 = vrcp.pop %v1371
        %v1380 = vrcp.pop %v1372
        %v1381 = vrcp.pop %v1373
        %v1382 = vrcp.pop %v1374
        %v1383 = vld [vmem:[%s363] sm:$0x3]
        %v1385 = vlaneseq
        %v1386 = vshrl.u32 %v1385, 7
        %v1387 = vsub.s32 0, %v1386
        %v1388 = vrot.slane %v1383, %v1387
        %v1389 = vlaneseq
        %v1390 = vshrl.u32 %v1389, 7
        %v1391 = vsub.s32 1, %v1390
        %v1392 = vrot.slane %v1383, %v1391
        %v1395 = vmul.f32 %v1165, %v1388
        %v1396 = vmul.f32 %v1167, %v1392
        %v1397 = vmul.f32 %v1169, %v1388
        %v1398 = vmul.f32 %v1171, %v1392
        %v1399 = vmul.f32 %v1175, %v1388
        %v1400 = vmul.f32 %v1177, %v1392
        %v1401 = vmul.f32 %v1179, %v1388
        %v1402 = vmul.f32 %v1181, %v1392
        %v1403 = vmul.f32 %v1185, %v1388
        %v1404 = vmul.f32 %v1187, %v1392
        %v1405 = vmul.f32 %v1189, %v1388
        %v1406 = vmul.f32 %v1191, %v1392
        %v1407 = vmul.f32 %v1195, %v1388
        %v1408 = vmul.f32 %v1197, %v1392
        %v1409 = vmul.f32 %v1199, %v1388
        %v1410 = vmul.f32 %v1201, %v1392
        %v1411 = vmul.f32 %v1395, %v1295
        %v1412 = vmul.f32 %v1396, %v1296
        %v1413 = vmul.f32 %v1397, %v1297
        %v1414 = vmul.f32 %v1398, %v1298
        %v1415 = vmul.f32 %v1399, %v1299
        %v1416 = vmul.f32 %v1400, %v1300
        %v1417 = vmul.f32 %v1401, %v1301
        %v1418 = vmul.f32 %v1402, %v1302
        %v1419 = vpack.c.bf16 %v1413, %v1411
        %v1420 = vpack.c.bf16 %v1414, %v1412
        %v1421 = vpack.c.bf16 %v1417, %v1415
        %v1422 = vpack.c.bf16 %v1418, %v1416
        %v1427 = vunpack.c.l.b16 %v1419
        %v1428 = vunpack.c.l.b16 %v1420
        %v1429 = vunpack.c.h.b16 %v1419
        %v1430 = vunpack.c.h.b16 %v1420
        %v1431 = vunpack.c.l.b16 %v1421
        %v1432 = vunpack.c.l.b16 %v1422
        %v1433 = vunpack.c.h.b16 %v1421
        %v1434 = vunpack.c.h.b16 %v1422
        %v1435 = vpack.c.b16 %v1428, %v1427
        %v1436 = vpack.c.b16 %v1430, %v1429
        %v1437 = vpack.c.b16 %v1432, %v1431
        %v1438 = vpack.c.b16 %v1434, %v1433
        %1443 = vst [vmem:[%s373] sm:$0xff] %v1435
        %1444 = vst [vmem:[%s373 + $0x8] sm:$0xff] %v1436
        %1445 = vst [vmem:[%s373 + $0x10] sm:$0xff] %v1437
        %1446 = vst [vmem:[%s373 + $0x18] sm:$0xff] %v1438
        %v1447 = vmul.f32 %v1403, %v1335
        %v1448 = vmul.f32 %v1404, %v1336
        %v1449 = vmul.f32 %v1405, %v1337
        %v1450 = vmul.f32 %v1406, %v1338
        %v1451 = vmul.f32 %v1407, %v1339
        %v1452 = vmul.f32 %v1408, %v1340
        %v1453 = vmul.f32 %v1409, %v1341
        %v1454 = vmul.f32 %v1410, %v1342
        %v1455 = vpack.c.bf16 %v1449, %v1447
        %v1456 = vpack.c.bf16 %v1450, %v1448
        %v1457 = vpack.c.bf16 %v1453, %v1451
        %v1458 = vpack.c.bf16 %v1454, %v1452
        %v1463 = vunpack.c.l.b16 %v1455
        %v1464 = vunpack.c.l.b16 %v1456
        %v1465 = vunpack.c.h.b16 %v1455
        %v1466 = vunpack.c.h.b16 %v1456
        %v1467 = vunpack.c.l.b16 %v1457
        %v1468 = vunpack.c.l.b16 %v1458
        %v1469 = vunpack.c.h.b16 %v1457
        %v1470 = vunpack.c.h.b16 %v1458
        %v1471 = vpack.c.b16 %v1464, %v1463
        %v1472 = vpack.c.b16 %v1466, %v1465
        %v1473 = vpack.c.b16 %v1468, %v1467
        %v1474 = vpack.c.b16 %v1470, %v1469
        %1479 = vst [vmem:[%s383] sm:$0xff] %v1471
        %1480 = vst [vmem:[%s383 + $0x8] sm:$0xff] %v1472
        %1481 = vst [vmem:[%s383 + $0x10] sm:$0xff] %v1473
        %1482 = vst [vmem:[%s383 + $0x18] sm:$0xff] %v1474
        %1483 = vst [vmem:[%s393] sm:$0xff] %v1375
        %1484 = vst [vmem:[%s393 + $0x8] sm:$0xff] %v1376
        %1485 = vst [vmem:[%s393 + $0x10] sm:$0xff] %v1377
        %1486 = vst [vmem:[%s393 + $0x18] sm:$0xff] %v1378
        %1487 = vst [vmem:[%s393 + $0x20] sm:$0xff] %v1379
        %1488 = vst [vmem:[%s393 + $0x28] sm:$0xff] %v1380
        %1489 = vst [vmem:[%s393 + $0x30] sm:$0xff] %v1381
        %1490 = vst [vmem:[%s393 + $0x38] sm:$0xff] %v1382
        %s1491 = smul.u32 2, %s27
        %p1492 = scmp.lt.s32.totalorder %s26, 1
        %s1493 = scalar_select %p1492, %s26, 1
        %p1494 = scmp.lt.s32.totalorder %s1491, 1
        %s1495 = scalar_select %p1494, %s1491, 1
        %s1496 = smul.addr %s1493, 8
        %s1497 = sadd.s32 %s1495, %s1496
        %s1498 = smul.addr %s1497, 4
        %s1499 = scalar_lea.vmem %s4, %s1498
        %s1500 = smul.u32 2, %s27
        %p1501 = scmp.lt.s32.totalorder %s26, 1
        %s1502 = scalar_select %p1501, %s26, 1
        %p1503 = scmp.lt.s32.totalorder %s1500, 1
        %s1504 = scalar_select %p1503, %s1500, 1
        %s1505 = smul.addr %s1502, 8
        %s1506 = sadd.s32 %s1504, %s1505
        %s1507 = smul.addr %s1506, 4
        %s1508 = scalar_lea.vmem %s5, %s1507
        %s1509 = smul.u32 2, %s27
        %p1510 = scmp.lt.s32.totalorder %s26, 1
        %s1511 = scalar_select %p1510, %s26, 1
        %p1512 = scmp.lt.s32.totalorder %s1509, 1
        %s1513 = scalar_select %p1512, %s1509, 1
        %s1514 = smul.addr %s1511, 8
        %s1515 = sadd.s32 %s1513, %s1514
        %s1516 = smul.addr %s1515, 8
        %s1517 = scalar_lea.vmem %s6, %s1516
        // Predicated region
        $region45: #{_lambda_.3} parent=35 // pred_check
          %p1518 = pneg %p152
        $region46: #{_lambda_.3} parent=35 // pred_check_branch
          %1520 = sbr.rel (%p1518) target = $region48
        $region47: #{_lambda_.3} parent=35 // pred_region
          %s1521 = smul.u32 2, %s27
        $region48: #{_lambda_.3} parent=35 // pred_fallthru
          _
        // Predicated region
        $region49: #{_lambda_.3} parent=35 // pred_check
          %p1522 = pneg %p180
        $region50: #{_lambda_.3} parent=35 // pred_check_branch
          %1524 = sbr.rel (%p1522) target = $region52
        $region51: #{_lambda_.3} parent=35 // pred_region
          %s1525 = smul.u32 2, %s27
        $region52: #{_lambda_.3} parent=35 // pred_fallthru
          _
        // Predicated region
        $region53: #{_lambda_.3} parent=35 // pred_check
          %p1526 = pneg %p208
        $region54: #{_lambda_.3} parent=35 // pred_check_branch
          %1528 = sbr.rel (%p1526) target = $region56
        $region55: #{_lambda_.3} parent=35 // pred_region
          %s1529 = smul.u32 2, %s27
        $region56: #{_lambda_.3} parent=35 // pred_fallthru
          _
      $region36: #{_lambda_.3} parent=5 // pred_fallthru
        _
      %p1530 = scmp.le.s32.totalorder 2, %s17
      // Predicated region
      $region57: #{_lambda_.3} parent=5 // pred_check
        %p1531 = pneg %p1530
      $region58: #{_lambda_.3} parent=5 // pred_check_branch
        %1533 = sbr.rel (%p1531) target = $region60
      $region59: #{_lambda_.3} parent=5 // pred_region
        %s1534 = ssub.s32 %s17, 2
        // Predicated region
        $region61: #{_lambda_.3} parent=59 // pred_check
          %p1535 = pneg %p158
        $region62: #{_lambda_.3} parent=59 // pred_check_branch
          %1537 = sbr.rel (%p1535) target = $region64
        $region63: #{_lambda_.3} parent=59 // pred_region
          %s1538 = smul.u32 2, %s29
          %p1539 = scmp.lt.s32.totalorder %s28, 1
          %s1540 = scalar_select %p1539, %s28, 1
          %p1541 = scmp.lt.s32.totalorder %s1538, 1
          %s1542 = scalar_select %p1541, %s1538, 1
          %s1543 = smul.addr %s1540, 8
          %s1544 = sadd.s32 %s1542, %s1543
          %s1545 = smul.addr %s1544, 4
          %s1546 = scalar_lea.vmem %s4, %s1545
        $region64: #{_lambda_.3} parent=59 // pred_fallthru
          _
        // Predicated region
        $region65: #{_lambda_.3} parent=59 // pred_check
          %p1547 = pneg %p186
        $region66: #{_lambda_.3} parent=59 // pred_check_branch
          %1549 = sbr.rel (%p1547) target = $region68
        $region67: #{_lambda_.3} parent=59 // pred_region
          %s1550 = smul.u32 2, %s29
          %p1551 = scmp.lt.s32.totalorder %s28, 1
          %s1552 = scalar_select %p1551, %s28, 1
          %p1553 = scmp.lt.s32.totalorder %s1550, 1
          %s1554 = scalar_select %p1553, %s1550, 1
          %s1555 = smul.addr %s1552, 8
          %s1556 = sadd.s32 %s1554, %s1555
          %s1557 = smul.addr %s1556, 4
          %s1558 = scalar_lea.vmem %s5, %s1557
        $region68: #{_lambda_.3} parent=59 // pred_fallthru
          _
        // Predicated region
        $region69: #{_lambda_.3} parent=59 // pred_check
          %p1559 = pneg %p214
        $region70: #{_lambda_.3} parent=59 // pred_check_branch
          %1561 = sbr.rel (%p1559) target = $region72
        $region71: #{_lambda_.3} parent=59 // pred_region
          %s1562 = smul.u32 2, %s29
          %p1563 = scmp.lt.s32.totalorder %s28, 1
          %s1564 = scalar_select %p1563, %s28, 1
          %p1565 = scmp.lt.s32.totalorder %s1562, 1
          %s1566 = scalar_select %p1565, %s1562, 1
          %s1567 = smul.addr %s1564, 8
          %s1568 = sadd.s32 %s1566, %s1567
          %s1569 = smul.addr %s1568, 8
          %s1570 = scalar_lea.vmem %s6, %s1569
        $region72: #{_lambda_.3} parent=59 // pred_fallthru
          _
      $region60: #{_lambda_.3} parent=5 // pred_fallthru
        _
    $region6: #{_lambda_.3} parent=1 // loop_footer
      %s21 = sadd.s32 1, %s17
    $region7: #{_lambda_.3} parent=1 // loop_footer_branch
      %16 = sbr.rel target = $region3
    $region8: #{_lambda_.3} parent=1 // loop_exit
      _
    %1571 = vsyncpa [#allocation3], 1
    %s1572 = scalar_lea.sflag [#allocation3], 1
    %1573 = vsyncpa %s1572, 1
    %1574 = vsyncpa [#allocation5], 1

// kernel: _lambda_.4
$region0: #{_lambda_.4}
  #allocation0 [shape = 'u32[]', space=smem, size = 0x4, offset = 0x4, fixed_abs, tag = 'smem constant byte address 0x4 - core index']
  #allocation1 [shape = 'u32[144,128]{1,0:T(1,128)}', space=vmem, size = 0x12000, scoped, tag = 'internal scratch']
  %s0 = inlined_call_operand.vmem [shape: bf16[2,32,16,16], index: 0, kind: input, shape index: {}]
  %s1 = inlined_call_operand.vmem [shape: bf16[2,32,16,16], index: 1, kind: input, shape index: {}]
  %s2 = inlined_call_operand.vmem [shape: f32[2,32,16,16], index: 2, kind: output, shape index: {}]
  %s3 = sld [smem:[#allocation0]]
  $region41: #{_lambda_.4} parent=0
    _
  %s5 = ssub.s32 1, %s3
  %s6 = scalar_select 0, %s5, %s3
  loop: start=0, step=1, limit=6
  $region2: #{_lambda_.4} parent=0 // loop_pre_header
    _
  $region3: #{_lambda_.4} parent=0 // loop_header
    %s8 = sphi 0, %s12
    %p9 = scmp.ge.s32.totalorder %s8, 6
    %s15 = sphi 0, %s27
    %s16 = sphi 0, %s23
    %s17 = sphi 0, %s15
    %s18 = sphi 0, %s16
    %s19 = sphi 0, %s17
    %s20 = sphi 0, %s18
    %s32 = sphi 0, %s34
    %s35 = sphi 0, %s32
    %s36 = sphi 0, %s35
    %s52 = sphi 0, %s36
    %s60 = sphi 0, %s62
    %s63 = sphi 0, %s60
    %s64 = sphi 0, %s63
    %s80 = sphi 0, %s64
    %s88 = sphi 0, %s90
    %s91 = sphi 0, %s88
    %s92 = sphi 0, %s91
    %s108 = sphi 0, %s92
  $region4: #{_lambda_.4} parent=0 // loop_header_branch
    %11 = sbr.rel (%p9) target = $region8
  $region5: #{_lambda_.4} parent=0 // loop_body
    %s13 = ssub.s32 %s8, 1
    %s14 = ssub.s32 %s8, 2
    %s21 = sadd.s32 1, %s16
    %p22 = scmp.ge.s32.totalorder %s21, 2
    %s23 = scalar_select %p22, 0, %s21
    %s24 = sadd.s32 1, %s15
    %s25 = scalar_select %p22, %s24, %s15
    %p26 = scmp.ge.s32.totalorder %s25, 2
    %s27 = scalar_select %p26, 0, %s25
    %s28 = ssub.s32 %s15, %s27
    %s29 = ssub.s32 %s16, %s23
    %s30 = sor.u32 %s28, %s29
    %p31 = scmp.eq.s32.totalorder %s30, 0
    %s33 = sadd.s32 %s32, 1
    %s34 = scalar_select %p31, %s32, %s33
    %p37 = pneg %p31
    %p38 = scmp.eq.s32.totalorder %s8, 3
    %p39 = por %p37, %p38
    %p40 = scmp.ne.s32.totalorder %s32, %s35
    %p41 = scmp.eq.s32.totalorder %s8, 0
    %p42 = por %p40, %p41
    %p43 = scmp.ne.s32.totalorder %s32, %s35
    %p44 = scmp.eq.s32.totalorder %s13, 3
    %p45 = por %p43, %p44
    %p46 = scmp.ne.s32.totalorder %s35, %s36
    %p47 = scmp.eq.s32.totalorder %s13, 0
    %p48 = por %p46, %p47
    %p49 = scmp.ne.s32.totalorder %s35, %s36
    %p50 = scmp.eq.s32.totalorder %s14, 3
    %p51 = por %p49, %p50
    %p53 = scmp.ne.s32.totalorder %s36, %s52
    %p54 = scmp.eq.s32.totalorder %s14, 0
    %p55 = por %p53, %p54
    %s56 = ssub.s32 %s15, %s27
    %s57 = ssub.s32 %s16, %s23
    %s58 = sor.u32 %s56, %s57
    %p59 = scmp.eq.s32.totalorder %s58, 0
    %s61 = sadd.s32 %s60, 1
    %s62 = scalar_select %p59, %s60, %s61
    %p65 = pneg %p59
    %p66 = scmp.eq.s32.totalorder %s8, 3
    %p67 = por %p65, %p66
    %p68 = scmp.ne.s32.totalorder %s60, %s63
    %p69 = scmp.eq.s32.totalorder %s8, 0
    %p70 = por %p68, %p69
    %p71 = scmp.ne.s32.totalorder %s60, %s63
    %p72 = scmp.eq.s32.totalorder %s13, 3
    %p73 = por %p71, %p72
    %p74 = scmp.ne.s32.totalorder %s63, %s64
    %p75 = scmp.eq.s32.totalorder %s13, 0
    %p76 = por %p74, %p75
    %p77 = scmp.ne.s32.totalorder %s63, %s64
    %p78 = scmp.eq.s32.totalorder %s14, 3
    %p79 = por %p77, %p78
    %p81 = scmp.ne.s32.totalorder %s64, %s80
    %p82 = scmp.eq.s32.totalorder %s14, 0
    %p83 = por %p81, %p82
    %s84 = ssub.s32 %s15, %s27
    %s85 = ssub.s32 %s16, %s23
    %s86 = sor.u32 %s84, %s85
    %p87 = scmp.eq.s32.totalorder %s86, 0
    %s89 = sadd.s32 %s88, 1
    %s90 = scalar_select %p87, %s88, %s89
    %p93 = pneg %p87
    %p94 = scmp.eq.s32.totalorder %s8, 3
    %p95 = por %p93, %p94
    %p96 = scmp.ne.s32.totalorder %s88, %s91
    %p97 = scmp.eq.s32.totalorder %s8, 0
    %p98 = por %p96, %p97
    %p99 = scmp.ne.s32.totalorder %s88, %s91
    %p100 = scmp.eq.s32.totalorder %s13, 3
    %p101 = por %p99, %p100
    %p102 = scmp.ne.s32.totalorder %s91, %s92
    %p103 = scmp.eq.s32.totalorder %s13, 0
    %p104 = por %p102, %p103
    %p105 = scmp.ne.s32.totalorder %s91, %s92
    %p106 = scmp.eq.s32.totalorder %s14, 3
    %p107 = por %p105, %p106
    %p109 = scmp.ne.s32.totalorder %s92, %s108
    %p110 = scmp.eq.s32.totalorder %s14, 0
    %p111 = por %p109, %p110
    %p112 = scmp.le.s32.totalorder 1, %s8
    %p113 = scmp.lt.s32.totalorder %s8, 5
    %p114 = pnand %p112, %p113
    %p115 = pneg %p114
    // Predicated region
    $region9: #{_lambda_.4} parent=5 // pred_check
      _
    $region10: #{_lambda_.4} parent=5 // pred_check_branch
      %117 = sbr.rel (%p114) target = $region12
    $region11: #{_lambda_.4} parent=5 // pred_region
      %s118 = ssub.s32 %s8, 1
    $region12: #{_lambda_.4} parent=5 // pred_fallthru
      _
    %p119 = scmp.lt.s32.totalorder %s8, 4
    // Predicated region
    $region13: #{_lambda_.4} parent=5 // pred_check
      %p120 = pneg %p119
    $region14: #{_lambda_.4} parent=5 // pred_check_branch
      %122 = sbr.rel (%p120) target = $region16
    $region15: #{_lambda_.4} parent=5 // pred_region
      // Predicated region
      $region17: #{_lambda_.4} parent=15 // pred_check
        %p123 = pneg %p42
      $region18: #{_lambda_.4} parent=15 // pred_check_branch
        %125 = sbr.rel (%p123) target = $region20
      $region19: #{_lambda_.4} parent=15 // pred_region
        %s126 = smul.u32 16, %s16
        %p127 = scmp.lt.s32.totalorder %s15, 1
        %s128 = scalar_select %p127, %s15, 1
        %p129 = scmp.lt.s32.totalorder %s126, 31
        %s130 = scalar_select %p129, %s126, 31
        %s131 = smul.addr %s130, 2
        %s132 = smul.addr %s128, 64
        %s133 = sadd.s32 %s131, %s132
        %s134 = smul.addr %s133, 4
        %s135 = scalar_lea.vmem %s0, %s134
        %s136 = smul.u32 16, %s16
      $region20: #{_lambda_.4} parent=15 // pred_fallthru
        _
      // Predicated region
      $region21: #{_lambda_.4} parent=15 // pred_check
        %p137 = pneg %p70
      $region22: #{_lambda_.4} parent=15 // pred_check_branch
        %139 = sbr.rel (%p137) target = $region24
      $region23: #{_lambda_.4} parent=15 // pred_region
        %s140 = smul.u32 16, %s16
        %p141 = scmp.lt.s32.totalorder %s15, 1
        %s142 = scalar_select %p141, %s15, 1
        %p143 = scmp.lt.s32.totalorder %s140, 31
        %s144 = scalar_select %p143, %s140, 31
        %s145 = smul.addr %s144, 2
        %s146 = smul.addr %s142, 64
        %s147 = sadd.s32 %s145, %s146
        %s148 = smul.addr %s147, 4
        %s149 = scalar_lea.vmem %s1, %s148
        %s150 = smul.u32 16, %s16
      $region24: #{_lambda_.4} parent=15 // pred_fallthru
        _
    $region16: #{_lambda_.4} parent=5 // pred_fallthru
      _
    %p151 = scmp.le.s32.totalorder 1, %s8
    %p152 = scmp.lt.s32.totalorder %s8, 5
    %p153 = pnand %p151, %p152
    %p154 = pneg %p153
    // Predicated region
    $region25: #{_lambda_.4} parent=5 // pred_check
      _
    $region26: #{_lambda_.4} parent=5 // pred_check_branch
      %156 = sbr.rel (%p153) target = $region28
    $region27: #{_lambda_.4} parent=5 // pred_region
      %s157 = ssub.s32 %s8, 1
      %s158 = smul.u32 16, %s18
      %p159 = scmp.lt.s32.totalorder %s17, 1
      %s160 = scalar_select %p159, %s17, 1
      %p161 = scmp.lt.s32.totalorder %s158, 31
      %s162 = scalar_select %p161, %s158, 31
      %s163 = smul.addr %s162, 2
      %s164 = smul.addr %s160, 64
      %s165 = sadd.s32 %s163, %s164
      %s166 = smul.addr %s165, 4
      %s167 = scalar_lea.vmem %s0, %s166
      %p168 = pneg %p48
      %p169 = pneg %p45
      %s170 = smul.u32 16, %s18
      %p171 = scmp.lt.s32.totalorder %s17, 1
      %s172 = scalar_select %p171, %s17, 1
      %p173 = scmp.lt.s32.totalorder %s170, 31
      %s174 = scalar_select %p173, %s170, 31
      %s175 = smul.addr %s174, 2
      %s176 = smul.addr %s172, 64
      %s177 = sadd.s32 %s175, %s176
      %s178 = smul.addr %s177, 4
      %s179 = scalar_lea.vmem %s1, %s178
      %p180 = pneg %p76
      %p181 = pneg %p73
      %p182 = pneg %p104
      %p183 = pneg %p101
      %s184 = smul.u32 16, %s18
      %p185 = scmp.lt.s32.totalorder %s17, 1
      %s186 = scalar_select %p185, %s17, 1
      %p187 = scmp.lt.s32.totalorder %s184, 31
      %s188 = scalar_select %p187, %s184, 31
      %s189 = smul.addr %s188, 2
      %s190 = smul.addr %s186, 64
      %s191 = sadd.s32 %s189, %s190
      %s192 = smul.addr %s191, 8
      %s193 = scalar_lea.vmem %s2, %s192
      %s194 = smul.u32 16, %s18
      %p195 = scmp.lt.s32.totalorder %s17, 1
      %s196 = scalar_select %p195, %s17, 1
      %p197 = scmp.lt.s32.totalorder %s194, 31
      %s198 = scalar_select %p197, %s194, 31
      %s199 = smul.addr %s198, 2
      %s200 = smul.addr %s196, 64
      %s201 = sadd.s32 %s199, %s200
      %s202 = smul.addr %s201, 4
      %s203 = scalar_lea.vmem %s0, %s202
      %s204 = smul.u32 16, %s18
      %s205 = smul.u32 16, %s18
      %p206 = scmp.lt.s32.totalorder %s17, 1
      %s207 = scalar_select %p206, %s17, 1
      %p208 = scmp.lt.s32.totalorder %s205, 31
      %s209 = scalar_select %p208, %s205, 31
      %s210 = smul.addr %s209, 2
      %s211 = smul.addr %s207, 64
      %s212 = sadd.s32 %s210, %s211
      %s213 = smul.addr %s212, 4
      %s214 = scalar_lea.vmem %s1, %s213
      %s215 = smul.u32 16, %s18
      %s216 = smul.u32 16, %s18
      %p217 = scmp.lt.s32.totalorder %s17, 1
      %s218 = scalar_select %p217, %s17, 1
      %p219 = scmp.lt.s32.totalorder %s216, 31
      %s220 = scalar_select %p219, %s216, 31
      %s221 = smul.addr %s220, 2
      %s222 = smul.addr %s218, 64
      %s223 = sadd.s32 %s221, %s222
      %s224 = smul.addr %s223, 8
      %s225 = scalar_lea.vmem %s2, %s224
      %s226 = smul.u32 16, %s18
      %v228 = vld [vmem:[%s214] sm:$0xf]
      %v229 = vld [vmem:[%s214 + $0x4] sm:$0xf]
      %v230 = vld [vmem:[%s214 + $0x8] sm:$0xf]
      %v231 = vld [vmem:[%s214 + $0xc] sm:$0xf]
      %v232 = vld [vmem:[%s214 + $0x10] sm:$0xf]
      %v233 = vld [vmem:[%s214 + $0x14] sm:$0xf]
      %v234 = vld [vmem:[%s214 + $0x18] sm:$0xf]
      %v235 = vld [vmem:[%s214 + $0x1c] sm:$0xf]
      %v236 = vld [vmem:[%s214 + $0x20] sm:$0xf]
      %v237 = vld [vmem:[%s214 + $0x24] sm:$0xf]
      %v238 = vld [vmem:[%s214 + $0x28] sm:$0xf]
      %v239 = vld [vmem:[%s214 + $0x2c] sm:$0xf]
      %v240 = vld [vmem:[%s214 + $0x30] sm:$0xf]
      %v241 = vld [vmem:[%s214 + $0x34] sm:$0xf]
      %v242 = vld [vmem:[%s214 + $0x38] sm:$0xf]
      %v243 = vld [vmem:[%s214 + $0x3c] sm:$0xf]
      %v244 = vld [vmem:[%s214 + $0x40] sm:$0xf]
      %v245 = vld [vmem:[%s214 + $0x44] sm:$0xf]
      %v246 = vld [vmem:[%s214 + $0x48] sm:$0xf]
      %v247 = vld [vmem:[%s214 + $0x4c] sm:$0xf]
      %v248 = vld [vmem:[%s214 + $0x50] sm:$0xf]
      %v249 = vld [vmem:[%s214 + $0x54] sm:$0xf]
      %v250 = vld [vmem:[%s214 + $0x58] sm:$0xf]
      %v251 = vld [vmem:[%s214 + $0x5c] sm:$0xf]
      %v252 = vld [vmem:[%s214 + $0x60] sm:$0xf]
      %v253 = vld [vmem:[%s214 + $0x64] sm:$0xf]
      %v254 = vld [vmem:[%s214 + $0x68] sm:$0xf]
      %v255 = vld [vmem:[%s214 + $0x6c] sm:$0xf]
      %v256 = vld [vmem:[%s214 + $0x70] sm:$0xf]
      %v257 = vld [vmem:[%s214 + $0x74] sm:$0xf]
      %v258 = vld [vmem:[%s214 + $0x78] sm:$0xf]
      %v259 = vld [vmem:[%s214 + $0x7c] sm:$0xf]
      %v260 = vld [vmem:[%s203] sm:$0xf]
      %v261 = vld [vmem:[%s203 + $0x4] sm:$0xf]
      %v262 = vld [vmem:[%s203 + $0x8] sm:$0xf]
      %v263 = vld [vmem:[%s203 + $0xc] sm:$0xf]
      %v264 = vld [vmem:[%s203 + $0x10] sm:$0xf]
      %v265 = vld [vmem:[%s203 + $0x14] sm:$0xf]
      %v266 = vld [vmem:[%s203 + $0x18] sm:$0xf]
      %v267 = vld [vmem:[%s203 + $0x1c] sm:$0xf]
      %v268 = vld [vmem:[%s203 + $0x20] sm:$0xf]
      %v269 = vld [vmem:[%s203 + $0x24] sm:$0xf]
      %v270 = vld [vmem:[%s203 + $0x28] sm:$0xf]
      %v271 = vld [vmem:[%s203 + $0x2c] sm:$0xf]
      %v272 = vld [vmem:[%s203 + $0x30] sm:$0xf]
      %v273 = vld [vmem:[%s203 + $0x34] sm:$0xf]
      %v274 = vld [vmem:[%s203 + $0x38] sm:$0xf]
      %v275 = vld [vmem:[%s203 + $0x3c] sm:$0xf]
      %v276 = vld [vmem:[%s203 + $0x40] sm:$0xf]
      %v277 = vld [vmem:[%s203 + $0x44] sm:$0xf]
      %v278 = vld [vmem:[%s203 + $0x48] sm:$0xf]
      %v279 = vld [vmem:[%s203 + $0x4c] sm:$0xf]
      %v280 = vld [vmem:[%s203 + $0x50] sm:$0xf]
      %v281 = vld [vmem:[%s203 + $0x54] sm:$0xf]
      %v282 = vld [vmem:[%s203 + $0x58] sm:$0xf]
      %v283 = vld [vmem:[%s203 + $0x5c] sm:$0xf]
      %v284 = vld [vmem:[%s203 + $0x60] sm:$0xf]
      %v285 = vld [vmem:[%s203 + $0x64] sm:$0xf]
      %v286 = vld [vmem:[%s203 + $0x68] sm:$0xf]
      %v287 = vld [vmem:[%s203 + $0x6c] sm:$0xf]
      %v288 = vld [vmem:[%s203 + $0x70] sm:$0xf]
      %v289 = vld [vmem:[%s203 + $0x74] sm:$0xf]
      %v290 = vld [vmem:[%s203 + $0x78] sm:$0xf]
      %v291 = vld [vmem:[%s203 + $0x7c] sm:$0xf]
      %v294 = vunpack.c.l.b16 %v228
      %v295 = vunpack.c.l.b16 %v229
      %v296 = vpack.c.b16 %v295, %v294
      %298 = vxpose.xlu0.c.b16.start [1/8] %v296, 128
      %299 = vxpose.xlu0.c.b16.cont [2/8] 0, 128
      %300 = vxpose.xlu0.c.b16.cont [3/8] 0, 128
      %301 = vxpose.xlu0.c.b16.cont [4/8] 0, 128
      %302 = vxpose.xlu0.c.b16.cont [5/8] 0, 128
      %303 = vxpose.xlu0.c.b16.cont [6/8] 0, 128
      %304 = vxpose.xlu0.c.b16.cont [7/8] 0, 128
      %305 = vxpose.xlu0.c.b16.end [8/8] 0, 128
      %v306 = vpop.trf.xlu0
      %v307 = vpop.trf.xlu0
      %v308 = vpop.trf.xlu0
      %v309 = vpop.trf.xlu0
      %v310 = vpop.trf.xlu0
      %v311 = vpop.trf.xlu0
      %v312 = vpop.trf.xlu0
      %v313 = vpop.trf.xlu0
      %v316 = vunpack.c.l.b16 %v260
      %v317 = vunpack.c.l.b16 %v261
      %v318 = vpack.c.b16 %v317, %v316
      %vm320 = vcmask 130048
      %v322 = vsel %vm320, %v306, 0
      %324 = vmatprep.subr.bf16.mxu0 0
      %325 = vmatpush1.bf16.msra.mxu0 %v318
      %326 = vmatprep.subr.bf16.mxu0 0
      %327 = vmatpush1.bf16.msra.mxu0 0
      %328 = vmatprep.subr.bf16.mxu0 0
      %329 = vmatpush1.bf16.msra.mxu0 0
      %330 = vmatprep.subr.bf16.mxu0 0
      %331 = vmatpush1.bf16.msra.mxu0 0
      %332 = vmatprep.subr.bf16.mxu0 0
      %333 = vmatpush1.bf16.msra.mxu0 0
      %334 = vmatprep.subr.bf16.mxu0 0
      %335 = vmatpush1.bf16.msra.mxu0 0
      %336 = vmatprep.subr.bf16.mxu0 0
      %337 = vmatpush1.bf16.msra.mxu0 0
      %338 = vmatprep.subr.bf16.mxu0 0
      %339 = vmatpush1.bf16.msra.mxu0 0
      %340 = vmatprep.subr.bf16.mxu0 0
      %341 = vmatpush1.bf16.msra.mxu0 0
      %342 = vmatprep.subr.bf16.mxu0 0
      %343 = vmatpush1.bf16.msra.mxu0 0
      %344 = vmatprep.subr.bf16.mxu0 0
      %345 = vmatpush1.bf16.msra.mxu0 0
      %346 = vmatprep.subr.bf16.mxu0 0
      %347 = vmatpush1.bf16.msra.mxu0 0
      %348 = vmatprep.subr.bf16.mxu0 0
      %349 = vmatpush1.bf16.msra.mxu0 0
      %350 = vmatprep.subr.bf16.mxu0 0
      %351 = vmatpush1.bf16.msra.mxu0 0
      %352 = vmatprep.subr.bf16.mxu0 0
      %353 = vmatpush1.bf16.msra.mxu0 0
      %354 = vmatprep.subr.bf16.mxu0 0
      %355 = vmatpush1.bf16.msra.mxu0 0
      %356 = vmatprep.mubr.bf16.mxu0 0
      %357 = vmatmul.mubr.bf16.gmra.mrb[0].mxu0 %v322
      %v358 = vpop.f32.mrb[0].mxu0
      %v359 = vadd.f32 0.0, %v358
      %v360 = vpop.f32.mrb[0].mxu0
      %v361 = vpop.f32.mrb[0].mxu0
      %v362 = vadd.f32 0.0, %v361
      %v363 = vpop.f32.mrb[0].mxu0
      %364 = vdwg.mxu0
      %v367 = vunpack.c.l.b16 %v230
      %v368 = vunpack.c.l.b16 %v231
      %v369 = vpack.c.b16 %v368, %v367
      %371 = vxpose.xlu0.c.b16.start [1/8] %v369, 128
      %372 = vxpose.xlu0.c.b16.cont [2/8] 0, 128
      %373 = vxpose.xlu0.c.b16.cont [3/8] 0, 128
      %374 = vxpose.xlu0.c.b16.cont [4/8] 0, 128
      %375 = vxpose.xlu0.c.b16.cont [5/8] 0, 128
      %376 = vxpose.xlu0.c.b16.cont [6/8] 0, 128
      %377 = vxpose.xlu0.c.b16.cont [7/8] 0, 128
      %378 = vxpose.xlu0.c.b16.end [8/8] 0, 128
      %v379 = vpop.trf.xlu0
      %v380 = vpop.trf.xlu0
      %v381 = vpop.trf.xlu0
      %v382 = vpop.trf.xlu0
      %v383 = vpop.trf.xlu0
      %v384 = vpop.trf.xlu0
      %v385 = vpop.trf.xlu0
      %v386 = vpop.trf.xlu0
      %v389 = vunpack.c.l.b16 %v262
      %v390 = vunpack.c.l.b16 %v263
      %v391 = vpack.c.b16 %v390, %v389
      %v394 = vsel %vm320, %v379, 0
      %396 = vmatprep.subr.bf16.mxu0 0
      %397 = vmatpush1.bf16.msra.mxu0 %v391
      %398 = vmatprep.subr.bf16.mxu0 0
      %399 = vmatpush1.bf16.msra.mxu0 0
      %400 = vmatprep.subr.bf16.mxu0 0
      %401 = vmatpush1.bf16.msra.mxu0 0
      %402 = vmatprep.subr.bf16.mxu0 0
      %403 = vmatpush1.bf16.msra.mxu0 0
      %404 = vmatprep.subr.bf16.mxu0 0
      %405 = vmatpush1.bf16.msra.mxu0 0
      %406 = vmatprep.subr.bf16.mxu0 0
      %407 = vmatpush1.bf16.msra.mxu0 0
      %408 = vmatprep.subr.bf16.mxu0 0
      %409 = vmatpush1.bf16.msra.mxu0 0
      %410 = vmatprep.subr.bf16.mxu0 0
      %411 = vmatpush1.bf16.msra.mxu0 0
      %412 = vmatprep.subr.bf16.mxu0 0
      %413 = vmatpush1.bf16.msra.mxu0 0
      %414 = vmatprep.subr.bf16.mxu0 0
      %415 = vmatpush1.bf16.msra.mxu0 0
      %416 = vmatprep.subr.bf16.mxu0 0
      %417 = vmatpush1.bf16.msra.mxu0 0
      %418 = vmatprep.subr.bf16.mxu0 0
      %419 = vmatpush1.bf16.msra.mxu0 0
      %420 = vmatprep.subr.bf16.mxu0 0
      %421 = vmatpush1.bf16.msra.mxu0 0
      %422 = vmatprep.subr.bf16.mxu0 0
      %423 = vmatpush1.bf16.msra.mxu0 0
      %424 = vmatprep.subr.bf16.mxu0 0
      %425 = vmatpush1.bf16.msra.mxu0 0
      %426 = vmatprep.subr.bf16.mxu0 0
      %427 = vmatpush1.bf16.msra.mxu0 0
      %428 = vmatprep.mubr.bf16.mxu0 0
      %429 = vmatmul.mubr.bf16.gmra.mrb[0].mxu0 %v394
      %v430 = vpop.f32.mrb[0].mxu0
      %v431 = vadd.f32 0.0, %v430
      %v432 = vpop.f32.mrb[0].mxu0
      %v433 = vpop.f32.mrb[0].mxu0
      %v434 = vadd.f32 0.0, %v433
      %v435 = vpop.f32.mrb[0].mxu0
      %436 = vdwg.mxu0
      %v439 = vunpack.c.l.b16 %v232
      %v440 = vunpack.c.l.b16 %v233
      %v441 = vpack.c.b16 %v440, %v439
      %443 = vxpose.xlu0.c.b16.start [1/8] %v441, 128
      %444 = vxpose.xlu0.c.b16.cont [2/8] 0, 128
      %445 = vxpose.xlu0.c.b16.cont [3/8] 0, 128
      %446 = vxpose.xlu0.c.b16.cont [4/8] 0, 128
      %447 = vxpose.xlu0.c.b16.cont [5/8] 0, 128
      %448 = vxpose.xlu0.c.b16.cont [6/8] 0, 128
      %449 = vxpose.xlu0.c.b16.cont [7/8] 0, 128
      %450 = vxpose.xlu0.c.b16.end [8/8] 0, 128
      %v451 = vpop.trf.xlu0
      %v452 = vpop.trf.xlu0
      %v453 = vpop.trf.xlu0
      %v454 = vpop.trf.xlu0
      %v455 = vpop.trf.xlu0
      %v456 = vpop.trf.xlu0
      %v457 = vpop.trf.xlu0
      %v458 = vpop.trf.xlu0
      %v461 = vunpack.c.l.b16 %v264
      %v462 = vunpack.c.l.b16 %v265
      %v463 = vpack.c.b16 %v462, %v461
      %v466 = vsel %vm320, %v451, 0
      %468 = vmatprep.subr.bf16.mxu0 0
      %469 = vmatpush1.bf16.msra.mxu0 %v463
      %470 = vmatprep.subr.bf16.mxu0 0
      %471 = vmatpush1.bf16.msra.mxu0 0
      %472 = vmatprep.subr.bf16.mxu0 0
      %473 = vmatpush1.bf16.msra.mxu0 0
      %474 = vmatprep.subr.bf16.mxu0 0
      %475 = vmatpush1.bf16.msra.mxu0 0
      %476 = vmatprep.subr.bf16.mxu0 0
      %477 = vmatpush1.bf16.msra.mxu0 0
      %478 = vmatprep.subr.bf16.mxu0 0
      %479 = vmatpush1.bf16.msra.mxu0 0
      %480 = vmatprep.subr.bf16.mxu0 0
      %481 = vmatpush1.bf16.msra.mxu0 0
      %482 = vmatprep.subr.bf16.mxu0 0
      %483 = vmatpush1.bf16.msra.mxu0 0
      %484 = vmatprep.subr.bf16.mxu0 0
      %485 = vmatpush1.bf16.msra.mxu0 0
      %486 = vmatprep.subr.bf16.mxu0 0
      %487 = vmatpush1.bf16.msra.mxu0 0
      %488 = vmatprep.subr.bf16.mxu0 0
      %489 = vmatpush1.bf16.msra.mxu0 0
      %490 = vmatprep.subr.bf16.mxu0 0
      %491 = vmatpush1.bf16.msra.mxu0 0
      %492 = vmatprep.subr.bf16.mxu0 0
      %493 = vmatpush1.bf16.msra.mxu0 0
      %494 = vmatprep.subr.bf16.mxu0 0
      %495 = vmatpush1.bf16.msra.mxu0 0
      %496 = vmatprep.subr.bf16.mxu0 0
      %497 = vmatpush1.bf16.msra.mxu0 0
      %498 = vmatprep.subr.bf16.mxu0 0
      %499 = vmatpush1.bf16.msra.mxu0 0
      %500 = vmatprep.mubr.bf16.mxu0 0
      %501 = vmatmul.mubr.bf16.gmra.mrb[0].mxu0 %v466
      %v502 = vpop.f32.mrb[0].mxu0
      %v503 = vadd.f32 0.0, %v502
      %v504 = vpop.f32.mrb[0].mxu0
      %v505 = vpop.f32.mrb[0].mxu0
      %v506 = vadd.f32 0.0, %v505
      %v507 = vpop.f32.mrb[0].mxu0
      %508 = vdwg.mxu0
      %v511 = vunpack.c.l.b16 %v234
      %v512 = vunpack.c.l.b16 %v235
      %v513 = vpack.c.b16 %v512, %v511
      %515 = vxpose.xlu0.c.b16.start [1/8] %v513, 128
      %516 = vxpose.xlu0.c.b16.cont [2/8] 0, 128
      %517 = vxpose.xlu0.c.b16.cont [3/8] 0, 128
      %518 = vxpose.xlu0.c.b16.cont [4/8] 0, 128
      %519 = vxpose.xlu0.c.b16.cont [5/8] 0, 128
      %520 = vxpose.xlu0.c.b16.cont [6/8] 0, 128
      %521 = vxpose.xlu0.c.b16.cont [7/8] 0, 128
      %522 = vxpose.xlu0.c.b16.end [8/8] 0, 128
      %v523 = vpop.trf.xlu0
      %v524 = vpop.trf.xlu0
      %v525 = vpop.trf.xlu0
      %v526 = vpop.trf.xlu0
      %v527 = vpop.trf.xlu0
      %v528 = vpop.trf.xlu0
      %v529 = vpop.trf.xlu0
      %v530 = vpop.trf.xlu0
      %v533 = vunpack.c.l.b16 %v266
      %v534 = vunpack.c.l.b16 %v267
      %v535 = vpack.c.b16 %v534, %v533
      %v538 = vsel %vm320, %v523, 0
      %540 = vmatprep.subr.bf16.mxu0 0
      %541 = vmatpush1.bf16.msra.mxu0 %v535
      %542 = vmatprep.subr.bf16.mxu0 0
      %543 = vmatpush1.bf16.msra.mxu0 0
      %544 = vmatprep.subr.bf16.mxu0 0
      %545 = vmatpush1.bf16.msra.mxu0 0
      %546 = vmatprep.subr.bf16.mxu0 0
      %547 = vmatpush1.bf16.msra.mxu0 0
      %548 = vmatprep.subr.bf16.mxu0 0
      %549 = vmatpush1.bf16.msra.mxu0 0
      %550 = vmatprep.subr.bf16.mxu0 0
      %551 = vmatpush1.bf16.msra.mxu0 0
      %552 = vmatprep.subr.bf16.mxu0 0
      %553 = vmatpush1.bf16.msra.mxu0 0
      %554 = vmatprep.subr.bf16.mxu0 0
      %555 = vmatpush1.bf16.msra.mxu0 0
      %556 = vmatprep.subr.bf16.mxu0 0
      %557 = vmatpush1.bf16.msra.mxu0 0
      %558 = vmatprep.subr.bf16.mxu0 0
      %559 = vmatpush1.bf16.msra.mxu0 0
      %560 = vmatprep.subr.bf16.mxu0 0
      %561 = vmatpush1.bf16.msra.mxu0 0
      %562 = vmatprep.subr.bf16.mxu0 0
      %563 = vmatpush1.bf16.msra.mxu0 0
      %564 = vmatprep.subr.bf16.mxu0 0
      %565 = vmatpush1.bf16.msra.mxu0 0
      %566 = vmatprep.subr.bf16.mxu0 0
      %567 = vmatpush1.bf16.msra.mxu0 0
      %568 = vmatprep.subr.bf16.mxu0 0
      %569 = vmatpush1.bf16.msra.mxu0 0
      %570 = vmatprep.subr.bf16.mxu0 0
      %571 = vmatpush1.bf16.msra.mxu0 0
      %572 = vmatprep.mubr.bf16.mxu0 0
      %573 = vmatmul.mubr.bf16.gmra.mrb[0].mxu0 %v538
      %v574 = vpop.f32.mrb[0].mxu0
      %v575 = vadd.f32 0.0, %v574
      %v576 = vpop.f32.mrb[0].mxu0
      %v577 = vpop.f32.mrb[0].mxu0
      %v578 = vadd.f32 0.0, %v577
      %v579 = vpop.f32.mrb[0].mxu0
      %580 = vdwg.mxu0
      %v583 = vunpack.c.l.b16 %v236
      %v584 = vunpack.c.l.b16 %v237
      %v585 = vpack.c.b16 %v584, %v583
      %587 = vxpose.xlu0.c.b16.start [1/8] %v585, 128
      %588 = vxpose.xlu0.c.b16.cont [2/8] 0, 128
      %589 = vxpose.xlu0.c.b16.cont [3/8] 0, 128
      %590 = vxpose.xlu0.c.b16.cont [4/8] 0, 128
      %591 = vxpose.xlu0.c.b16.cont [5/8] 0, 128
      %592 = vxpose.xlu0.c.b16.cont [6/8] 0, 128
      %593 = vxpose.xlu0.c.b16.cont [7/8] 0, 128
      %594 = vxpose.xlu0.c.b16.end [8/8] 0, 128
      %v595 = vpop.trf.xlu0
      %v596 = vpop.trf.xlu0
      %v597 = vpop.trf.xlu0
      %v598 = vpop.trf.xlu0
      %v599 = vpop.trf.xlu0
      %v600 = vpop.trf.xlu0
      %v601 = vpop.trf.xlu0
      %v602 = vpop.trf.xlu0
      %v605 = vunpack.c.l.b16 %v268
      %v606 = vunpack.c.l.b16 %v269
      %v607 = vpack.c.b16 %v606, %v605
      %v610 = vsel %vm320, %v595, 0
      %612 = vmatprep.subr.bf16.mxu0 0
      %613 = vmatpush1.bf16.msra.mxu0 %v607
      %614 = vmatprep.subr.bf16.mxu0 0
      %615 = vmatpush1.bf16.msra.mxu0 0
      %616 = vmatprep.subr.bf16.mxu0 0
      %617 = vmatpush1.bf16.msra.mxu0 0
      %618 = vmatprep.subr.bf16.mxu0 0
      %619 = vmatpush1.bf16.msra.mxu0 0
      %620 = vmatprep.subr.bf16.mxu0 0
      %621 = vmatpush1.bf16.msra.mxu0 0
      %622 = vmatprep.subr.bf16.mxu0 0
      %623 = vmatpush1.bf16.msra.mxu0 0
      %624 = vmatprep.subr.bf16.mxu0 0
      %625 = vmatpush1.bf16.msra.mxu0 0
      %626 = vmatprep.subr.bf16.mxu0 0
      %627 = vmatpush1.bf16.msra.mxu0 0
      %628 = vmatprep.subr.bf16.mxu0 0
      %629 = vmatpush1.bf16.msra.mxu0 0
      %630 = vmatprep.subr.bf16.mxu0 0
      %631 = vmatpush1.bf16.msra.mxu0 0
      %632 = vmatprep.subr.bf16.mxu0 0
      %633 = vmatpush1.bf16.msra.mxu0 0
      %634 = vmatprep.subr.bf16.mxu0 0
      %635 = vmatpush1.bf16.msra.mxu0 0
      %636 = vmatprep.subr.bf16.mxu0 0
      %637 = vmatpush1.bf16.msra.mxu0 0
      %638 = vmatprep.subr.bf16.mxu0 0
      %639 = vmatpush1.bf16.msra.mxu0 0
      %640 = vmatprep.subr.bf16.mxu0 0
      %641 = vmatpush1.bf16.msra.mxu0 0
      %642 = vmatprep.subr.bf16.mxu0 0
      %643 = vmatpush1.bf16.msra.mxu0 0
      %644 = vmatprep.mubr.bf16.mxu0 0
      %645 = vmatmul.mubr.bf16.gmra.mrb[0].mxu0 %v610
      %v646 = vpop.f32.mrb[0].mxu0
      %v647 = vadd.f32 0.0, %v646
      %v648 = vpop.f32.mrb[0].mxu0
      %v649 = vpop.f32.mrb[0].mxu0
      %v650 = vadd.f32 0.0, %v649
      %v651 = vpop.f32.mrb[0].mxu0
      %652 = vdwg.mxu0
      %v655 = vunpack.c.l.b16 %v238
      %v656 = vunpack.c.l.b16 %v239
      %v657 = vpack.c.b16 %v656, %v655
      %659 = vxpose.xlu0.c.b16.start [1/8] %v657, 128
      %660 = vxpose.xlu0.c.b16.cont [2/8] 0, 128
      %661 = vxpose.xlu0.c.b16.cont [3/8] 0, 128
      %662 = vxpose.xlu0.c.b16.cont [4/8] 0, 128
      %663 = vxpose.xlu0.c.b16.cont [5/8] 0, 128
      %664 = vxpose.xlu0.c.b16.cont [6/8] 0, 128
      %665 = vxpose.xlu0.c.b16.cont [7/8] 0, 128
      %666 = vxpose.xlu0.c.b16.end [8/8] 0, 128
      %v667 = vpop.trf.xlu0
      %v668 = vpop.trf.xlu0
      %v669 = vpop.trf.xlu0
      %v670 = vpop.trf.xlu0
      %v671 = vpop.trf.xlu0
      %v672 = vpop.trf.xlu0
      %v673 = vpop.trf.xlu0
      %v674 = vpop.trf.xlu0
      %v677 = vunpack.c.l.b16 %v270
      %v678 = vunpack.c.l.b16 %v271
      %v679 = vpack.c.b16 %v678, %v677
      %v682 = vsel %vm320, %v667, 0
      %684 = vmatprep.subr.bf16.mxu0 0
      %685 = vmatpush1.bf16.msra.mxu0 %v679
      %686 = vmatprep.subr.bf16.mxu0 0
      %687 = vmatpush1.bf16.msra.mxu0 0
      %688 = vmatprep.subr.bf16.mxu0 0
      %689 = vmatpush1.bf16.msra.mxu0 0
      %690 = vmatprep.subr.bf16.mxu0 0
      %691 = vmatpush1.bf16.msra.mxu0 0
      %692 = vmatprep.subr.bf16.mxu0 0
      %693 = vmatpush1.bf16.msra.mxu0 0
      %694 = vmatprep.subr.bf16.mxu0 0
      %695 = vmatpush1.bf16.msra.mxu0 0
      %696 = vmatprep.subr.bf16.mxu0 0
      %697 = vmatpush1.bf16.msra.mxu0 0
      %698 = vmatprep.subr.bf16.mxu0 0
      %699 = vmatpush1.bf16.msra.mxu0 0
      %700 = vmatprep.subr.bf16.mxu0 0
      %701 = vmatpush1.bf16.msra.mxu0 0
      %702 = vmatprep.subr.bf16.mxu0 0
      %703 = vmatpush1.bf16.msra.mxu0 0
      %704 = vmatprep.subr.bf16.mxu0 0
      %705 = vmatpush1.bf16.msra.mxu0 0
      %706 = vmatprep.subr.bf16.mxu0 0
      %707 = vmatpush1.bf16.msra.mxu0 0
      %708 = vmatprep.subr.bf16.mxu0 0
      %709 = vmatpush1.bf16.msra.mxu0 0
      %710 = vmatprep.subr.bf16.mxu0 0
      %711 = vmatpush1.bf16.msra.mxu0 0
      %712 = vmatprep.subr.bf16.mxu0 0
      %713 = vmatpush1.bf16.msra.mxu0 0
      %714 = vmatprep.subr.bf16.mxu0 0
      %715 = vmatpush1.bf16.msra.mxu0 0
      %716 = vmatprep.mubr.bf16.mxu0 0
      %717 = vmatmul.mubr.bf16.gmra.mrb[0].mxu0 %v682
      %v718 = vpop.f32.mrb[0].mxu0
      %v719 = vadd.f32 0.0, %v718
      %v720 = vpop.f32.mrb[0].mxu0
      %v721 = vpop.f32.mrb[0].mxu0
      %v722 = vadd.f32 0.0, %v721
      %v723 = vpop.f32.mrb[0].mxu0
      %724 = vdwg.mxu0
      %v727 = vunpack.c.l.b16 %v240
      %v728 = vunpack.c.l.b16 %v241
      %v729 = vpack.c.b16 %v728, %v727
      %731 = vxpose.xlu0.c.b16.start [1/8] %v729, 128
      %732 = vxpose.xlu0.c.b16.cont [2/8] 0, 128
      %733 = vxpose.xlu0.c.b16.cont [3/8] 0, 128
      %734 = vxpose.xlu0.c.b16.cont [4/8] 0, 128
      %735 = vxpose.xlu0.c.b16.cont [5/8] 0, 128
      %736 = vxpose.xlu0.c.b16.cont [6/8] 0, 128
      %737 = vxpose.xlu0.c.b16.cont [7/8] 0, 128
      %738 = vxpose.xlu0.c.b16.end [8/8] 0, 128
      %v739 = vpop.trf.xlu0
      %v740 = vpop.trf.xlu0
      %v741 = vpop.trf.xlu0
      %v742 = vpop.trf.xlu0
      %v743 = vpop.trf.xlu0
      %v744 = vpop.trf.xlu0
      %v745 = vpop.trf.xlu0
      %v746 = vpop.trf.xlu0
      %v749 = vunpack.c.l.b16 %v272
      %v750 = vunpack.c.l.b16 %v273
      %v751 = vpack.c.b16 %v750, %v749
      %v754 = vsel %vm320, %v739, 0
      %756 = vmatprep.subr.bf16.mxu0 0
      %757 = vmatpush1.bf16.msra.mxu0 %v751
      %758 = vmatprep.subr.bf16.mxu0 0
      %759 = vmatpush1.bf16.msra.mxu0 0
      %760 = vmatprep.subr.bf16.mxu0 0
      %761 = vmatpush1.bf16.msra.mxu0 0
      %762 = vmatprep.subr.bf16.mxu0 0
      %763 = vmatpush1.bf16.msra.mxu0 0
      %764 = vmatprep.subr.bf16.mxu0 0
      %765 = vmatpush1.bf16.msra.mxu0 0
      %766 = vmatprep.subr.bf16.mxu0 0
      %767 = vmatpush1.bf16.msra.mxu0 0
      %768 = vmatprep.subr.bf16.mxu0 0
      %769 = vmatpush1.bf16.msra.mxu0 0
      %770 = vmatprep.subr.bf16.mxu0 0
      %771 = vmatpush1.bf16.msra.mxu0 0
      %772 = vmatprep.subr.bf16.mxu0 0
      %773 = vmatpush1.bf16.msra.mxu0 0
      %774 = vmatprep.subr.bf16.mxu0 0
      %775 = vmatpush1.bf16.msra.mxu0 0
      %776 = vmatprep.subr.bf16.mxu0 0
      %777 = vmatpush1.bf16.msra.mxu0 0
      %778 = vmatprep.subr.bf16.mxu0 0
      %779 = vmatpush1.bf16.msra.mxu0 0
      %780 = vmatprep.subr.bf16.mxu0 0
      %781 = vmatpush1.bf16.msra.mxu0 0
      %782 = vmatprep.subr.bf16.mxu0 0
      %783 = vmatpush1.bf16.msra.mxu0 0
      %784 = vmatprep.subr.bf16.mxu0 0
      %785 = vmatpush1.bf16.msra.mxu0 0
      %786 = vmatprep.subr.bf16.mxu0 0
      %787 = vmatpush1.bf16.msra.mxu0 0
      %788 = vmatprep.mubr.bf16.mxu0 0
      %789 = vmatmul.mubr.bf16.gmra.mrb[0].mxu0 %v754
      %v790 = vpop.f32.mrb[0].mxu0
      %v791 = vadd.f32 0.0, %v790
      %v792 = vpop.f32.mrb[0].mxu0
      %v793 = vpop.f32.mrb[0].mxu0
      %v794 = vadd.f32 0.0, %v793
      %v795 = vpop.f32.mrb[0].mxu0
      %796 = vdwg.mxu0
      %v799 = vunpack.c.l.b16 %v242
      %v800 = vunpack.c.l.b16 %v243
      %v801 = vpack.c.b16 %v800, %v799
      %803 = vxpose.xlu0.c.b16.start [1/8] %v801, 128
      %804 = vxpose.xlu0.c.b16.cont [2/8] 0, 128
      %805 = vxpose.xlu0.c.b16.cont [3/8] 0, 128
      %806 = vxpose.xlu0.c.b16.cont [4/8] 0, 128
      %807 = vxpose.xlu0.c.b16.cont [5/8] 0, 128
      %808 = vxpose.xlu0.c.b16.cont [6/8] 0, 128
      %809 = vxpose.xlu0.c.b16.cont [7/8] 0, 128
      %810 = vxpose.xlu0.c.b16.end [8/8] 0, 128
      %v811 = vpop.trf.xlu0
      %v812 = vpop.trf.xlu0
      %v813 = vpop.trf.xlu0
      %v814 = vpop.trf.xlu0
      %v815 = vpop.trf.xlu0
      %v816 = vpop.trf.xlu0
      %v817 = vpop.trf.xlu0
      %v818 = vpop.trf.xlu0
      %v821 = vunpack.c.l.b16 %v274
      %v822 = vunpack.c.l.b16 %v275
      %v823 = vpack.c.b16 %v822, %v821
      %v826 = vsel %vm320, %v811, 0
      %828 = vmatprep.subr.bf16.mxu0 0
      %829 = vmatpush1.bf16.msra.mxu0 %v823
      %830 = vmatprep.subr.bf16.mxu0 0
      %831 = vmatpush1.bf16.msra.mxu0 0
      %832 = vmatprep.subr.bf16.mxu0 0
      %833 = vmatpush1.bf16.msra.mxu0 0
      %834 = vmatprep.subr.bf16.mxu0 0
      %835 = vmatpush1.bf16.msra.mxu0 0
      %836 = vmatprep.subr.bf16.mxu0 0
      %837 = vmatpush1.bf16.msra.mxu0 0
      %838 = vmatprep.subr.bf16.mxu0 0
      %839 = vmatpush1.bf16.msra.mxu0 0
      %840 = vmatprep.subr.bf16.mxu0 0
      %841 = vmatpush1.bf16.msra.mxu0 0
      %842 = vmatprep.subr.bf16.mxu0 0
      %843 = vmatpush1.bf16.msra.mxu0 0
      %844 = vmatprep.subr.bf16.mxu0 0
      %845 = vmatpush1.bf16.msra.mxu0 0
      %846 = vmatprep.subr.bf16.mxu0 0
      %847 = vmatpush1.bf16.msra.mxu0 0
      %848 = vmatprep.subr.bf16.mxu0 0
      %849 = vmatpush1.bf16.msra.mxu0 0
      %850 = vmatprep.subr.bf16.mxu0 0
      %851 = vmatpush1.bf16.msra.mxu0 0
      %852 = vmatprep.subr.bf16.mxu0 0
      %853 = vmatpush1.bf16.msra.mxu0 0
      %854 = vmatprep.subr.bf16.mxu0 0
      %855 = vmatpush1.bf16.msra.mxu0 0
      %856 = vmatprep.subr.bf16.mxu0 0
      %857 = vmatpush1.bf16.msra.mxu0 0
      %858 = vmatprep.subr.bf16.mxu0 0
      %859 = vmatpush1.bf16.msra.mxu0 0
      %860 = vmatprep.mubr.bf16.mxu0 0
      %861 = vmatmul.mubr.bf16.gmra.mrb[0].mxu0 %v826
      %v862 = vpop.f32.mrb[0].mxu0
      %v863 = vadd.f32 0.0, %v862
      %v864 = vpop.f32.mrb[0].mxu0
      %v865 = vpop.f32.mrb[0].mxu0
      %v866 = vadd.f32 0.0, %v865
      %v867 = vpop.f32.mrb[0].mxu0
      %868 = vdwg.mxu0
      %v871 = vunpack.c.l.b16 %v244
      %v872 = vunpack.c.l.b16 %v245
      %v873 = vpack.c.b16 %v872, %v871
      %875 = vxpose.xlu0.c.b16.start [1/8] %v873, 128
      %876 = vxpose.xlu0.c.b16.cont [2/8] 0, 128
      %877 = vxpose.xlu0.c.b16.cont [3/8] 0, 128
      %878 = vxpose.xlu0.c.b16.cont [4/8] 0, 128
      %879 = vxpose.xlu0.c.b16.cont [5/8] 0, 128
      %880 = vxpose.xlu0.c.b16.cont [6/8] 0, 128
      %881 = vxpose.xlu0.c.b16.cont [7/8] 0, 128
      %882 = vxpose.xlu0.c.b16.end [8/8] 0, 128
      %v883 = vpop.trf.xlu0
      %v884 = vpop.trf.xlu0
      %v885 = vpop.trf.xlu0
      %v886 = vpop.trf.xlu0
      %v887 = vpop.trf.xlu0
      %v888 = vpop.trf.xlu0
      %v889 = vpop.trf.xlu0
      %v890 = vpop.trf.xlu0
      %v893 = vunpack.c.l.b16 %v276
      %v894 = vunpack.c.l.b16 %v277
      %v895 = vpack.c.b16 %v894, %v893
      %v898 = vsel %vm320, %v883, 0
      %900 = vmatprep.subr.bf16.mxu0 0
      %901 = vmatpush1.bf16.msra.mxu0 %v895
      %902 = vmatprep.subr.bf16.mxu0 0
      %903 = vmatpush1.bf16.msra.mxu0 0
      %904 = vmatprep.subr.bf16.mxu0 0
      %905 = vmatpush1.bf16.msra.mxu0 0
      %906 = vmatprep.subr.bf16.mxu0 0
      %907 = vmatpush1.bf16.msra.mxu0 0
      %908 = vmatprep.subr.bf16.mxu0 0
      %909 = vmatpush1.bf16.msra.mxu0 0
      %910 = vmatprep.subr.bf16.mxu0 0
      %911 = vmatpush1.bf16.msra.mxu0 0
      %912 = vmatprep.subr.bf16.mxu0 0
      %913 = vmatpush1.bf16.msra.mxu0 0
      %914 = vmatprep.subr.bf16.mxu0 0
      %915 = vmatpush1.bf16.msra.mxu0 0
      %916 = vmatprep.subr.bf16.mxu0 0
      %917 = vmatpush1.bf16.msra.mxu0 0
      %918 = vmatprep.subr.bf16.mxu0 0
      %919 = vmatpush1.bf16.msra.mxu0 0
      %920 = vmatprep.subr.bf16.mxu0 0
      %921 = vmatpush1.bf16.msra.mxu0 0
      %922 = vmatprep.subr.bf16.mxu0 0
      %923 = vmatpush1.bf16.msra.mxu0 0
      %924 = vmatprep.subr.bf16.mxu0 0
      %925 = vmatpush1.bf16.msra.mxu0 0
      %926 = vmatprep.subr.bf16.mxu0 0
      %927 = vmatpush1.bf16.msra.mxu0 0
      %928 = vmatprep.subr.bf16.mxu0 0
      %929 = vmatpush1.bf16.msra.mxu0 0
      %930 = vmatprep.subr.bf16.mxu0 0
      %931 = vmatpush1.bf16.msra.mxu0 0
      %932 = vmatprep.mubr.bf16.mxu0 0
      %933 = vmatmul.mubr.bf16.gmra.mrb[0].mxu0 %v898
      %v934 = vpop.f32.mrb[0].mxu0
      %v935 = vadd.f32 0.0, %v934
      %v936 = vpop.f32.mrb[0].mxu0
      %v937 = vpop.f32.mrb[0].mxu0
      %v938 = vadd.f32 0.0, %v937
      %v939 = vpop.f32.mrb[0].mxu0
      %940 = vdwg.mxu0
      %v943 = vunpack.c.l.b16 %v246
      %v944 = vunpack.c.l.b16 %v247
      %v945 = vpack.c.b16 %v944, %v943
      %947 = vxpose.xlu0.c.b16.start [1/8] %v945, 128
      %948 = vxpose.xlu0.c.b16.cont [2/8] 0, 128
      %949 = vxpose.xlu0.c.b16.cont [3/8] 0, 128
      %950 = vxpose.xlu0.c.b16.cont [4/8] 0, 128
      %951 = vxpose.xlu0.c.b16.cont [5/8] 0, 128
      %952 = vxpose.xlu0.c.b16.cont [6/8] 0, 128
      %953 = vxpose.xlu0.c.b16.cont [7/8] 0, 128
      %954 = vxpose.xlu0.c.b16.end [8/8] 0, 128
      %v955 = vpop.trf.xlu0
      %v956 = vpop.trf.xlu0
      %v957 = vpop.trf.xlu0
      %v958 = vpop.trf.xlu0
      %v959 = vpop.trf.xlu0
      %v960 = vpop.trf.xlu0
      %v961 = vpop.trf.xlu0
      %v962 = vpop.trf.xlu0
      %v965 = vunpack.c.l.b16 %v278
      %v966 = vunpack.c.l.b16 %v279
      %v967 = vpack.c.b16 %v966, %v965
      %v970 = vsel %vm320, %v955, 0
      %972 = vmatprep.subr.bf16.mxu0 0
      %973 = vmatpush1.bf16.msra.mxu0 %v967
      %974 = vmatprep.subr.bf16.mxu0 0
      %975 = vmatpush1.bf16.msra.mxu0 0
      %976 = vmatprep.subr.bf16.mxu0 0
      %977 = vmatpush1.bf16.msra.mxu0 0
      %978 = vmatprep.subr.bf16.mxu0 0
      %979 = vmatpush1.bf16.msra.mxu0 0
      %980 = vmatprep.subr.bf16.mxu0 0
      %981 = vmatpush1.bf16.msra.mxu0 0
      %982 = vmatprep.subr.bf16.mxu0 0
      %983 = vmatpush1.bf16.msra.mxu0 0
      %984 = vmatprep.subr.bf16.mxu0 0
      %985 = vmatpush1.bf16.msra.mxu0 0
      %986 = vmatprep.subr.bf16.mxu0 0
      %987 = vmatpush1.bf16.msra.mxu0 0
      %988 = vmatprep.subr.bf16.mxu0 0
      %989 = vmatpush1.bf16.msra.mxu0 0
      %990 = vmatprep.subr.bf16.mxu0 0
      %991 = vmatpush1.bf16.msra.mxu0 0
      %992 = vmatprep.subr.bf16.mxu0 0
      %993 = vmatpush1.bf16.msra.mxu0 0
      %994 = vmatprep.subr.bf16.mxu0 0
      %995 = vmatpush1.bf16.msra.mxu0 0
      %996 = vmatprep.subr.bf16.mxu0 0
      %997 = vmatpush1.bf16.msra.mxu0 0
      %998 = vmatprep.subr.bf16.mxu0 0
      %999 = vmatpush1.bf16.msra.mxu0 0
      %1000 = vmatprep.subr.bf16.mxu0 0
      %1001 = vmatpush1.bf16.msra.mxu0 0
      %1002 = vmatprep.subr.bf16.mxu0 0
      %1003 = vmatpush1.bf16.msra.mxu0 0
      %1004 = vmatprep.mubr.bf16.mxu0 0
      %1005 = vmatmul.mubr.bf16.gmra.mrb[0].mxu0 %v970
      %v1006 = vpop.f32.mrb[0].mxu0
      %v1007 = vadd.f32 0.0, %v1006
      %v1008 = vpop.f32.mrb[0].mxu0
      %v1009 = vpop.f32.mrb[0].mxu0
      %v1010 = vadd.f32 0.0, %v1009
      %v1011 = vpop.f32.mrb[0].mxu0
      %1012 = vdwg.mxu0
      %v1015 = vunpack.c.l.b16 %v248
      %v1016 = vunpack.c.l.b16 %v249
      %v1017 = vpack.c.b16 %v1016, %v1015
      %1019 = vxpose.xlu0.c.b16.start [1/8] %v1017, 128
      %1020 = vxpose.xlu0.c.b16.cont [2/8] 0, 128
      %1021 = vxpose.xlu0.c.b16.cont [3/8] 0, 128
      %1022 = vxpose.xlu0.c.b16.cont [4/8] 0, 128
      %1023 = vxpose.xlu0.c.b16.cont [5/8] 0, 128
      %1024 = vxpose.xlu0.c.b16.cont [6/8] 0, 128
      %1025 = vxpose.xlu0.c.b16.cont [7/8] 0, 128
      %1026 = vxpose.xlu0.c.b16.end [8/8] 0, 128
      %v1027 = vpop.trf.xlu0
      %v1028 = vpop.trf.xlu0
      %v1029 = vpop.trf.xlu0
      %v1030 = vpop.trf.xlu0
      %v1031 = vpop.trf.xlu0
      %v1032 = vpop.trf.xlu0
      %v1033 = vpop.trf.xlu0
      %v1034 = vpop.trf.xlu0
      %v1037 = vunpack.c.l.b16 %v280
      %v1038 = vunpack.c.l.b16 %v281
      %v1039 = vpack.c.b16 %v1038, %v1037
      %v1042 = vsel %vm320, %v1027, 0
      %1044 = vmatprep.subr.bf16.mxu0 0
      %1045 = vmatpush1.bf16.msra.mxu0 %v1039
      %1046 = vmatprep.subr.bf16.mxu0 0
      %1047 = vmatpush1.bf16.msra.mxu0 0
      %1048 = vmatprep.subr.bf16.mxu0 0
      %1049 = vmatpush1.bf16.msra.mxu0 0
      %1050 = vmatprep.subr.bf16.mxu0 0
      %1051 = vmatpush1.bf16.msra.mxu0 0
      %1052 = vmatprep.subr.bf16.mxu0 0
      %1053 = vmatpush1.bf16.msra.mxu0 0
      %1054 = vmatprep.subr.bf16.mxu0 0
      %1055 = vmatpush1.bf16.msra.mxu0 0
      %1056 = vmatprep.subr.bf16.mxu0 0
      %1057 = vmatpush1.bf16.msra.mxu0 0
      %1058 = vmatprep.subr.bf16.mxu0 0
      %1059 = vmatpush1.bf16.msra.mxu0 0
      %1060 = vmatprep.subr.bf16.mxu0 0
      %1061 = vmatpush1.bf16.msra.mxu0 0
      %1062 = vmatprep.subr.bf16.mxu0 0
      %1063 = vmatpush1.bf16.msra.mxu0 0
      %1064 = vmatprep.subr.bf16.mxu0 0
      %1065 = vmatpush1.bf16.msra.mxu0 0
      %1066 = vmatprep.subr.bf16.mxu0 0
      %1067 = vmatpush1.bf16.msra.mxu0 0
      %1068 = vmatprep.subr.bf16.mxu0 0
      %1069 = vmatpush1.bf16.msra.mxu0 0
      %1070 = vmatprep.subr.bf16.mxu0 0
      %1071 = vmatpush1.bf16.msra.mxu0 0
      %1072 = vmatprep.subr.bf16.mxu0 0
      %1073 = vmatpush1.bf16.msra.mxu0 0
      %1074 = vmatprep.subr.bf16.mxu0 0
      %1075 = vmatpush1.bf16.msra.mxu0 0
      %1076 = vmatprep.mubr.bf16.mxu0 0
      %1077 = vmatmul.mubr.bf16.gmra.mrb[0].mxu0 %v1042
      %v1078 = vpop.f32.mrb[0].mxu0
      %v1079 = vadd.f32 0.0, %v1078
      %v1080 = vpop.f32.mrb[0].mxu0
      %v1081 = vpop.f32.mrb[0].mxu0
      %v1082 = vadd.f32 0.0, %v1081
      %v1083 = vpop.f32.mrb[0].mxu0
      %1084 = vdwg.mxu0
      %v1087 = vunpack.c.l.b16 %v250
      %v1088 = vunpack.c.l.b16 %v251
      %v1089 = vpack.c.b16 %v1088, %v1087
      %1091 = vxpose.xlu0.c.b16.start [1/8] %v1089, 128
      %1092 = vxpose.xlu0.c.b16.cont [2/8] 0, 128
      %1093 = vxpose.xlu0.c.b16.cont [3/8] 0, 128
      %1094 = vxpose.xlu0.c.b16.cont [4/8] 0, 128
      %1095 = vxpose.xlu0.c.b16.cont [5/8] 0, 128
      %1096 = vxpose.xlu0.c.b16.cont [6/8] 0, 128
      %1097 = vxpose.xlu0.c.b16.cont [7/8] 0, 128
      %1098 = vxpose.xlu0.c.b16.end [8/8] 0, 128
      %v1099 = vpop.trf.xlu0
      %v1100 = vpop.trf.xlu0
      %v1101 = vpop.trf.xlu0
      %v1102 = vpop.trf.xlu0
      %v1103 = vpop.trf.xlu0
      %v1104 = vpop.trf.xlu0
      %v1105 = vpop.trf.xlu0
      %v1106 = vpop.trf.xlu0
      %v1109 = vunpack.c.l.b16 %v282
      %v1110 = vunpack.c.l.b16 %v283
      %v1111 = vpack.c.b16 %v1110, %v1109
      %v1114 = vsel %vm320, %v1099, 0
      %1116 = vmatprep.subr.bf16.mxu0 0
      %1117 = vmatpush1.bf16.msra.mxu0 %v1111
      %1118 = vmatprep.subr.bf16.mxu0 0
      %1119 = vmatpush1.bf16.msra.mxu0 0
      %1120 = vmatprep.subr.bf16.mxu0 0
      %1121 = vmatpush1.bf16.msra.mxu0 0
      %1122 = vmatprep.subr.bf16.mxu0 0
      %1123 = vmatpush1.bf16.msra.mxu0 0
      %1124 = vmatprep.subr.bf16.mxu0 0
      %1125 = vmatpush1.bf16.msra.mxu0 0
      %1126 = vmatprep.subr.bf16.mxu0 0
      %1127 = vmatpush1.bf16.msra.mxu0 0
      %1128 = vmatprep.subr.bf16.mxu0 0
      %1129 = vmatpush1.bf16.msra.mxu0 0
      %1130 = vmatprep.subr.bf16.mxu0 0
      %1131 = vmatpush1.bf16.msra.mxu0 0
      %1132 = vmatprep.subr.bf16.mxu0 0
      %1133 = vmatpush1.bf16.msra.mxu0 0
      %1134 = vmatprep.subr.bf16.mxu0 0
      %1135 = vmatpush1.bf16.msra.mxu0 0
      %1136 = vmatprep.subr.bf16.mxu0 0
      %1137 = vmatpush1.bf16.msra.mxu0 0
      %1138 = vmatprep.subr.bf16.mxu0 0
      %1139 = vmatpush1.bf16.msra.mxu0 0
      %1140 = vmatprep.subr.bf16.mxu0 0
      %1141 = vmatpush1.bf16.msra.mxu0 0
      %1142 = vmatprep.subr.bf16.mxu0 0
      %1143 = vmatpush1.bf16.msra.mxu0 0
      %1144 = vmatprep.subr.bf16.mxu0 0
      %1145 = vmatpush1.bf16.msra.mxu0 0
      %1146 = vmatprep.subr.bf16.mxu0 0
      %1147 = vmatpush1.bf16.msra.mxu0 0
      %1148 = vmatprep.mubr.bf16.mxu0 0
      %1149 = vmatmul.mubr.bf16.gmra.mrb[0].mxu0 %v1114
      %v1150 = vpop.f32.mrb[0].mxu0
      %v1151 = vadd.f32 0.0, %v1150
      %v1152 = vpop.f32.mrb[0].mxu0
      %v1153 = vpop.f32.mrb[0].mxu0
      %v1154 = vadd.f32 0.0, %v1153
      %v1155 = vpop.f32.mrb[0].mxu0
      %1156 = vdwg.mxu0
      %v1159 = vunpack.c.l.b16 %v252
      %v1160 = vunpack.c.l.b16 %v253
      %v1161 = vpack.c.b16 %v1160, %v1159
      %1163 = vxpose.xlu0.c.b16.start [1/8] %v1161, 128
      %1164 = vxpose.xlu0.c.b16.cont [2/8] 0, 128
      %1165 = vxpose.xlu0.c.b16.cont [3/8] 0, 128
      %1166 = vxpose.xlu0.c.b16.cont [4/8] 0, 128
      %1167 = vxpose.xlu0.c.b16.cont [5/8] 0, 128
      %1168 = vxpose.xlu0.c.b16.cont [6/8] 0, 128
      %1169 = vxpose.xlu0.c.b16.cont [7/8] 0, 128
      %1170 = vxpose.xlu0.c.b16.end [8/8] 0, 128
      %v1171 = vpop.trf.xlu0
      %v1172 = vpop.trf.xlu0
      %v1173 = vpop.trf.xlu0
      %v1174 = vpop.trf.xlu0
      %v1175 = vpop.trf.xlu0
      %v1176 = vpop.trf.xlu0
      %v1177 = vpop.trf.xlu0
      %v1178 = vpop.trf.xlu0
      %v1181 = vunpack.c.l.b16 %v284
      %v1182 = vunpack.c.l.b16 %v285
      %v1183 = vpack.c.b16 %v1182, %v1181
      %v1186 = vsel %vm320, %v1171, 0
      %1188 = vmatprep.subr.bf16.mxu0 0
      %1189 = vmatpush1.bf16.msra.mxu0 %v1183
      %1190 = vmatprep.subr.bf16.mxu0 0
      %1191 = vmatpush1.bf16.msra.mxu0 0
      %1192 = vmatprep.subr.bf16.mxu0 0
      %1193 = vmatpush1.bf16.msra.mxu0 0
      %1194 = vmatprep.subr.bf16.mxu0 0
      %1195 = vmatpush1.bf16.msra.mxu0 0
      %1196 = vmatprep.subr.bf16.mxu0 0
      %1197 = vmatpush1.bf16.msra.mxu0 0
      %1198 = vmatprep.subr.bf16.mxu0 0
      %1199 = vmatpush1.bf16.msra.mxu0 0
      %1200 = vmatprep.subr.bf16.mxu0 0
      %1201 = vmatpush1.bf16.msra.mxu0 0
      %1202 = vmatprep.subr.bf16.mxu0 0
      %1203 = vmatpush1.bf16.msra.mxu0 0
      %1204 = vmatprep.subr.bf16.mxu0 0
      %1205 = vmatpush1.bf16.msra.mxu0 0
      %1206 = vmatprep.subr.bf16.mxu0 0
      %1207 = vmatpush1.bf16.msra.mxu0 0
      %1208 = vmatprep.subr.bf16.mxu0 0
      %1209 = vmatpush1.bf16.msra.mxu0 0
      %1210 = vmatprep.subr.bf16.mxu0 0
      %1211 = vmatpush1.bf16.msra.mxu0 0
      %1212 = vmatprep.subr.bf16.mxu0 0
      %1213 = vmatpush1.bf16.msra.mxu0 0
      %1214 = vmatprep.subr.bf16.mxu0 0
      %1215 = vmatpush1.bf16.msra.mxu0 0
      %1216 = vmatprep.subr.bf16.mxu0 0
      %1217 = vmatpush1.bf16.msra.mxu0 0
      %1218 = vmatprep.subr.bf16.mxu0 0
      %1219 = vmatpush1.bf16.msra.mxu0 0
      %1220 = vmatprep.mubr.bf16.mxu0 0
      %1221 = vmatmul.mubr.bf16.gmra.mrb[0].mxu0 %v1186
      %v1222 = vpop.f32.mrb[0].mxu0
      %v1223 = vadd.f32 0.0, %v1222
      %v1224 = vpop.f32.mrb[0].mxu0
      %v1225 = vpop.f32.mrb[0].mxu0
      %v1226 = vadd.f32 0.0, %v1225
      %v1227 = vpop.f32.mrb[0].mxu0
      %1228 = vdwg.mxu0
      %v1231 = vunpack.c.l.b16 %v254
      %v1232 = vunpack.c.l.b16 %v255
      %v1233 = vpack.c.b16 %v1232, %v1231
      %1235 = vxpose.xlu0.c.b16.start [1/8] %v1233, 128
      %1236 = vxpose.xlu0.c.b16.cont [2/8] 0, 128
      %1237 = vxpose.xlu0.c.b16.cont [3/8] 0, 128
      %1238 = vxpose.xlu0.c.b16.cont [4/8] 0, 128
      %1239 = vxpose.xlu0.c.b16.cont [5/8] 0, 128
      %1240 = vxpose.xlu0.c.b16.cont [6/8] 0, 128
      %1241 = vxpose.xlu0.c.b16.cont [7/8] 0, 128
      %1242 = vxpose.xlu0.c.b16.end [8/8] 0, 128
      %v1243 = vpop.trf.xlu0
      %v1244 = vpop.trf.xlu0
      %v1245 = vpop.trf.xlu0
      %v1246 = vpop.trf.xlu0
      %v1247 = vpop.trf.xlu0
      %v1248 = vpop.trf.xlu0
      %v1249 = vpop.trf.xlu0
      %v1250 = vpop.trf.xlu0
      %v1253 = vunpack.c.l.b16 %v286
      %v1254 = vunpack.c.l.b16 %v287
      %v1255 = vpack.c.b16 %v1254, %v1253
      %v1258 = vsel %vm320, %v1243, 0
      %1260 = vmatprep.subr.bf16.mxu0 0
      %1261 = vmatpush1.bf16.msra.mxu0 %v1255
      %1262 = vmatprep.subr.bf16.mxu0 0
      %1263 = vmatpush1.bf16.msra.mxu0 0
      %1264 = vmatprep.subr.bf16.mxu0 0
      %1265 = vmatpush1.bf16.msra.mxu0 0
      %1266 = vmatprep.subr.bf16.mxu0 0
      %1267 = vmatpush1.bf16.msra.mxu0 0
      %1268 = vmatprep.subr.bf16.mxu0 0
      %1269 = vmatpush1.bf16.msra.mxu0 0
      %1270 = vmatprep.subr.bf16.mxu0 0
      %1271 = vmatpush1.bf16.msra.mxu0 0
      %1272 = vmatprep.subr.bf16.mxu0 0
      %1273 = vmatpush1.bf16.msra.mxu0 0
      %1274 = vmatprep.subr.bf16.mxu0 0
      %1275 = vmatpush1.bf16.msra.mxu0 0
      %1276 = vmatprep.subr.bf16.mxu0 0
      %1277 = vmatpush1.bf16.msra.mxu0 0
      %1278 = vmatprep.subr.bf16.mxu0 0
      %1279 = vmatpush1.bf16.msra.mxu0 0
      %1280 = vmatprep.subr.bf16.mxu0 0
      %1281 = vmatpush1.bf16.msra.mxu0 0
      %1282 = vmatprep.subr.bf16.mxu0 0
      %1283 = vmatpush1.bf16.msra.mxu0 0
      %1284 = vmatprep.subr.bf16.mxu0 0
      %1285 = vmatpush1.bf16.msra.mxu0 0
      %1286 = vmatprep.subr.bf16.mxu0 0
      %1287 = vmatpush1.bf16.msra.mxu0 0
      %1288 = vmatprep.subr.bf16.mxu0 0
      %1289 = vmatpush1.bf16.msra.mxu0 0
      %1290 = vmatprep.subr.bf16.mxu0 0
      %1291 = vmatpush1.bf16.msra.mxu0 0
      %1292 = vmatprep.mubr.bf16.mxu0 0
      %1293 = vmatmul.mubr.bf16.gmra.mrb[0].mxu0 %v1258
      %v1294 = vpop.f32.mrb[0].mxu0
      %v1295 = vadd.f32 0.0, %v1294
      %v1296 = vpop.f32.mrb[0].mxu0
      %v1297 = vpop.f32.mrb[0].mxu0
      %v1298 = vadd.f32 0.0, %v1297
      %v1299 = vpop.f32.mrb[0].mxu0
      %1300 = vdwg.mxu0
      %v1303 = vunpack.c.l.b16 %v256
      %v1304 = vunpack.c.l.b16 %v257
      %v1305 = vpack.c.b16 %v1304, %v1303
      %1307 = vxpose.xlu0.c.b16.start [1/8] %v1305, 128
      %1308 = vxpose.xlu0.c.b16.cont [2/8] 0, 128
      %1309 = vxpose.xlu0.c.b16.cont [3/8] 0, 128
      %1310 = vxpose.xlu0.c.b16.cont [4/8] 0, 128
      %1311 = vxpose.xlu0.c.b16.cont [5/8] 0, 128
      %1312 = vxpose.xlu0.c.b16.cont [6/8] 0, 128
      %1313 = vxpose.xlu0.c.b16.cont [7/8] 0, 128
      %1314 = vxpose.xlu0.c.b16.end [8/8] 0, 128
      %v1315 = vpop.trf.xlu0
      %v1316 = vpop.trf.xlu0
      %v1317 = vpop.trf.xlu0
      %v1318 = vpop.trf.xlu0
      %v1319 = vpop.trf.xlu0
      %v1320 = vpop.trf.xlu0
      %v1321 = vpop.trf.xlu0
      %v1322 = vpop.trf.xlu0
      %v1325 = vunpack.c.l.b16 %v288
      %v1326 = vunpack.c.l.b16 %v289
      %v1327 = vpack.c.b16 %v1326, %v1325
      %v1330 = vsel %vm320, %v1315, 0
      %1332 = vmatprep.subr.bf16.mxu0 0
      %1333 = vmatpush1.bf16.msra.mxu0 %v1327
      %1334 = vmatprep.subr.bf16.mxu0 0
      %1335 = vmatpush1.bf16.msra.mxu0 0
      %1336 = vmatprep.subr.bf16.mxu0 0
      %1337 = vmatpush1.bf16.msra.mxu0 0
      %1338 = vmatprep.subr.bf16.mxu0 0
      %1339 = vmatpush1.bf16.msra.mxu0 0
      %1340 = vmatprep.subr.bf16.mxu0 0
      %1341 = vmatpush1.bf16.msra.mxu0 0
      %1342 = vmatprep.subr.bf16.mxu0 0
      %1343 = vmatpush1.bf16.msra.mxu0 0
      %1344 = vmatprep.subr.bf16.mxu0 0
      %1345 = vmatpush1.bf16.msra.mxu0 0
      %1346 = vmatprep.subr.bf16.mxu0 0
      %1347 = vmatpush1.bf16.msra.mxu0 0
      %1348 = vmatprep.subr.bf16.mxu0 0
      %1349 = vmatpush1.bf16.msra.mxu0 0
      %1350 = vmatprep.subr.bf16.mxu0 0
      %1351 = vmatpush1.bf16.msra.mxu0 0
      %1352 = vmatprep.subr.bf16.mxu0 0
      %1353 = vmatpush1.bf16.msra.mxu0 0
      %1354 = vmatprep.subr.bf16.mxu0 0
      %1355 = vmatpush1.bf16.msra.mxu0 0
      %1356 = vmatprep.subr.bf16.mxu0 0
      %1357 = vmatpush1.bf16.msra.mxu0 0
      %1358 = vmatprep.subr.bf16.mxu0 0
      %1359 = vmatpush1.bf16.msra.mxu0 0
      %1360 = vmatprep.subr.bf16.mxu0 0
      %1361 = vmatpush1.bf16.msra.mxu0 0
      %1362 = vmatprep.subr.bf16.mxu0 0
      %1363 = vmatpush1.bf16.msra.mxu0 0
      %1364 = vmatprep.mubr.bf16.mxu0 0
      %1365 = vmatmul.mubr.bf16.gmra.mrb[0].mxu0 %v1330
      %v1366 = vpop.f32.mrb[0].mxu0
      %v1367 = vadd.f32 0.0, %v1366
      %v1368 = vpop.f32.mrb[0].mxu0
      %v1369 = vpop.f32.mrb[0].mxu0
      %v1370 = vadd.f32 0.0, %v1369
      %v1371 = vpop.f32.mrb[0].mxu0
      %1372 = vdwg.mxu0
      %v1375 = vunpack.c.l.b16 %v258
      %v1376 = vunpack.c.l.b16 %v259
      %v1377 = vpack.c.b16 %v1376, %v1375
      %1379 = vxpose.xlu0.c.b16.start [1/8] %v1377, 128
      %1380 = vxpose.xlu0.c.b16.cont [2/8] 0, 128
      %1381 = vxpose.xlu0.c.b16.cont [3/8] 0, 128
      %1382 = vxpose.xlu0.c.b16.cont [4/8] 0, 128
      %1383 = vxpose.xlu0.c.b16.cont [5/8] 0, 128
      %1384 = vxpose.xlu0.c.b16.cont [6/8] 0, 128
      %1385 = vxpose.xlu0.c.b16.cont [7/8] 0, 128
      %1386 = vxpose.xlu0.c.b16.end [8/8] 0, 128
      %v1387 = vpop.trf.xlu0
      %v1388 = vpop.trf.xlu0
      %v1389 = vpop.trf.xlu0
      %v1390 = vpop.trf.xlu0
      %v1391 = vpop.trf.xlu0
      %v1392 = vpop.trf.xlu0
      %v1393 = vpop.trf.xlu0
      %v1394 = vpop.trf.xlu0
      %v1397 = vunpack.c.l.b16 %v290
      %v1398 = vunpack.c.l.b16 %v291
      %v1399 = vpack.c.b16 %v1398, %v1397
      %v1402 = vsel %vm320, %v1387, 0
      %1404 = vmatprep.subr.bf16.mxu0 0
      %1405 = vmatpush1.bf16.msra.mxu0 %v1399
      %1406 = vmatprep.subr.bf16.mxu0 0
      %1407 = vmatpush1.bf16.msra.mxu0 0
      %1408 = vmatprep.subr.bf16.mxu0 0
      %1409 = vmatpush1.bf16.msra.mxu0 0
      %1410 = vmatprep.subr.bf16.mxu0 0
      %1411 = vmatpush1.bf16.msra.mxu0 0
      %1412 = vmatprep.subr.bf16.mxu0 0
      %1413 = vmatpush1.bf16.msra.mxu0 0
      %1414 = vmatprep.subr.bf16.mxu0 0
      %1415 = vmatpush1.bf16.msra.mxu0 0
      %1416 = vmatprep.subr.bf16.mxu0 0
      %1417 = vmatpush1.bf16.msra.mxu0 0
      %1418 = vmatprep.subr.bf16.mxu0 0
      %1419 = vmatpush1.bf16.msra.mxu0 0
      %1420 = vmatprep.subr.bf16.mxu0 0
      %1421 = vmatpush1.bf16.msra.mxu0 0
      %1422 = vmatprep.subr.bf16.mxu0 0
      %1423 = vmatpush1.bf16.msra.mxu0 0
      %1424 = vmatprep.subr.bf16.mxu0 0
      %1425 = vmatpush1.bf16.msra.mxu0 0
      %1426 = vmatprep.subr.bf16.mxu0 0
      %1427 = vmatpush1.bf16.msra.mxu0 0
      %1428 = vmatprep.subr.bf16.mxu0 0
      %1429 = vmatpush1.bf16.msra.mxu0 0
      %1430 = vmatprep.subr.bf16.mxu0 0
      %1431 = vmatpush1.bf16.msra.mxu0 0
      %1432 = vmatprep.subr.bf16.mxu0 0
      %1433 = vmatpush1.bf16.msra.mxu0 0
      %1434 = vmatprep.subr.bf16.mxu0 0
      %1435 = vmatpush1.bf16.msra.mxu0 0
      %1436 = vmatprep.mubr.bf16.mxu0 0
      %1437 = vmatmul.mubr.bf16.gmra.mrb[0].mxu0 %v1402
      %v1438 = vpop.f32.mrb[0].mxu0
      %v1439 = vadd.f32 0.0, %v1438
      %v1440 = vpop.f32.mrb[0].mxu0
      %v1441 = vpop.f32.mrb[0].mxu0
      %v1442 = vadd.f32 0.0, %v1441
      %v1443 = vpop.f32.mrb[0].mxu0
      %1444 = vdwg.mxu0
      %1445 = vst.msk [vmem:[%s225] sm:$0xff] %vm320, %v359
      %1446 = vst.msk [vmem:[%s225 + $0x8] sm:$0xff] %vm320, %v362
      %1447 = vst.msk [vmem:[%s225 + $0x10] sm:$0xff] %vm320, %v431
      %1448 = vst.msk [vmem:[%s225 + $0x18] sm:$0xff] %vm320, %v434
      %1449 = vst.msk [vmem:[%s225 + $0x20] sm:$0xff] %vm320, %v503
      %1450 = vst.msk [vmem:[%s225 + $0x28] sm:$0xff] %vm320, %v506
      %1451 = vst.msk [vmem:[%s225 + $0x30] sm:$0xff] %vm320, %v575
      %1452 = vst.msk [vmem:[%s225 + $0x38] sm:$0xff] %vm320, %v578
      %1453 = vst.msk [vmem:[%s225 + $0x40] sm:$0xff] %vm320, %v647
      %1454 = vst.msk [vmem:[%s225 + $0x48] sm:$0xff] %vm320, %v650
      %1455 = vst.msk [vmem:[%s225 + $0x50] sm:$0xff] %vm320, %v719
      %1456 = vst.msk [vmem:[%s225 + $0x58] sm:$0xff] %vm320, %v722
      %1457 = vst.msk [vmem:[%s225 + $0x60] sm:$0xff] %vm320, %v791
      %1458 = vst.msk [vmem:[%s225 + $0x68] sm:$0xff] %vm320, %v794
      %1459 = vst.msk [vmem:[%s225 + $0x70] sm:$0xff] %vm320, %v863
      %1460 = vst.msk [vmem:[%s225 + $0x78] sm:$0xff] %vm320, %v866
      %1461 = vst.msk [vmem:[%s225 + $0x80] sm:$0xff] %vm320, %v935
      %1462 = vst.msk [vmem:[%s225 + $0x88] sm:$0xff] %vm320, %v938
      %1463 = vst.msk [vmem:[%s225 + $0x90] sm:$0xff] %vm320, %v1007
      %1464 = vst.msk [vmem:[%s225 + $0x98] sm:$0xff] %vm320, %v1010
      %1465 = vst.msk [vmem:[%s225 + $0xa0] sm:$0xff] %vm320, %v1079
      %1466 = vst.msk [vmem:[%s225 + $0xa8] sm:$0xff] %vm320, %v1082
      %1467 = vst.msk [vmem:[%s225 + $0xb0] sm:$0xff] %vm320, %v1151
      %1468 = vst.msk [vmem:[%s225 + $0xb8] sm:$0xff] %vm320, %v1154
      %1469 = vst.msk [vmem:[%s225 + $0xc0] sm:$0xff] %vm320, %v1223
      %1470 = vst.msk [vmem:[%s225 + $0xc8] sm:$0xff] %vm320, %v1226
      %1471 = vst.msk [vmem:[%s225 + $0xd0] sm:$0xff] %vm320, %v1295
      %1472 = vst.msk [vmem:[%s225 + $0xd8] sm:$0xff] %vm320, %v1298
      %1473 = vst.msk [vmem:[%s225 + $0xe0] sm:$0xff] %vm320, %v1367
      %1474 = vst.msk [vmem:[%s225 + $0xe8] sm:$0xff] %vm320, %v1370
      %1475 = vst.msk [vmem:[%s225 + $0xf0] sm:$0xff] %vm320, %v1439
      %1476 = vst.msk [vmem:[%s225 + $0xf8] sm:$0xff] %vm320, %v1442
      %s1477 = smul.u32 16, %s18
      %p1478 = scmp.lt.s32.totalorder %s17, 1
      %s1479 = scalar_select %p1478, %s17, 1
      %p1480 = scmp.lt.s32.totalorder %s1477, 31
      %s1481 = scalar_select %p1480, %s1477, 31
      %s1482 = smul.addr %s1481, 2
      %s1483 = smul.addr %s1479, 64
      %s1484 = sadd.s32 %s1482, %s1483
      %s1485 = smul.addr %s1484, 8
      %s1486 = scalar_lea.vmem %s2, %s1485
      // Predicated region
      $region29: #{_lambda_.4} parent=27 // pred_check
        %p1487 = pneg %p101
      $region30: #{_lambda_.4} parent=27 // pred_check_branch
        %1489 = sbr.rel (%p1487) target = $region32
      $region31: #{_lambda_.4} parent=27 // pred_region
        %s1490 = smul.u32 16, %s18
      $region32: #{_lambda_.4} parent=27 // pred_fallthru
        _
    $region28: #{_lambda_.4} parent=5 // pred_fallthru
      _
    %p1491 = scmp.le.s32.totalorder 2, %s8
    // Predicated region
    $region33: #{_lambda_.4} parent=5 // pred_check
      %p1492 = pneg %p1491
    $region34: #{_lambda_.4} parent=5 // pred_check_branch
      %1494 = sbr.rel (%p1492) target = $region36
    $region35: #{_lambda_.4} parent=5 // pred_region
      %s1495 = ssub.s32 %s8, 2
      // Predicated region
      $region37: #{_lambda_.4} parent=35 // pred_check
        %p1496 = pneg %p107
      $region38: #{_lambda_.4} parent=35 // pred_check_branch
        %1498 = sbr.rel (%p1496) target = $region40
      $region39: #{_lambda_.4} parent=35 // pred_region
        %s1499 = smul.u32 16, %s20
        %p1500 = scmp.lt.s32.totalorder %s19, 1
        %s1501 = scalar_select %p1500, %s19, 1
        %p1502 = scmp.lt.s32.totalorder %s1499, 31
        %s1503 = scalar_select %p1502, %s1499, 31
        %s1504 = smul.addr %s1503, 2
        %s1505 = smul.addr %s1501, 64
        %s1506 = sadd.s32 %s1504, %s1505
        %s1507 = smul.addr %s1506, 8
        %s1508 = scalar_lea.vmem %s2, %s1507
      $region40: #{_lambda_.4} parent=35 // pred_fallthru
        _
    $region36: #{_lambda_.4} parent=5 // pred_fallthru
      _
  $region6: #{_lambda_.4} parent=0 // loop_footer
    %s12 = sadd.s32 1, %s8
  $region7: #{_lambda_.4} parent=0 // loop_footer_branch
    %7 = sbr.rel target = $region3
  $region8: #{_lambda_.4} parent=0 // loop_exit
    _

// kernel: _lambda_.5
$region0: #{_lambda_.5}
  #allocation0 [shape = 'u32[]', space=smem, size = 0x4, offset = 0x4, fixed_abs, tag = 'smem constant byte address 0x4 - core index']
  #allocation1 [shape = 'u32[144,128]{1,0:T(1,128)}', space=vmem, size = 0x12000, scoped, tag = 'internal scratch']
  %s0 = inlined_call_operand.vmem [shape: f32[2,32,256], index: 0, kind: input, shape index: {}]
  %s1 = inlined_call_operand.vmem [shape: f32[2,32,256], index: 1, kind: input, shape index: {}]
  %s2 = inlined_call_operand.vmem [shape: f32[32,1], index: 2, kind: input, shape index: {}]
  %s3 = inlined_call_operand.vmem [shape: f32[32,1], index: 3, kind: input, shape index: {}]
  %s4 = inlined_call_operand.vmem [shape: bf16[32,32], index: 4, kind: input, shape index: {}]
  %s5 = inlined_call_operand.vmem [shape: f32[1,32], index: 5, kind: input, shape index: {}]
  %s6 = inlined_call_operand.hbm [shape: f32[2,256,32], index: 6, kind: output, shape index: {}]
  %s7 = sld [smem:[#allocation0]]
  $region57: #{_lambda_.5} parent=0
    _
  %s9 = ssub.s32 1, %s7
  %s10 = scalar_select 0, %s9, %s7
  $region1: #{_lambda_.5} parent=0
    #allocation2 [shape = 'u8[262144]{0}', space=vmem, size = 0x40000, scoped, tag = 'output window, operand 0']
    #allocation3 [shape = 's32[2]{0}', space=sflag, size = 0x8, scoped, tag = 'scoped memory for _lambda_.5']
    %11 = vsyncpa [#allocation3], 0
    %s12 = scalar_lea.sflag [#allocation3], 1
    %13 = vsyncpa %s12, 0
    loop: start=0, step=1, limit=4
    $region2: #{_lambda_.5} parent=1 // loop_pre_header
      _
    $region3: #{_lambda_.5} parent=1 // loop_header
      %s15 = sphi 0, %s19
      %p16 = scmp.ge.s32.totalorder %s15, 4
      %s22 = sphi 0, %s34
      %s23 = sphi 0, %s30
      %s24 = sphi 0, %s22
      %s25 = sphi 0, %s23
      %s26 = sphi 0, %s24
      %s27 = sphi 0, %s25
      %s39 = sphi 0, %s41
      %s42 = sphi 0, %s39
      %s43 = sphi 0, %s42
      %s59 = sphi 0, %s43
      %s67 = sphi 0, %s69
      %s70 = sphi 0, %s67
      %s71 = sphi 0, %s70
      %s87 = sphi 0, %s71
      %s91 = sphi 0, %s91
      %s93 = sphi 0, %s91
      %s94 = sphi 0, %s93
      %s108 = sphi 0, %s94
      %s112 = sphi 0, %s112
      %s114 = sphi 0, %s112
      %s115 = sphi 0, %s114
      %s129 = sphi 0, %s115
      %s133 = sphi 0, %s133
      %s135 = sphi 0, %s133
      %s136 = sphi 0, %s135
      %s150 = sphi 0, %s136
      %s154 = sphi 0, %s154
      %s156 = sphi 0, %s154
      %s157 = sphi 0, %s156
      %s171 = sphi 0, %s157
      %s179 = sphi 0, %s181
      %s182 = sphi 0, %s179
      %s183 = sphi 0, %s182
      %s199 = sphi 0, %s183
    $region4: #{_lambda_.5} parent=1 // loop_header_branch
      %18 = sbr.rel (%p16) target = $region8
    $region5: #{_lambda_.5} parent=1 // loop_body
      %s20 = ssub.s32 %s15, 1
      %s21 = ssub.s32 %s15, 2
      %s28 = sadd.s32 1, %s23
      %p29 = scmp.ge.s32.totalorder %s28, 1
      %s30 = scalar_select %p29, 0, %s28
      %s31 = sadd.s32 1, %s22
      %s32 = scalar_select %p29, %s31, %s22
      %p33 = scmp.ge.s32.totalorder %s32, 2
      %s34 = scalar_select %p33, 0, %s32
      %s35 = ssub.s32 %s22, %s34
      %s36 = ssub.s32 %s23, %s30
      %s37 = sor.u32 %s35, %s36
      %p38 = scmp.eq.s32.totalorder %s37, 0
      %s40 = sadd.s32 %s39, 1
      %s41 = scalar_select %p38, %s39, %s40
      %p44 = pneg %p38
      %p45 = scmp.eq.s32.totalorder %s15, 1
      %p46 = por %p44, %p45
      %p47 = scmp.ne.s32.totalorder %s39, %s42
      %p48 = scmp.eq.s32.totalorder %s15, 0
      %p49 = por %p47, %p48
      %p50 = scmp.ne.s32.totalorder %s39, %s42
      %p51 = scmp.eq.s32.totalorder %s20, 1
      %p52 = por %p50, %p51
      %p53 = scmp.ne.s32.totalorder %s42, %s43
      %p54 = scmp.eq.s32.totalorder %s20, 0
      %p55 = por %p53, %p54
      %p56 = scmp.ne.s32.totalorder %s42, %s43
      %p57 = scmp.eq.s32.totalorder %s21, 1
      %p58 = por %p56, %p57
      %p60 = scmp.ne.s32.totalorder %s43, %s59
      %p61 = scmp.eq.s32.totalorder %s21, 0
      %p62 = por %p60, %p61
      %s63 = ssub.s32 %s22, %s34
      %s64 = ssub.s32 %s23, %s30
      %s65 = sor.u32 %s63, %s64
      %p66 = scmp.eq.s32.totalorder %s65, 0
      %s68 = sadd.s32 %s67, 1
      %s69 = scalar_select %p66, %s67, %s68
      %p72 = pneg %p66
      %p73 = scmp.eq.s32.totalorder %s15, 1
      %p74 = por %p72, %p73
      %p75 = scmp.ne.s32.totalorder %s67, %s70
      %p76 = scmp.eq.s32.totalorder %s15, 0
      %p77 = por %p75, %p76
      %p78 = scmp.ne.s32.totalorder %s67, %s70
      %p79 = scmp.eq.s32.totalorder %s20, 1
      %p80 = por %p78, %p79
      %p81 = scmp.ne.s32.totalorder %s70, %s71
      %p82 = scmp.eq.s32.totalorder %s20, 0
      %p83 = por %p81, %p82
      %p84 = scmp.ne.s32.totalorder %s70, %s71
      %p85 = scmp.eq.s32.totalorder %s21, 1
      %p86 = por %p84, %p85
      %p88 = scmp.ne.s32.totalorder %s71, %s87
      %p89 = scmp.eq.s32.totalorder %s21, 0
      %p90 = por %p88, %p89
      %s92 = sadd.s32 %s91, 1
      %p95 = scmp.eq.s32.totalorder %s15, 1
      %p96 = scmp.ne.s32.totalorder %s91, %s93
      %p97 = scmp.eq.s32.totalorder %s15, 0
      %p98 = por %p96, %p97
      %p99 = scmp.ne.s32.totalorder %s91, %s93
      %p100 = scmp.eq.s32.totalorder %s20, 1
      %p101 = por %p99, %p100
      %p102 = scmp.ne.s32.totalorder %s93, %s94
      %p103 = scmp.eq.s32.totalorder %s20, 0
      %p104 = por %p102, %p103
      %p105 = scmp.ne.s32.totalorder %s93, %s94
      %p106 = scmp.eq.s32.totalorder %s21, 1
      %p107 = por %p105, %p106
      %p109 = scmp.ne.s32.totalorder %s94, %s108
      %p110 = scmp.eq.s32.totalorder %s21, 0
      %p111 = por %p109, %p110
      %s113 = sadd.s32 %s112, 1
      %p116 = scmp.eq.s32.totalorder %s15, 1
      %p117 = scmp.ne.s32.totalorder %s112, %s114
      %p118 = scmp.eq.s32.totalorder %s15, 0
      %p119 = por %p117, %p118
      %p120 = scmp.ne.s32.totalorder %s112, %s114
      %p121 = scmp.eq.s32.totalorder %s20, 1
      %p122 = por %p120, %p121
      %p123 = scmp.ne.s32.totalorder %s114, %s115
      %p124 = scmp.eq.s32.totalorder %s20, 0
      %p125 = por %p123, %p124
      %p126 = scmp.ne.s32.totalorder %s114, %s115
      %p127 = scmp.eq.s32.totalorder %s21, 1
      %p128 = por %p126, %p127
      %p130 = scmp.ne.s32.totalorder %s115, %s129
      %p131 = scmp.eq.s32.totalorder %s21, 0
      %p132 = por %p130, %p131
      %s134 = sadd.s32 %s133, 1
      %p137 = scmp.eq.s32.totalorder %s15, 1
      %p138 = scmp.ne.s32.totalorder %s133, %s135
      %p139 = scmp.eq.s32.totalorder %s15, 0
      %p140 = por %p138, %p139
      %p141 = scmp.ne.s32.totalorder %s133, %s135
      %p142 = scmp.eq.s32.totalorder %s20, 1
      %p143 = por %p141, %p142
      %p144 = scmp.ne.s32.totalorder %s135, %s136
      %p145 = scmp.eq.s32.totalorder %s20, 0
      %p146 = por %p144, %p145
      %p147 = scmp.ne.s32.totalorder %s135, %s136
      %p148 = scmp.eq.s32.totalorder %s21, 1
      %p149 = por %p147, %p148
      %p151 = scmp.ne.s32.totalorder %s136, %s150
      %p152 = scmp.eq.s32.totalorder %s21, 0
      %p153 = por %p151, %p152
      %s155 = sadd.s32 %s154, 1
      %p158 = scmp.eq.s32.totalorder %s15, 1
      %p159 = scmp.ne.s32.totalorder %s154, %s156
      %p160 = scmp.eq.s32.totalorder %s15, 0
      %p161 = por %p159, %p160
      %p162 = scmp.ne.s32.totalorder %s154, %s156
      %p163 = scmp.eq.s32.totalorder %s20, 1
      %p164 = por %p162, %p163
      %p165 = scmp.ne.s32.totalorder %s156, %s157
      %p166 = scmp.eq.s32.totalorder %s20, 0
      %p167 = por %p165, %p166
      %p168 = scmp.ne.s32.totalorder %s156, %s157
      %p169 = scmp.eq.s32.totalorder %s21, 1
      %p170 = por %p168, %p169
      %p172 = scmp.ne.s32.totalorder %s157, %s171
      %p173 = scmp.eq.s32.totalorder %s21, 0
      %p174 = por %p172, %p173
      %s175 = ssub.s32 %s22, %s34
      %s176 = ssub.s32 %s23, %s30
      %s177 = sor.u32 %s175, %s176
      %p178 = scmp.eq.s32.totalorder %s177, 0
      %s180 = sadd.s32 %s179, 1
      %s181 = scalar_select %p178, %s179, %s180
      %p184 = pneg %p178
      %p185 = scmp.eq.s32.totalorder %s15, 1
      %p186 = por %p184, %p185
      %p187 = scmp.ne.s32.totalorder %s179, %s182
      %p188 = scmp.eq.s32.totalorder %s15, 0
      %p189 = por %p187, %p188
      %p190 = scmp.ne.s32.totalorder %s179, %s182
      %p191 = scmp.eq.s32.totalorder %s20, 1
      %p192 = por %p190, %p191
      %p193 = scmp.ne.s32.totalorder %s182, %s183
      %p194 = scmp.eq.s32.totalorder %s20, 0
      %p195 = por %p193, %p194
      %p196 = scmp.ne.s32.totalorder %s182, %s183
      %p197 = scmp.eq.s32.totalorder %s21, 1
      %p198 = por %p196, %p197
      %p200 = scmp.ne.s32.totalorder %s183, %s199
      %p201 = scmp.eq.s32.totalorder %s21, 0
      %p202 = por %p200, %p201
      %p203 = scmp.le.s32.totalorder 1, %s15
      %p204 = scmp.lt.s32.totalorder %s15, 3
      %p205 = pnand %p203, %p204
      %p206 = pneg %p205
      // Predicated region
      $region9: #{_lambda_.5} parent=5 // pred_check
        _
      $region10: #{_lambda_.5} parent=5 // pred_check_branch
        %208 = sbr.rel (%p205) target = $region12
      $region11: #{_lambda_.5} parent=5 // pred_region
        %s209 = ssub.s32 %s15, 1
        // Predicated region
        $region13: #{_lambda_.5} parent=11 // pred_check
          %p210 = pneg %p104
        $region14: #{_lambda_.5} parent=11 // pred_check_branch
          %212 = sbr.rel (%p210) target = $region16
        $region15: #{_lambda_.5} parent=11 // pred_region
          _
        $region16: #{_lambda_.5} parent=11 // pred_fallthru
          _
        // Predicated region
        $region17: #{_lambda_.5} parent=11 // pred_check
          %p213 = pneg %p125
        $region18: #{_lambda_.5} parent=11 // pred_check_branch
          %215 = sbr.rel (%p213) target = $region20
        $region19: #{_lambda_.5} parent=11 // pred_region
          _
        $region20: #{_lambda_.5} parent=11 // pred_fallthru
          _
        // Predicated region
        $region21: #{_lambda_.5} parent=11 // pred_check
          %p216 = pneg %p146
        $region22: #{_lambda_.5} parent=11 // pred_check_branch
          %218 = sbr.rel (%p216) target = $region24
        $region23: #{_lambda_.5} parent=11 // pred_region
          _
        $region24: #{_lambda_.5} parent=11 // pred_fallthru
          _
        // Predicated region
        $region25: #{_lambda_.5} parent=11 // pred_check
          %p219 = pneg %p167
        $region26: #{_lambda_.5} parent=11 // pred_check_branch
          %221 = sbr.rel (%p219) target = $region28
        $region27: #{_lambda_.5} parent=11 // pred_region
          _
        $region28: #{_lambda_.5} parent=11 // pred_fallthru
          _
      $region12: #{_lambda_.5} parent=5 // pred_fallthru
        _
      %p222 = scmp.lt.s32.totalorder %s15, 2
      // Predicated region
      $region29: #{_lambda_.5} parent=5 // pred_check
        %p223 = pneg %p222
      $region30: #{_lambda_.5} parent=5 // pred_check_branch
        %225 = sbr.rel (%p223) target = $region32
      $region31: #{_lambda_.5} parent=5 // pred_region
        // Predicated region
        $region33: #{_lambda_.5} parent=31 // pred_check
          %p226 = pneg %p49
        $region34: #{_lambda_.5} parent=31 // pred_check_branch
          %228 = sbr.rel (%p226) target = $region36
        $region35: #{_lambda_.5} parent=31 // pred_region
          %s229 = smul.u32 2, %s23
          %p230 = scmp.lt.s32.totalorder %s22, 1
          %s231 = scalar_select %p230, %s22, 1
          %p232 = scmp.lt.s32.totalorder %s229, 1
          %s233 = scalar_select %p232, %s229, 1
          %s234 = smul.addr %s231, 8
          %s235 = sadd.s32 %s233, %s234
          %s236 = smul.addr %s235, 8
          %s237 = scalar_lea.vmem %s0, %s236
          %s238 = smul.u32 2, %s23
        $region36: #{_lambda_.5} parent=31 // pred_fallthru
          _
        // Predicated region
        $region37: #{_lambda_.5} parent=31 // pred_check
          %p239 = pneg %p77
        $region38: #{_lambda_.5} parent=31 // pred_check_branch
          %241 = sbr.rel (%p239) target = $region40
        $region39: #{_lambda_.5} parent=31 // pred_region
          %s242 = smul.u32 2, %s23
          %p243 = scmp.lt.s32.totalorder %s22, 1
          %s244 = scalar_select %p243, %s22, 1
          %p245 = scmp.lt.s32.totalorder %s242, 1
          %s246 = scalar_select %p245, %s242, 1
          %s247 = smul.addr %s244, 8
          %s248 = sadd.s32 %s246, %s247
          %s249 = smul.addr %s248, 8
          %s250 = scalar_lea.vmem %s1, %s249
          %s251 = smul.u32 2, %s23
        $region40: #{_lambda_.5} parent=31 // pred_fallthru
          _
      $region32: #{_lambda_.5} parent=5 // pred_fallthru
        _
      %p252 = scmp.le.s32.totalorder 1, %s15
      %p253 = scmp.lt.s32.totalorder %s15, 3
      %p254 = pnand %p252, %p253
      %p255 = pneg %p254
      // Predicated region
      $region41: #{_lambda_.5} parent=5 // pred_check
        _
      $region42: #{_lambda_.5} parent=5 // pred_check_branch
        %257 = sbr.rel (%p254) target = $region44
      $region43: #{_lambda_.5} parent=5 // pred_region
        %s258 = ssub.s32 %s15, 1
        %s259 = smul.u32 2, %s25
        %p260 = scmp.lt.s32.totalorder %s24, 1
        %s261 = scalar_select %p260, %s24, 1
        %p262 = scmp.lt.s32.totalorder %s259, 1
        %s263 = scalar_select %p262, %s259, 1
        %s264 = smul.addr %s261, 8
        %s265 = sadd.s32 %s263, %s264
        %s266 = smul.addr %s265, 8
        %s267 = scalar_lea.vmem %s0, %s266
        %p268 = pneg %p55
        %p269 = pneg %p52
        %s270 = smul.u32 2, %s25
        %p271 = scmp.lt.s32.totalorder %s24, 1
        %s272 = scalar_select %p271, %s24, 1
        %p273 = scmp.lt.s32.totalorder %s270, 1
        %s274 = scalar_select %p273, %s270, 1
        %s275 = smul.addr %s272, 8
        %s276 = sadd.s32 %s274, %s275
        %s277 = smul.addr %s276, 8
        %s278 = scalar_lea.vmem %s1, %s277
        %p279 = pneg %p83
        %p280 = pneg %p80
        %p281 = pneg %p104
        %p282 = pneg %p101
        %p283 = pneg %p125
        %p284 = pneg %p122
        %p285 = pneg %p146
        %p286 = pneg %p143
        %p287 = pneg %p167
        %p288 = pneg %p164
        %p289 = pneg %p195
        %p290 = pneg %p192
        %s291 = sand.u32 %s182, 1
        %s292 = scalar_lea.sflag [#allocation3], %s291
        %s293 = sand.u32 %s182, 1
        %s294 = smul.addr %s293, 256
        %s295 = scalar_lea.vmem [#allocation2], %s294
        %s296 = smul.u32 2, %s25
        %p297 = scmp.lt.s32.totalorder %s24, 1
        %s298 = scalar_select %p297, %s24, 1
        %p299 = scmp.lt.s32.totalorder %s296, 1
        %s300 = scalar_select %p299, %s296, 1
        %s301 = smul.addr %s298, 8
        %s302 = sadd.s32 %s300, %s301
        %s303 = smul.addr %s302, 8
        %s304 = scalar_lea.vmem %s0, %s303
        %s305 = smul.u32 2, %s25
        %s306 = smul.u32 2, %s25
        %p307 = scmp.lt.s32.totalorder %s24, 1
        %s308 = scalar_select %p307, %s24, 1
        %p309 = scmp.lt.s32.totalorder %s306, 1
        %s310 = scalar_select %p309, %s306, 1
        %s311 = smul.addr %s308, 8
        %s312 = sadd.s32 %s310, %s311
        %s313 = smul.addr %s312, 8
        %s314 = scalar_lea.vmem %s1, %s313
        %s315 = smul.u32 2, %s25
        %s316 = smul.u32 32, %s25
        %v318 = vld [vmem:[%s304] sm:$0xff]
        %v319 = vld [vmem:[%s304 + $0x8] sm:$0xff]
        %v320 = vld [vmem:[%s304 + $0x10] sm:$0xff]
        %v321 = vld [vmem:[%s304 + $0x18] sm:$0xff]
        %v322 = vld [vmem:[%s304 + $0x20] sm:$0xff]
        %v323 = vld [vmem:[%s304 + $0x28] sm:$0xff]
        %v324 = vld [vmem:[%s304 + $0x30] sm:$0xff]
        %v325 = vld [vmem:[%s304 + $0x38] sm:$0xff]
        %v326 = vadd.f32 %v318, %v320
        %v327 = vadd.f32 %v326, %v322
        %v328 = vadd.f32 %v327, %v324
        %v329 = vrot.slane %v328, 4
        %v330 = vadd.f32 %v328, %v329
        %v331 = vrot.slane %v330, 2
        %v332 = vadd.f32 %v330, %v331
        %v333 = vrot.slane %v332, 1
        %v334 = vadd.f32 %v332, %v333
        %v335 = vadd.f32 %v319, %v321
        %v336 = vadd.f32 %v335, %v323
        %v337 = vadd.f32 %v336, %v325
        %v338 = vrot.slane %v337, 4
        %v339 = vadd.f32 %v337, %v338
        %v340 = vrot.slane %v339, 2
        %v341 = vadd.f32 %v339, %v340
        %v342 = vrot.slane %v341, 1
        %v343 = vadd.f32 %v341, %v342
        %v344 = vrcp.pop 32.0
        %v345 = vmul.f32 %v334, %v344
        %v346 = vmul.f32 %v343, %v344
        %v347 = vsub.f32 %v318, %v345
        %v348 = vsub.f32 %v319, %v346
        %v349 = vsub.f32 %v320, %v345
        %v350 = vsub.f32 %v321, %v346
        %v351 = vsub.f32 %v322, %v345
        %v352 = vsub.f32 %v323, %v346
        %v353 = vsub.f32 %v324, %v345
        %v354 = vsub.f32 %v325, %v346
        %v355 = vmul.f32 %v347, %v347
        %v356 = vmul.f32 %v348, %v348
        %v357 = vmul.f32 %v349, %v349
        %v358 = vmul.f32 %v350, %v350
        %v359 = vmul.f32 %v351, %v351
        %v360 = vmul.f32 %v352, %v352
        %v361 = vmul.f32 %v353, %v353
        %v362 = vmul.f32 %v354, %v354
        %v363 = vadd.f32 %v355, %v357
        %v364 = vadd.f32 %v363, %v359
        %v365 = vadd.f32 %v364, %v361
        %v366 = vrot.slane %v365, 4
        %v367 = vadd.f32 %v365, %v366
        %v368 = vrot.slane %v367, 2
        %v369 = vadd.f32 %v367, %v368
        %v370 = vrot.slane %v369, 1
        %v371 = vadd.f32 %v369, %v370
        %v372 = vadd.f32 %v356, %v358
        %v373 = vadd.f32 %v372, %v360
        %v374 = vadd.f32 %v373, %v362
        %v375 = vrot.slane %v374, 4
        %v376 = vadd.f32 %v374, %v375
        %v377 = vrot.slane %v376, 2
        %v378 = vadd.f32 %v376, %v377
        %v379 = vrot.slane %v378, 1
        %v380 = vadd.f32 %v378, %v379
        %v381 = vmul.f32 %v371, %v344
        %v382 = vmul.f32 %v380, %v344
        %v383 = vadd.f32 %v381, 1e-05
        %v384 = vadd.f32 %v382, 1e-05
        %v385 = vrsqrt.pop %v383
        %v386 = vrsqrt.pop %v384
        %v387 = vmul.f32 %v347, %v385
        %v388 = vmul.f32 %v348, %v386
        %v389 = vmul.f32 %v349, %v385
        %v390 = vmul.f32 %v350, %v386
        %v391 = vmul.f32 %v351, %v385
        %v392 = vmul.f32 %v352, %v386
        %v393 = vmul.f32 %v353, %v385
        %v394 = vmul.f32 %v354, %v386
        %v395 = vld [vmem:[%s2] sm:$0xff]
        %v396 = vld [vmem:[%s2 + $0x8] sm:$0xff]
        %v397 = vld [vmem:[%s2 + $0x10] sm:$0xff]
        %v398 = vld [vmem:[%s2 + $0x18] sm:$0xff]
        %400 = vset.pattern.permute.xlu0 0
        %401 = vperm.xlu0 %400, %v395
        %v402 = vpop.permute.xlu0 %401
        %405 = vset.pattern.permute.xlu0 0
        %406 = vperm.xlu0 %405, %v396
        %v407 = vpop.permute.xlu0 %406
        %410 = vset.pattern.permute.xlu0 0
        %411 = vperm.xlu0 %410, %v397
        %v412 = vpop.permute.xlu0 %411
        %415 = vset.pattern.permute.xlu0 0
        %416 = vperm.xlu0 %415, %v398
        %v417 = vpop.permute.xlu0 %416
        %v419 = vmul.f32 %v387, %v402
        %v420 = vmul.f32 %v388, %v402
        %v421 = vmul.f32 %v389, %v407
        %v422 = vmul.f32 %v390, %v407
        %v423 = vmul.f32 %v391, %v412
        %v424 = vmul.f32 %v392, %v412
        %v425 = vmul.f32 %v393, %v417
        %v426 = vmul.f32 %v394, %v417
        %v427 = vld [vmem:[%s3] sm:$0xff]
        %v428 = vld [vmem:[%s3 + $0x8] sm:$0xff]
        %v429 = vld [vmem:[%s3 + $0x10] sm:$0xff]
        %v430 = vld [vmem:[%s3 + $0x18] sm:$0xff]
        %432 = vset.pattern.permute.xlu0 0
        %433 = vperm.xlu0 %432, %v427
        %v434 = vpop.permute.xlu0 %433
        %437 = vset.pattern.permute.xlu0 0
        %438 = vperm.xlu0 %437, %v428
        %v439 = vpop.permute.xlu0 %438
        %442 = vset.pattern.permute.xlu0 0
        %443 = vperm.xlu0 %442, %v429
        %v444 = vpop.permute.xlu0 %443
        %447 = vset.pattern.permute.xlu0 0
        %448 = vperm.xlu0 %447, %v430
        %v449 = vpop.permute.xlu0 %448
        %v451 = vadd.f32 %v419, %v434
        %v452 = vadd.f32 %v420, %v434
        %v453 = vadd.f32 %v421, %v439
        %v454 = vadd.f32 %v422, %v439
        %v455 = vadd.f32 %v423, %v444
        %v456 = vadd.f32 %v424, %v444
        %v457 = vadd.f32 %v425, %v449
        %v458 = vadd.f32 %v426, %v449
        %v459 = vld [vmem:[%s314] sm:$0xff]
        %v460 = vld [vmem:[%s314 + $0x8] sm:$0xff]
        %v461 = vld [vmem:[%s314 + $0x10] sm:$0xff]
        %v462 = vld [vmem:[%s314 + $0x18] sm:$0xff]
        %v463 = vld [vmem:[%s314 + $0x20] sm:$0xff]
        %v464 = vld [vmem:[%s314 + $0x28] sm:$0xff]
        %v465 = vld [vmem:[%s314 + $0x30] sm:$0xff]
        %v466 = vld [vmem:[%s314 + $0x38] sm:$0xff]
        %v467 = vmul.f32 %v451, %v459
        %v468 = vmul.f32 %v452, %v460
        %v469 = vmul.f32 %v453, %v461
        %v470 = vmul.f32 %v454, %v462
        %v471 = vmul.f32 %v455, %v463
        %v472 = vmul.f32 %v456, %v464
        %v473 = vmul.f32 %v457, %v465
        %v474 = vmul.f32 %v458, %v466
        %v475 = vpack.c.bf16 %v469, %v467
        %v476 = vpack.c.bf16 %v470, %v468
        %v477 = vpack.c.bf16 %v473, %v471
        %v478 = vpack.c.bf16 %v474, %v472
        %v479 = vld [vmem:[%s4] sm:$0xf]
        %v480 = vld [vmem:[%s4 + $0x4] sm:$0xf]
        %v481 = vld [vmem:[%s4 + $0x8] sm:$0xf]
        %v482 = vld [vmem:[%s4 + $0xc] sm:$0xf]
        %v483 = vld [vmem:[%s5] sm:$0x1]
        %v485 = vlaneseq
        %v486 = vshrl.u32 %v485, 7
        %v487 = vsub.s32 0, %v486
        %v488 = vrot.slane %v483, %v487
        %490 = vxpose.xlu0.c.b16.start [1/8] %v475, 128
        %491 = vxpose.xlu0.c.b16.cont [2/8] %v477, 128
        %492 = vxpose.xlu0.c.b16.cont [3/8] 0, 128
        %493 = vxpose.xlu0.c.b16.cont [4/8] 0, 128
        %494 = vxpose.xlu0.c.b16.cont [5/8] 0, 128
        %495 = vxpose.xlu0.c.b16.cont [6/8] 0, 128
        %496 = vxpose.xlu0.c.b16.cont [7/8] 0, 128
        %497 = vxpose.xlu0.c.b16.end [8/8] 0, 128
        %v498 = vpop.trf.xlu0
        %v499 = vpop.trf.xlu0
        %v500 = vpop.trf.xlu0
        %v501 = vpop.trf.xlu0
        %v502 = vpop.trf.xlu0
        %v503 = vpop.trf.xlu0
        %v504 = vpop.trf.xlu0
        %v505 = vpop.trf.xlu0
        %506 = vxpose.xlu0.c.b16.start [1/8] %v476, 128
        %507 = vxpose.xlu0.c.b16.cont [2/8] %v478, 128
        %508 = vxpose.xlu0.c.b16.cont [3/8] 0, 128
        %509 = vxpose.xlu0.c.b16.cont [4/8] 0, 128
        %510 = vxpose.xlu0.c.b16.cont [5/8] 0, 128
        %511 = vxpose.xlu0.c.b16.cont [6/8] 0, 128
        %512 = vxpose.xlu0.c.b16.cont [7/8] 0, 128
        %513 = vxpose.xlu0.c.b16.end [8/8] 0, 128
        %v514 = vpop.trf.xlu0
        %v515 = vpop.trf.xlu0
        %v516 = vpop.trf.xlu0
        %v517 = vpop.trf.xlu0
        %v518 = vpop.trf.xlu0
        %v519 = vpop.trf.xlu0
        %v520 = vpop.trf.xlu0
        %v521 = vpop.trf.xlu0
        %v526 = vunpack.c.l.b16 %v479
        %v527 = vunpack.c.l.b16 %v480
        %v528 = vunpack.c.l.b16 %v481
        %v529 = vunpack.c.l.b16 %v482
        %v530 = vpack.c.b16 %v527, %v526
        %v531 = vpack.c.b16 %v529, %v528
        %vm534 = vcmask 261120
        %v536 = vsel %vm534, %v498, 0
        %v539 = vsel %vm534, %v499, 0
        %v542 = vsel %vm534, %v500, 0
        %v545 = vsel %vm534, %v501, 0
        %v548 = vsel %vm534, %v502, 0
        %v551 = vsel %vm534, %v503, 0
        %v554 = vsel %vm534, %v504, 0
        %v557 = vsel %vm534, %v505, 0
        %v560 = vsel %vm534, %v514, 0
        %v563 = vsel %vm534, %v515, 0
        %v566 = vsel %vm534, %v516, 0
        %v569 = vsel %vm534, %v517, 0
        %v572 = vsel %vm534, %v518, 0
        %v575 = vsel %vm534, %v519, 0
        %v578 = vsel %vm534, %v520, 0
        %v581 = vsel %vm534, %v521, 0
        %583 = vmatprep.subr.bf16.mxu0 0
        %584 = vmatpush1.bf16.msra.mxu0 %v530
        %585 = vmatprep.subr.bf16.mxu0 0
        %586 = vmatpush1.bf16.msra.mxu0 %v531
        %587 = vmatprep.subr.bf16.mxu0 0
        %588 = vmatpush1.bf16.msra.mxu0 0
        %589 = vmatprep.subr.bf16.mxu0 0
        %590 = vmatpush1.bf16.msra.mxu0 0
        %591 = vmatprep.subr.bf16.mxu0 0
        %592 = vmatpush1.bf16.msra.mxu0 0
        %593 = vmatprep.subr.bf16.mxu0 0
        %594 = vmatpush1.bf16.msra.mxu0 0
        %595 = vmatprep.subr.bf16.mxu0 0
        %596 = vmatpush1.bf16.msra.mxu0 0
        %597 = vmatprep.subr.bf16.mxu0 0
        %598 = vmatpush1.bf16.msra.mxu0 0
        %599 = vmatprep.subr.bf16.mxu0 0
        %600 = vmatpush1.bf16.msra.mxu0 0
        %601 = vmatprep.subr.bf16.mxu0 0
        %602 = vmatpush1.bf16.msra.mxu0 0
        %603 = vmatprep.subr.bf16.mxu0 0
        %604 = vmatpush1.bf16.msra.mxu0 0
        %605 = vmatprep.subr.bf16.mxu0 0
        %606 = vmatpush1.bf16.msra.mxu0 0
        %607 = vmatprep.subr.bf16.mxu0 0
        %608 = vmatpush1.bf16.msra.mxu0 0
        %609 = vmatprep.subr.bf16.mxu0 0
        %610 = vmatpush1.bf16.msra.mxu0 0
        %611 = vmatprep.subr.bf16.mxu0 0
        %612 = vmatpush1.bf16.msra.mxu0 0
        %613 = vmatprep.subr.bf16.mxu0 0
        %614 = vmatpush1.bf16.msra.mxu0 0
        %615 = vmatprep.mubr.bf16.mxu0 0
        %616 = vmatmul.mubr.bf16.gmra.mrb[0].mxu0 %v536
        %v617 = vpop.f32.mrb[0].mxu0
        %v618 = vadd.f32 %v488, %v617
        %v619 = vpop.f32.mrb[0].mxu0
        %v620 = vpop.f32.mrb[0].mxu0
        %v621 = vadd.f32 %v488, %v620
        %v622 = vpop.f32.mrb[0].mxu0
        %623 = vmatprep.mubr.bf16.mxu0 0
        %624 = vmatmul.mubr.bf16.gmra.mrb[0].mxu0 %v539
        %v625 = vpop.f32.mrb[0].mxu0
        %v626 = vadd.f32 %v488, %v625
        %v627 = vpop.f32.mrb[0].mxu0
        %v628 = vpop.f32.mrb[0].mxu0
        %v629 = vadd.f32 %v488, %v628
        %v630 = vpop.f32.mrb[0].mxu0
        %631 = vmatprep.mubr.bf16.mxu0 0
        %632 = vmatmul.mubr.bf16.gmra.mrb[0].mxu0 %v542
        %v633 = vpop.f32.mrb[0].mxu0
        %v634 = vadd.f32 %v488, %v633
        %v635 = vpop.f32.mrb[0].mxu0
        %v636 = vpop.f32.mrb[0].mxu0
        %v637 = vadd.f32 %v488, %v636
        %v638 = vpop.f32.mrb[0].mxu0
        %639 = vmatprep.mubr.bf16.mxu0 0
        %640 = vmatmul.mubr.bf16.gmra.mrb[0].mxu0 %v545
        %v641 = vpop.f32.mrb[0].mxu0
        %v642 = vadd.f32 %v488, %v641
        %v643 = vpop.f32.mrb[0].mxu0
        %v644 = vpop.f32.mrb[0].mxu0
        %v645 = vadd.f32 %v488, %v644
        %v646 = vpop.f32.mrb[0].mxu0
        %647 = vmatprep.mubr.bf16.mxu0 0
        %648 = vmatmul.mubr.bf16.gmra.mrb[0].mxu0 %v548
        %v649 = vpop.f32.mrb[0].mxu0
        %v650 = vadd.f32 %v488, %v649
        %v651 = vpop.f32.mrb[0].mxu0
        %v652 = vpop.f32.mrb[0].mxu0
        %v653 = vadd.f32 %v488, %v652
        %v654 = vpop.f32.mrb[0].mxu0
        %655 = vmatprep.mubr.bf16.mxu0 0
        %656 = vmatmul.mubr.bf16.gmra.mrb[0].mxu0 %v551
        %v657 = vpop.f32.mrb[0].mxu0
        %v658 = vadd.f32 %v488, %v657
        %v659 = vpop.f32.mrb[0].mxu0
        %v660 = vpop.f32.mrb[0].mxu0
        %v661 = vadd.f32 %v488, %v660
        %v662 = vpop.f32.mrb[0].mxu0
        %663 = vmatprep.mubr.bf16.mxu0 0
        %664 = vmatmul.mubr.bf16.gmra.mrb[0].mxu0 %v554
        %v665 = vpop.f32.mrb[0].mxu0
        %v666 = vadd.f32 %v488, %v665
        %v667 = vpop.f32.mrb[0].mxu0
        %v668 = vpop.f32.mrb[0].mxu0
        %v669 = vadd.f32 %v488, %v668
        %v670 = vpop.f32.mrb[0].mxu0
        %671 = vmatprep.mubr.bf16.mxu0 0
        %672 = vmatmul.mubr.bf16.gmra.mrb[0].mxu0 %v557
        %v673 = vpop.f32.mrb[0].mxu0
        %v674 = vadd.f32 %v488, %v673
        %v675 = vpop.f32.mrb[0].mxu0
        %v676 = vpop.f32.mrb[0].mxu0
        %v677 = vadd.f32 %v488, %v676
        %v678 = vpop.f32.mrb[0].mxu0
        %679 = vmatprep.mubr.bf16.mxu0 0
        %680 = vmatmul.mubr.bf16.gmra.mrb[0].mxu0 %v560
        %v681 = vpop.f32.mrb[0].mxu0
        %v682 = vadd.f32 %v488, %v681
        %v683 = vpop.f32.mrb[0].mxu0
        %v684 = vpop.f32.mrb[0].mxu0
        %v685 = vadd.f32 %v488, %v684
        %v686 = vpop.f32.mrb[0].mxu0
        %687 = vmatprep.mubr.bf16.mxu0 0
        %688 = vmatmul.mubr.bf16.gmra.mrb[0].mxu0 %v563
        %v689 = vpop.f32.mrb[0].mxu0
        %v690 = vadd.f32 %v488, %v689
        %v691 = vpop.f32.mrb[0].mxu0
        %v692 = vpop.f32.mrb[0].mxu0
        %v693 = vadd.f32 %v488, %v692
        %v694 = vpop.f32.mrb[0].mxu0
        %695 = vmatprep.mubr.bf16.mxu0 0
        %696 = vmatmul.mubr.bf16.gmra.mrb[0].mxu0 %v566
        %v697 = vpop.f32.mrb[0].mxu0
        %v698 = vadd.f32 %v488, %v697
        %v699 = vpop.f32.mrb[0].mxu0
        %v700 = vpop.f32.mrb[0].mxu0
        %v701 = vadd.f32 %v488, %v700
        %v702 = vpop.f32.mrb[0].mxu0
        %703 = vmatprep.mubr.bf16.mxu0 0
        %704 = vmatmul.mubr.bf16.gmra.mrb[0].mxu0 %v569
        %v705 = vpop.f32.mrb[0].mxu0
        %v706 = vadd.f32 %v488, %v705
        %v707 = vpop.f32.mrb[0].mxu0
        %v708 = vpop.f32.mrb[0].mxu0
        %v709 = vadd.f32 %v488, %v708
        %v710 = vpop.f32.mrb[0].mxu0
        %711 = vmatprep.mubr.bf16.mxu0 0
        %712 = vmatmul.mubr.bf16.gmra.mrb[0].mxu0 %v572
        %v713 = vpop.f32.mrb[0].mxu0
        %v714 = vadd.f32 %v488, %v713
        %v715 = vpop.f32.mrb[0].mxu0
        %v716 = vpop.f32.mrb[0].mxu0
        %v717 = vadd.f32 %v488, %v716
        %v718 = vpop.f32.mrb[0].mxu0
        %719 = vmatprep.mubr.bf16.mxu0 0
        %720 = vmatmul.mubr.bf16.gmra.mrb[0].mxu0 %v575
        %v721 = vpop.f32.mrb[0].mxu0
        %v722 = vadd.f32 %v488, %v721
        %v723 = vpop.f32.mrb[0].mxu0
        %v724 = vpop.f32.mrb[0].mxu0
        %v725 = vadd.f32 %v488, %v724
        %v726 = vpop.f32.mrb[0].mxu0
        %727 = vmatprep.mubr.bf16.mxu0 0
        %728 = vmatmul.mubr.bf16.gmra.mrb[0].mxu0 %v578
        %v729 = vpop.f32.mrb[0].mxu0
        %v730 = vadd.f32 %v488, %v729
        %v731 = vpop.f32.mrb[0].mxu0
        %v732 = vpop.f32.mrb[0].mxu0
        %v733 = vadd.f32 %v488, %v732
        %v734 = vpop.f32.mrb[0].mxu0
        %735 = vmatprep.mubr.bf16.mxu0 0
        %736 = vmatmul.mubr.bf16.gmra.mrb[0].mxu0 %v581
        %v737 = vpop.f32.mrb[0].mxu0
        %v738 = vadd.f32 %v488, %v737
        %v739 = vpop.f32.mrb[0].mxu0
        %v740 = vpop.f32.mrb[0].mxu0
        %v741 = vadd.f32 %v488, %v740
        %v742 = vpop.f32.mrb[0].mxu0
        %743 = vdwg.mxu0
        %744 = vst.msk [vmem:[%s295] sm:$0xff] %vm534, %v618
        %745 = vst.msk [vmem:[%s295 + $0x8] sm:$0xff] %vm534, %v621
        %746 = vst.msk [vmem:[%s295 + $0x10] sm:$0xff] %vm534, %v626
        %747 = vst.msk [vmem:[%s295 + $0x18] sm:$0xff] %vm534, %v629
        %748 = vst.msk [vmem:[%s295 + $0x20] sm:$0xff] %vm534, %v634
        %749 = vst.msk [vmem:[%s295 + $0x28] sm:$0xff] %vm534, %v637
        %750 = vst.msk [vmem:[%s295 + $0x30] sm:$0xff] %vm534, %v642
        %751 = vst.msk [vmem:[%s295 + $0x38] sm:$0xff] %vm534, %v645
        %752 = vst.msk [vmem:[%s295 + $0x40] sm:$0xff] %vm534, %v650
        %753 = vst.msk [vmem:[%s295 + $0x48] sm:$0xff] %vm534, %v653
        %754 = vst.msk [vmem:[%s295 + $0x50] sm:$0xff] %vm534, %v658
        %755 = vst.msk [vmem:[%s295 + $0x58] sm:$0xff] %vm534, %v661
        %756 = vst.msk [vmem:[%s295 + $0x60] sm:$0xff] %vm534, %v666
        %757 = vst.msk [vmem:[%s295 + $0x68] sm:$0xff] %vm534, %v669
        %758 = vst.msk [vmem:[%s295 + $0x70] sm:$0xff] %vm534, %v674
        %759 = vst.msk [vmem:[%s295 + $0x78] sm:$0xff] %vm534, %v677
        %760 = vst.msk [vmem:[%s295 + $0x80] sm:$0xff] %vm534, %v682
        %761 = vst.msk [vmem:[%s295 + $0x88] sm:$0xff] %vm534, %v685
        %762 = vst.msk [vmem:[%s295 + $0x90] sm:$0xff] %vm534, %v690
        %763 = vst.msk [vmem:[%s295 + $0x98] sm:$0xff] %vm534, %v693
        %764 = vst.msk [vmem:[%s295 + $0xa0] sm:$0xff] %vm534, %v698
        %765 = vst.msk [vmem:[%s295 + $0xa8] sm:$0xff] %vm534, %v701
        %766 = vst.msk [vmem:[%s295 + $0xb0] sm:$0xff] %vm534, %v706
        %767 = vst.msk [vmem:[%s295 + $0xb8] sm:$0xff] %vm534, %v709
        %768 = vst.msk [vmem:[%s295 + $0xc0] sm:$0xff] %vm534, %v714
        %769 = vst.msk [vmem:[%s295 + $0xc8] sm:$0xff] %vm534, %v717
        %770 = vst.msk [vmem:[%s295 + $0xd0] sm:$0xff] %vm534, %v722
        %771 = vst.msk [vmem:[%s295 + $0xd8] sm:$0xff] %vm534, %v725
        %772 = vst.msk [vmem:[%s295 + $0xe0] sm:$0xff] %vm534, %v730
        %773 = vst.msk [vmem:[%s295 + $0xe8] sm:$0xff] %vm534, %v733
        %774 = vst.msk [vmem:[%s295 + $0xf0] sm:$0xff] %vm534, %v738
        %775 = vst.msk [vmem:[%s295 + $0xf8] sm:$0xff] %vm534, %v741
        %s776 = sand.u32 %s182, 1
        %s777 = scalar_lea.sflag [#allocation3], %s776
        %s778 = sand.u32 %s182, 1
        %s779 = smul.addr %s778, 256
        %s780 = scalar_lea.vmem [#allocation2], %s779
        // Predicated region
        $region45: #{_lambda_.5} parent=43 // pred_check
          %p781 = pneg %p192
        $region46: #{_lambda_.5} parent=43 // pred_check_branch
          %783 = sbr.rel (%p781) target = $region48
        $region47: #{_lambda_.5} parent=43 // pred_region
          %s784 = smul.u32 32, %s25
          %s786 = ssub.s32 4096, 4096
          %787 = vsyncadd %s777, %s786
          %s788 = smul.addr %s24, 32
          %s789 = sadd.s32 %s784, %s788
          %s790 = smul.addr %s789, 128
          %s791 = scalar_lea.hbm %s6, %s790
          %s792 = sshll.u32 %s780, 4
          %s793 = int_to_ptr.vmem [resolvable:$true] %s792
          %798 = dma.vmem_to_hbm [thread:$0]  %s793, 4096, %s791, %s777, 128, 128, 8
        $region48: #{_lambda_.5} parent=43 // pred_fallthru
          _
      $region44: #{_lambda_.5} parent=5 // pred_fallthru
        _
      %p799 = scmp.le.s32.totalorder 2, %s15
      // Predicated region
      $region49: #{_lambda_.5} parent=5 // pred_check
        %p800 = pneg %p799
      $region50: #{_lambda_.5} parent=5 // pred_check_branch
        %802 = sbr.rel (%p800) target = $region52
      $region51: #{_lambda_.5} parent=5 // pred_region
        %s803 = ssub.s32 %s15, 2
        // Predicated region
        $region53: #{_lambda_.5} parent=51 // pred_check
          %p804 = pneg %p198
        $region54: #{_lambda_.5} parent=51 // pred_check_branch
          %806 = sbr.rel (%p804) target = $region56
        $region55: #{_lambda_.5} parent=51 // pred_region
          %s807 = sand.u32 %s183, 1
          %s808 = scalar_lea.sflag [#allocation3], %s807
          %s809 = sand.u32 %s183, 1
          %s810 = smul.addr %s809, 256
          %s811 = scalar_lea.vmem [#allocation2], %s810
          %812 = dma.done %s808, 4096
        $region56: #{_lambda_.5} parent=51 // pred_fallthru
          _
      $region52: #{_lambda_.5} parent=5 // pred_fallthru
        _
    $region6: #{_lambda_.5} parent=1 // loop_footer
      %s19 = sadd.s32 1, %s15
    $region7: #{_lambda_.5} parent=1 // loop_footer_branch
      %14 = sbr.rel target = $region3
    $region8: #{_lambda_.5} parent=1 // loop_exit
      _
    %813 = vsyncpa [#allocation3], 1
    %s814 = scalar_lea.sflag [#allocation3], 1
    %815 = vsyncpa %s814, 1

</llo_original>
